<compile_context>
chip_gen: v6e
topology: v6e:2x2x1
jax: 0.10.0
libtpu: 0.0.40
codegen_flags: <defaults>
</compile_context>

<pallas_src>
import functools
import math

import jax
import jax.numpy as jnp
from jax.experimental import pallas as pl
from jax.experimental.pallas import tpu as pltpu


def _sum_all(a):
    # Full reduction kept rank-2: lane reduce then sublane reduce -> (1, 1).
    return jnp.sum(jnp.sum(a, axis=1, keepdims=True), axis=0, keepdims=True)


def _up_double_conv_kernel(x_ref, w1_ref, b1_ref, w2_ref, b2_ref, mask_ref,
                           o_ref, h1_ref, *, cin, cout, size, eps):
    """One batch element: conv1 + ReLU -> conv2 -> LayerNorm (no affine) -> ReLU.

    x_ref    : (1, cin, ext)   zero-padded, flattened, halo-extended input
    w1_ref   : (9, cin, cin)   conv1 weights, tap-major  [dh*3+dw, out, in]
    b1_ref   : (cin, 1)
    w2_ref   : (9, cout, cin)  conv2 weights, tap-major
    b2_ref   : (cout, 1)
    mask_ref : (1, npix)       1.0 on interior pixels of the padded grid
    o_ref    : (1, cout, npix) output on the (padded, flattened) grid
    h1_ref   : (cin, ext)      VMEM scratch for the conv1 activation
    """
    wpad = size + 2              # padded row length
    npix = wpad * wpad           # flattened padded-grid pixels (lane dim)
    ext_off = wpad + 1           # flat zero halo on each side of the slab

    mask = mask_ref[...]         # (1, npix)

    # ---- conv1: Cin -> Cin, 3x3, padding=1, bias, ReLU --------------------
    acc1 = jnp.zeros((cin, npix), jnp.float32)
    for dh in range(3):
        for dw in range(3):
            k = dh * 3 + dw
            off = dh * wpad + dw
            for ci in range(cin):
                col = w1_ref[k, :, ci:ci + 1]                # (cin, 1)
                row = x_ref[0, ci:ci + 1, off:off + npix]    # (1, npix)
                acc1 = acc1 + col * row
    h1 = jnp.maximum(acc1 + b1_ref[...], 0.0) * mask         # zero the halo

    # Stage conv1 output in a zero-extended scratch so conv2's nine taps are
    # in-bounds static lane slices (exactly like the pre-extended input).
    h1_ref[...] = jnp.zeros_like(h1_ref)
    h1_ref[:, ext_off:ext_off + npix] = h1

    # ---- conv2: Cin -> Cout, 3x3, padding=1, bias --------------------------
    acc2 = jnp.zeros((cout, npix), jnp.float32)
    for dh in range(3):
        for dw in range(3):
            k = dh * 3 + dw
            off = dh * wpad + dw
            for ci in range(cin):
                col = w2_ref[k, :, ci:ci + 1]                # (cout, 1)
                row = h1_ref[ci:ci + 1, off:off + npix]      # (1, npix)
                acc2 = acc2 + col * row
    y = acc2 + b2_ref[...]                                   # (cout, npix)

    # ---- LayerNorm over (Cout, S, S) per sample (no affine), then ReLU -----
    nvalid = float(cout * size * size)
    mean = _sum_all(y * mask) / nvalid                       # (1, 1)
    diff = (y - mean) * mask
    var = _sum_all(diff * diff) / nvalid                     # (1, 1)
    inv = jax.lax.rsqrt(var + eps)
    # One lane-dense full-tile store; halo lanes are discarded by the wrapper.
    o_ref[0] = jnp.maximum((y - mean) * inv, 0.0)


def up_double_conv_ae_forward(x, w1, b1, w2, b2, *, eps=1e-5):
    """Forward of UpDoubleConvAE. x: (B, Cin, S, S) NCHW; returns (B, Cout, S, S)."""
    B, Cin, H, W = x.shape
    assert H == W, "LayerNorm([C, size, size]) assumes square spatial size"
    S = H
    Cout = w2.shape[0]
    assert w1.shape == (Cin, Cin, 3, 3)
    assert w2.shape == (Cout, Cin, 3, 3)
    assert b1.shape == (Cin,) and b2.shape == (Cout,)

    wpad = S + 2
    npix = wpad * wpad
    ext_off = wpad + 1
    ext = npix + 2 * ext_off

    f32 = jnp.float32
    # Zero-pad spatially, flatten to a lane-dense slab, add a flat zero halo so
    # every 3x3 tap in the kernel is an in-bounds static lane slice.
    x_pad = jnp.pad(x.astype(f32), ((0, 0), (0, 0), (1, 1), (1, 1)))
    x_ext = jnp.pad(x_pad.reshape(B, Cin, npix),
                    ((0, 0), (0, 0), (ext_off, ext_off)))

    # Hoist weight re-layout out of the kernel: (O, I, 3, 3) -> (9, O, I).
    w1k = jnp.transpose(w1.astype(f32), (2, 3, 0, 1)).reshape(9, Cin, Cin)
    w2k = jnp.transpose(w2.astype(f32), (2, 3, 0, 1)).reshape(9, Cout, Cin)
    b1c = b1.astype(f32).reshape(Cin, 1)
    b2c = b2.astype(f32).reshape(Cout, 1)

    # Interior mask on the flattened padded grid.
    mask = jnp.pad(jnp.ones((S, S), f32), ((1, 1), (1, 1))).reshape(1, npix)

    kernel = functools.partial(_up_double_conv_kernel,
                               cin=Cin, cout=Cout, size=S, eps=eps)

    out_flat = pl.pallas_call(
        kernel,
        out_shape=jax.ShapeDtypeStruct((B, Cout, npix), f32),
        grid=(B,),
        in_specs=[
            pl.BlockSpec((1, Cin, ext), lambda b: (b, 0, 0)),     # x_ext
            pl.BlockSpec((9, Cin, Cin), lambda b: (0, 0, 0)),     # w1
            pl.BlockSpec((Cin, 1), lambda b: (0, 0)),             # b1
            pl.BlockSpec((9, Cout, Cin), lambda b: (0, 0, 0)),    # w2
            pl.BlockSpec((Cout, 1), lambda b: (0, 0)),            # b2
            pl.BlockSpec((1, npix), lambda b: (0, 0)),            # mask
        ],
        out_specs=pl.BlockSpec((1, Cout, npix), lambda b: (b, 0, 0)),
        scratch_shapes=[pltpu.VMEM((Cin, ext), f32)],
        compiler_params=pltpu.CompilerParams(
            dimension_semantics=("parallel",)),
    )(x_ext, w1k, b1c, w2k, b2c, mask)

    # Drop the padded-grid halo and restore NCHW.
    out = out_flat.reshape(B, Cout, wpad, wpad)[:, :, 1:1 + S, 1:1 + S]
    return out


def _reference(x, w1, b1, w2, b2, eps=1e-5):
    dn = ("NCHW", "OIHW", "NCHW")
    h = jax.lax.conv_general_dilated(
        x, w1, window_strides=(1, 1), padding=((1, 1), (1, 1)),
        dimension_numbers=dn, precision=jax.lax.Precision.HIGHEST)
    h = jax.nn.relu(h + b1[None, :, None, None])
    y = jax.lax.conv_general_dilated(
        h, w2, window_strides=(1, 1), padding=((1, 1), (1, 1)),
        dimension_numbers=dn, precision=jax.lax.Precision.HIGHEST)
    y = y + b2[None, :, None, None]
    mean = jnp.mean(y, axis=(1, 2, 3), keepdims=True)
    var = jnp.mean(jnp.square(y - mean), axis=(1, 2, 3), keepdims=True)
    return jax.nn.relu((y - mean) / jnp.sqrt(var + eps))


if __name__ == "__main__":
    key = jax.random.PRNGKey(0)
    B, Cin, Cout, S = 2, 8, 4, 16
    kx, kw1, kb1, kw2, kb2 = jax.random.split(key, 5)

    x = jax.random.normal(kx, (B, Cin, S, S), dtype=jnp.float32)
    bound = 1.0 / math.sqrt(Cin * 9)
    w1 = jax.random.uniform(kw1, (Cin, Cin, 3, 3), jnp.float32, -bound, bound)
    b1 = jax.random.uniform(kb1, (Cin,), jnp.float32, -bound, bound)
    w2 = jax.random.uniform(kw2, (Cout, Cin, 3, 3), jnp.float32, -bound, bound)
    b2 = jax.random.uniform(kb2, (Cout,), jnp.float32, -bound, bound)

    out = up_double_conv_ae_forward(x, w1, b1, w2, b2)
    out = jax.block_until_ready(out)
    assert out.shape == (B, Cout, S, S)

    ref = _reference(x, w1, b1, w2, b2)
    max_err = float(jnp.max(jnp.abs(out - ref)))
    assert jnp.allclose(out, ref, atol=1e-4, rtol=1e-4), f"max abs err {max_err}"
    print("KERNEL_OK")
</pallas_src>

<mosaic_0001>
module attributes {stable_mosaic.version = 11 : i64} {
  func.func @_up_double_conv_kernel(%arg0: i32, %arg1: memref<1x8x362xf32, #tpu.memory_space<vmem>>, %arg2: memref<9x8x8xf32, #tpu.memory_space<vmem>>, %arg3: memref<8x1xf32, #tpu.memory_space<vmem>>, %arg4: memref<9x4x8xf32, #tpu.memory_space<vmem>>, %arg5: memref<4x1xf32, #tpu.memory_space<vmem>>, %arg6: memref<1x324xf32, #tpu.memory_space<vmem>>, %arg7: memref<1x4x324xf32, #tpu.memory_space<vmem>>, %arg8: memref<8x362xf32, #tpu.memory_space<vmem>>) attributes {dimension_semantics = [#tpu.dimension_semantics<parallel>], iteration_bounds = array<i64: 2>, scalar_prefetch = 0 : i64, scratch_operands = 1 : i64, tpu.core_type = #tpu.core_type<tc>, window_params = [{transform_indices = @transform_0, window_bounds = array<i64: 1, 8, 362>}, {pipeline_mode = #tpu.pipeline_mode<synchronous>, transform_indices = @transform_1, window_bounds = array<i64: 9, 8, 8>}, {pipeline_mode = #tpu.pipeline_mode<synchronous>, transform_indices = @transform_2, window_bounds = array<i64: 8, 1>}, {pipeline_mode = #tpu.pipeline_mode<synchronous>, transform_indices = @transform_3, window_bounds = array<i64: 9, 4, 8>}, {pipeline_mode = #tpu.pipeline_mode<synchronous>, transform_indices = @transform_4, window_bounds = array<i64: 4, 1>}, {pipeline_mode = #tpu.pipeline_mode<synchronous>, transform_indices = @transform_5, window_bounds = array<i64: 1, 324>}, {transform_indices = @transform_6, window_bounds = array<i64: 1, 4, 324>}]} {
    %c0 = arith.constant 0 : index
    %c0_0 = arith.constant 0 : index
    %0 = vector.load %arg6[%c0, %c0_0] : memref<1x324xf32, #tpu.memory_space<vmem>>, vector<1x324xf32>
    %cst = arith.constant 0.000000e+00 : f32
    %1 = vector.broadcast %cst : f32 to vector<8x324xf32>
    %c0_1 = arith.constant 0 : index
    %c0_2 = arith.constant 0 : index
    %c0_3 = arith.constant 0 : index
    %2 = vector.load %arg2[%c0_1, %c0_2, %c0_3] : memref<9x8x8xf32, #tpu.memory_space<vmem>>, vector<1x8x1xf32>
    %3 = vector.shape_cast %2 : vector<1x8x1xf32> to vector<8x1xf32>
    %c0_4 = arith.constant 0 : index
    %c0_5 = arith.constant 0 : index
    %c0_6 = arith.constant 0 : index
    %4 = vector.load %arg1[%c0_4, %c0_5, %c0_6] : memref<1x8x362xf32, #tpu.memory_space<vmem>>, vector<1x1x324xf32>
    %5 = vector.shape_cast %4 : vector<1x1x324xf32> to vector<1x324xf32>
    %6 = vector.broadcast %3 : vector<8x1xf32> to vector<8x324xf32>
    %7 = vector.broadcast %5 : vector<1x324xf32> to vector<8x324xf32>
    %8 = arith.mulf %6, %7 : vector<8x324xf32>
    %9 = arith.addf %1, %8 : vector<8x324xf32>
    %c0_7 = arith.constant 0 : index
    %c0_8 = arith.constant 0 : index
    %c1 = arith.constant 1 : index
    %10 = vector.load %arg2[%c0_7, %c0_8, %c1] : memref<9x8x8xf32, #tpu.memory_space<vmem>>, vector<1x8x1xf32>
    %11 = vector.shape_cast %10 : vector<1x8x1xf32> to vector<8x1xf32>
    %c0_9 = arith.constant 0 : index
    %c1_10 = arith.constant 1 : index
    %c0_11 = arith.constant 0 : index
    %12 = vector.load %arg1[%c0_9, %c1_10, %c0_11] : memref<1x8x362xf32, #tpu.memory_space<vmem>>, vector<1x1x324xf32>
    %13 = vector.shape_cast %12 : vector<1x1x324xf32> to vector<1x324xf32>
    %14 = vector.broadcast %11 : vector<8x1xf32> to vector<8x324xf32>
    %15 = vector.broadcast %13 : vector<1x324xf32> to vector<8x324xf32>
    %16 = arith.mulf %14, %15 : vector<8x324xf32>
    %17 = arith.addf %9, %16 : vector<8x324xf32>
    %c0_12 = arith.constant 0 : index
    %c0_13 = arith.constant 0 : index
    %c2 = arith.constant 2 : index
    %18 = vector.load %arg2[%c0_12, %c0_13, %c2] : memref<9x8x8xf32, #tpu.memory_space<vmem>>, vector<1x8x1xf32>
    %19 = vector.shape_cast %18 : vector<1x8x1xf32> to vector<8x1xf32>
    %c0_14 = arith.constant 0 : index
    %c2_15 = arith.constant 2 : index
    %c0_16 = arith.constant 0 : index
    %20 = vector.load %arg1[%c0_14, %c2_15, %c0_16] : memref<1x8x362xf32, #tpu.memory_space<vmem>>, vector<1x1x324xf32>
    %21 = vector.shape_cast %20 : vector<1x1x324xf32> to vector<1x324xf32>
    %22 = vector.broadcast %19 : vector<8x1xf32> to vector<8x324xf32>
    %23 = vector.broadcast %21 : vector<1x324xf32> to vector<8x324xf32>
    %24 = arith.mulf %22, %23 : vector<8x324xf32>
    %25 = arith.addf %17, %24 : vector<8x324xf32>
    %c0_17 = arith.constant 0 : index
    %c0_18 = arith.constant 0 : index
    %c3 = arith.constant 3 : index
    %26 = vector.load %arg2[%c0_17, %c0_18, %c3] : memref<9x8x8xf32, #tpu.memory_space<vmem>>, vector<1x8x1xf32>
    %27 = vector.shape_cast %26 : vector<1x8x1xf32> to vector<8x1xf32>
    %c0_19 = arith.constant 0 : index
    %c3_20 = arith.constant 3 : index
    %c0_21 = arith.constant 0 : index
    %28 = vector.load %arg1[%c0_19, %c3_20, %c0_21] : memref<1x8x362xf32, #tpu.memory_space<vmem>>, vector<1x1x324xf32>
    %29 = vector.shape_cast %28 : vector<1x1x324xf32> to vector<1x324xf32>
    %30 = vector.broadcast %27 : vector<8x1xf32> to vector<8x324xf32>
    %31 = vector.broadcast %29 : vector<1x324xf32> to vector<8x324xf32>
    %32 = arith.mulf %30, %31 : vector<8x324xf32>
    %33 = arith.addf %25, %32 : vector<8x324xf32>
    %c0_22 = arith.constant 0 : index
    %c0_23 = arith.constant 0 : index
    %c4 = arith.constant 4 : index
    %34 = vector.load %arg2[%c0_22, %c0_23, %c4] : memref<9x8x8xf32, #tpu.memory_space<vmem>>, vector<1x8x1xf32>
    %35 = vector.shape_cast %34 : vector<1x8x1xf32> to vector<8x1xf32>
    %c0_24 = arith.constant 0 : index
    %c4_25 = arith.constant 4 : index
    %c0_26 = arith.constant 0 : index
    %36 = vector.load %arg1[%c0_24, %c4_25, %c0_26] : memref<1x8x362xf32, #tpu.memory_space<vmem>>, vector<1x1x324xf32>
    %37 = vector.shape_cast %36 : vector<1x1x324xf32> to vector<1x324xf32>
    %38 = vector.broadcast %35 : vector<8x1xf32> to vector<8x324xf32>
    %39 = vector.broadcast %37 : vector<1x324xf32> to vector<8x324xf32>
    %40 = arith.mulf %38, %39 : vector<8x324xf32>
    %41 = arith.addf %33, %40 : vector<8x324xf32>
    %c0_27 = arith.constant 0 : index
    %c0_28 = arith.constant 0 : index
    %c5 = arith.constant 5 : index
    %42 = vector.load %arg2[%c0_27, %c0_28, %c5] : memref<9x8x8xf32, #tpu.memory_space<vmem>>, vector<1x8x1xf32>
    %43 = vector.shape_cast %42 : vector<1x8x1xf32> to vector<8x1xf32>
    %c0_29 = arith.constant 0 : index
    %c5_30 = arith.constant 5 : index
    %c0_31 = arith.constant 0 : index
    %44 = vector.load %arg1[%c0_29, %c5_30, %c0_31] : memref<1x8x362xf32, #tpu.memory_space<vmem>>, vector<1x1x324xf32>
    %45 = vector.shape_cast %44 : vector<1x1x324xf32> to vector<1x324xf32>
    %46 = vector.broadcast %43 : vector<8x1xf32> to vector<8x324xf32>
    %47 = vector.broadcast %45 : vector<1x324xf32> to vector<8x324xf32>
    %48 = arith.mulf %46, %47 : vector<8x324xf32>
    %49 = arith.addf %41, %48 : vector<8x324xf32>
    %c0_32 = arith.constant 0 : index
    %c0_33 = arith.constant 0 : index
    %c6 = arith.constant 6 : index
    %50 = vector.load %arg2[%c0_32, %c0_33, %c6] : memref<9x8x8xf32, #tpu.memory_space<vmem>>, vector<1x8x1xf32>
    %51 = vector.shape_cast %50 : vector<1x8x1xf32> to vector<8x1xf32>
    %c0_34 = arith.constant 0 : index
    %c6_35 = arith.constant 6 : index
    %c0_36 = arith.constant 0 : index
    %52 = vector.load %arg1[%c0_34, %c6_35, %c0_36] : memref<1x8x362xf32, #tpu.memory_space<vmem>>, vector<1x1x324xf32>
    %53 = vector.shape_cast %52 : vector<1x1x324xf32> to vector<1x324xf32>
    %54 = vector.broadcast %51 : vector<8x1xf32> to vector<8x324xf32>
    %55 = vector.broadcast %53 : vector<1x324xf32> to vector<8x324xf32>
    %56 = arith.mulf %54, %55 : vector<8x324xf32>
    %57 = arith.addf %49, %56 : vector<8x324xf32>
    %c0_37 = arith.constant 0 : index
    %c0_38 = arith.constant 0 : index
    %c7 = arith.constant 7 : index
    %58 = vector.load %arg2[%c0_37, %c0_38, %c7] : memref<9x8x8xf32, #tpu.memory_space<vmem>>, vector<1x8x1xf32>
    %59 = vector.shape_cast %58 : vector<1x8x1xf32> to vector<8x1xf32>
    %c0_39 = arith.constant 0 : index
    %c7_40 = arith.constant 7 : index
    %c0_41 = arith.constant 0 : index
    %60 = vector.load %arg1[%c0_39, %c7_40, %c0_41] : memref<1x8x362xf32, #tpu.memory_space<vmem>>, vector<1x1x324xf32>
    %61 = vector.shape_cast %60 : vector<1x1x324xf32> to vector<1x324xf32>
    %62 = vector.broadcast %59 : vector<8x1xf32> to vector<8x324xf32>
    %63 = vector.broadcast %61 : vector<1x324xf32> to vector<8x324xf32>
    %64 = arith.mulf %62, %63 : vector<8x324xf32>
    %65 = arith.addf %57, %64 : vector<8x324xf32>
    %c1_42 = arith.constant 1 : index
    %c0_43 = arith.constant 0 : index
    %c0_44 = arith.constant 0 : index
    %66 = vector.load %arg2[%c1_42, %c0_43, %c0_44] : memref<9x8x8xf32, #tpu.memory_space<vmem>>, vector<1x8x1xf32>
    %67 = vector.shape_cast %66 : vector<1x8x1xf32> to vector<8x1xf32>
    %c0_45 = arith.constant 0 : index
    %c0_46 = arith.constant 0 : index
    %c1_47 = arith.constant 1 : index
    %68 = vector.load %arg1[%c0_45, %c0_46, %c1_47] : memref<1x8x362xf32, #tpu.memory_space<vmem>>, vector<1x1x324xf32>
    %69 = vector.shape_cast %68 : vector<1x1x324xf32> to vector<1x324xf32>
    %70 = vector.broadcast %67 : vector<8x1xf32> to vector<8x324xf32>
    %71 = vector.broadcast %69 : vector<1x324xf32> to vector<8x324xf32>
    %72 = arith.mulf %70, %71 : vector<8x324xf32>
    %73 = arith.addf %65, %72 : vector<8x324xf32>
    %c1_48 = arith.constant 1 : index
    %c0_49 = arith.constant 0 : index
    %c1_50 = arith.constant 1 : index
    %74 = vector.load %arg2[%c1_48, %c0_49, %c1_50] : memref<9x8x8xf32, #tpu.memory_space<vmem>>, vector<1x8x1xf32>
    %75 = vector.shape_cast %74 : vector<1x8x1xf32> to vector<8x1xf32>
    %c0_51 = arith.constant 0 : index
    %c1_52 = arith.constant 1 : index
    %c1_53 = arith.constant 1 : index
    %76 = vector.load %arg1[%c0_51, %c1_52, %c1_53] : memref<1x8x362xf32, #tpu.memory_space<vmem>>, vector<1x1x324xf32>
    %77 = vector.shape_cast %76 : vector<1x1x324xf32> to vector<1x324xf32>
    %78 = vector.broadcast %75 : vector<8x1xf32> to vector<8x324xf32>
    %79 = vector.broadcast %77 : vector<1x324xf32> to vector<8x324xf32>
    %80 = arith.mulf %78, %79 : vector<8x324xf32>
    %81 = arith.addf %73, %80 : vector<8x324xf32>
    %c1_54 = arith.constant 1 : index
    %c0_55 = arith.constant 0 : index
    %c2_56 = arith.constant 2 : index
    %82 = vector.load %arg2[%c1_54, %c0_55, %c2_56] : memref<9x8x8xf32, #tpu.memory_space<vmem>>, vector<1x8x1xf32>
    %83 = vector.shape_cast %82 : vector<1x8x1xf32> to vector<8x1xf32>
    %c0_57 = arith.constant 0 : index
    %c2_58 = arith.constant 2 : index
    %c1_59 = arith.constant 1 : index
    %84 = vector.load %arg1[%c0_57, %c2_58, %c1_59] : memref<1x8x362xf32, #tpu.memory_space<vmem>>, vector<1x1x324xf32>
    %85 = vector.shape_cast %84 : vector<1x1x324xf32> to vector<1x324xf32>
    %86 = vector.broadcast %83 : vector<8x1xf32> to vector<8x324xf32>
    %87 = vector.broadcast %85 : vector<1x324xf32> to vector<8x324xf32>
    %88 = arith.mulf %86, %87 : vector<8x324xf32>
    %89 = arith.addf %81, %88 : vector<8x324xf32>
    %c1_60 = arith.constant 1 : index
    %c0_61 = arith.constant 0 : index
    %c3_62 = arith.constant 3 : index
    %90 = vector.load %arg2[%c1_60, %c0_61, %c3_62] : memref<9x8x8xf32, #tpu.memory_space<vmem>>, vector<1x8x1xf32>
    %91 = vector.shape_cast %90 : vector<1x8x1xf32> to vector<8x1xf32>
    %c0_63 = arith.constant 0 : index
    %c3_64 = arith.constant 3 : index
    %c1_65 = arith.constant 1 : index
    %92 = vector.load %arg1[%c0_63, %c3_64, %c1_65] : memref<1x8x362xf32, #tpu.memory_space<vmem>>, vector<1x1x324xf32>
    %93 = vector.shape_cast %92 : vector<1x1x324xf32> to vector<1x324xf32>
    %94 = vector.broadcast %91 : vector<8x1xf32> to vector<8x324xf32>
    %95 = vector.broadcast %93 : vector<1x324xf32> to vector<8x324xf32>
    %96 = arith.mulf %94, %95 : vector<8x324xf32>
    %97 = arith.addf %89, %96 : vector<8x324xf32>
    %c1_66 = arith.constant 1 : index
    %c0_67 = arith.constant 0 : index
    %c4_68 = arith.constant 4 : index
    %98 = vector.load %arg2[%c1_66, %c0_67, %c4_68] : memref<9x8x8xf32, #tpu.memory_space<vmem>>, vector<1x8x1xf32>
    %99 = vector.shape_cast %98 : vector<1x8x1xf32> to vector<8x1xf32>
    %c0_69 = arith.constant 0 : index
    %c4_70 = arith.constant 4 : index
    %c1_71 = arith.constant 1 : index
    %100 = vector.load %arg1[%c0_69, %c4_70, %c1_71] : memref<1x8x362xf32, #tpu.memory_space<vmem>>, vector<1x1x324xf32>
    %101 = vector.shape_cast %100 : vector<1x1x324xf32> to vector<1x324xf32>
    %102 = vector.broadcast %99 : vector<8x1xf32> to vector<8x324xf32>
    %103 = vector.broadcast %101 : vector<1x324xf32> to vector<8x324xf32>
    %104 = arith.mulf %102, %103 : vector<8x324xf32>
    %105 = arith.addf %97, %104 : vector<8x324xf32>
    %c1_72 = arith.constant 1 : index
    %c0_73 = arith.constant 0 : index
    %c5_74 = arith.constant 5 : index
    %106 = vector.load %arg2[%c1_72, %c0_73, %c5_74] : memref<9x8x8xf32, #tpu.memory_space<vmem>>, vector<1x8x1xf32>
    %107 = vector.shape_cast %106 : vector<1x8x1xf32> to vector<8x1xf32>
    %c0_75 = arith.constant 0 : index
    %c5_76 = arith.constant 5 : index
    %c1_77 = arith.constant 1 : index
    %108 = vector.load %arg1[%c0_75, %c5_76, %c1_77] : memref<1x8x362xf32, #tpu.memory_space<vmem>>, vector<1x1x324xf32>
    %109 = vector.shape_cast %108 : vector<1x1x324xf32> to vector<1x324xf32>
    %110 = vector.broadcast %107 : vector<8x1xf32> to vector<8x324xf32>
    %111 = vector.broadcast %109 : vector<1x324xf32> to vector<8x324xf32>
    %112 = arith.mulf %110, %111 : vector<8x324xf32>
    %113 = arith.addf %105, %112 : vector<8x324xf32>
    %c1_78 = arith.constant 1 : index
    %c0_79 = arith.constant 0 : index
    %c6_80 = arith.constant 6 : index
    %114 = vector.load %arg2[%c1_78, %c0_79, %c6_80] : memref<9x8x8xf32, #tpu.memory_space<vmem>>, vector<1x8x1xf32>
    %115 = vector.shape_cast %114 : vector<1x8x1xf32> to vector<8x1xf32>
    %c0_81 = arith.constant 0 : index
    %c6_82 = arith.constant 6 : index
    %c1_83 = arith.constant 1 : index
    %116 = vector.load %arg1[%c0_81, %c6_82, %c1_83] : memref<1x8x362xf32, #tpu.memory_space<vmem>>, vector<1x1x324xf32>
    %117 = vector.shape_cast %116 : vector<1x1x324xf32> to vector<1x324xf32>
    %118 = vector.broadcast %115 : vector<8x1xf32> to vector<8x324xf32>
    %119 = vector.broadcast %117 : vector<1x324xf32> to vector<8x324xf32>
    %120 = arith.mulf %118, %119 : vector<8x324xf32>
    %121 = arith.addf %113, %120 : vector<8x324xf32>
    %c1_84 = arith.constant 1 : index
    %c0_85 = arith.constant 0 : index
    %c7_86 = arith.constant 7 : index
    %122 = vector.load %arg2[%c1_84, %c0_85, %c7_86] : memref<9x8x8xf32, #tpu.memory_space<vmem>>, vector<1x8x1xf32>
    %123 = vector.shape_cast %122 : vector<1x8x1xf32> to vector<8x1xf32>
    %c0_87 = arith.constant 0 : index
    %c7_88 = arith.constant 7 : index
    %c1_89 = arith.constant 1 : index
    %124 = vector.load %arg1[%c0_87, %c7_88, %c1_89] : memref<1x8x362xf32, #tpu.memory_space<vmem>>, vector<1x1x324xf32>
    %125 = vector.shape_cast %124 : vector<1x1x324xf32> to vector<1x324xf32>
    %126 = vector.broadcast %123 : vector<8x1xf32> to vector<8x324xf32>
    %127 = vector.broadcast %125 : vector<1x324xf32> to vector<8x324xf32>
    %128 = arith.mulf %126, %127 : vector<8x324xf32>
    %129 = arith.addf %121, %128 : vector<8x324xf32>
    %c2_90 = arith.constant 2 : index
    %c0_91 = arith.constant 0 : index
    %c0_92 = arith.constant 0 : index
    %130 = vector.load %arg2[%c2_90, %c0_91, %c0_92] : memref<9x8x8xf32, #tpu.memory_space<vmem>>, vector<1x8x1xf32>
    %131 = vector.shape_cast %130 : vector<1x8x1xf32> to vector<8x1xf32>
    %c0_93 = arith.constant 0 : index
    %c0_94 = arith.constant 0 : index
    %c2_95 = arith.constant 2 : index
    %132 = vector.load %arg1[%c0_93, %c0_94, %c2_95] : memref<1x8x362xf32, #tpu.memory_space<vmem>>, vector<1x1x324xf32>
    %133 = vector.shape_cast %132 : vector<1x1x324xf32> to vector<1x324xf32>
    %134 = vector.broadcast %131 : vector<8x1xf32> to vector<8x324xf32>
    %135 = vector.broadcast %133 : vector<1x324xf32> to vector<8x324xf32>
    %136 = arith.mulf %134, %135 : vector<8x324xf32>
    %137 = arith.addf %129, %136 : vector<8x324xf32>
    %c2_96 = arith.constant 2 : index
    %c0_97 = arith.constant 0 : index
    %c1_98 = arith.constant 1 : index
    %138 = vector.load %arg2[%c2_96, %c0_97, %c1_98] : memref<9x8x8xf32, #tpu.memory_space<vmem>>, vector<1x8x1xf32>
    %139 = vector.shape_cast %138 : vector<1x8x1xf32> to vector<8x1xf32>
    %c0_99 = arith.constant 0 : index
    %c1_100 = arith.constant 1 : index
    %c2_101 = arith.constant 2 : index
    %140 = vector.load %arg1[%c0_99, %c1_100, %c2_101] : memref<1x8x362xf32, #tpu.memory_space<vmem>>, vector<1x1x324xf32>
    %141 = vector.shape_cast %140 : vector<1x1x324xf32> to vector<1x324xf32>
    %142 = vector.broadcast %139 : vector<8x1xf32> to vector<8x324xf32>
    %143 = vector.broadcast %141 : vector<1x324xf32> to vector<8x324xf32>
    %144 = arith.mulf %142, %143 : vector<8x324xf32>
    %145 = arith.addf %137, %144 : vector<8x324xf32>
    %c2_102 = arith.constant 2 : index
    %c0_103 = arith.constant 0 : index
    %c2_104 = arith.constant 2 : index
    %146 = vector.load %arg2[%c2_102, %c0_103, %c2_104] : memref<9x8x8xf32, #tpu.memory_space<vmem>>, vector<1x8x1xf32>
    %147 = vector.shape_cast %146 : vector<1x8x1xf32> to vector<8x1xf32>
    %c0_105 = arith.constant 0 : index
    %c2_106 = arith.constant 2 : index
    %c2_107 = arith.constant 2 : index
    %148 = vector.load %arg1[%c0_105, %c2_106, %c2_107] : memref<1x8x362xf32, #tpu.memory_space<vmem>>, vector<1x1x324xf32>
    %149 = vector.shape_cast %148 : vector<1x1x324xf32> to vector<1x324xf32>
    %150 = vector.broadcast %147 : vector<8x1xf32> to vector<8x324xf32>
    %151 = vector.broadcast %149 : vector<1x324xf32> to vector<8x324xf32>
    %152 = arith.mulf %150, %151 : vector<8x324xf32>
    %153 = arith.addf %145, %152 : vector<8x324xf32>
    %c2_108 = arith.constant 2 : index
    %c0_109 = arith.constant 0 : index
    %c3_110 = arith.constant 3 : index
    %154 = vector.load %arg2[%c2_108, %c0_109, %c3_110] : memref<9x8x8xf32, #tpu.memory_space<vmem>>, vector<1x8x1xf32>
    %155 = vector.shape_cast %154 : vector<1x8x1xf32> to vector<8x1xf32>
    %c0_111 = arith.constant 0 : index
    %c3_112 = arith.constant 3 : index
    %c2_113 = arith.constant 2 : index
    %156 = vector.load %arg1[%c0_111, %c3_112, %c2_113] : memref<1x8x362xf32, #tpu.memory_space<vmem>>, vector<1x1x324xf32>
    %157 = vector.shape_cast %156 : vector<1x1x324xf32> to vector<1x324xf32>
    %158 = vector.broadcast %155 : vector<8x1xf32> to vector<8x324xf32>
    %159 = vector.broadcast %157 : vector<1x324xf32> to vector<8x324xf32>
    %160 = arith.mulf %158, %159 : vector<8x324xf32>
    %161 = arith.addf %153, %160 : vector<8x324xf32>
    %c2_114 = arith.constant 2 : index
    %c0_115 = arith.constant 0 : index
    %c4_116 = arith.constant 4 : index
    %162 = vector.load %arg2[%c2_114, %c0_115, %c4_116] : memref<9x8x8xf32, #tpu.memory_space<vmem>>, vector<1x8x1xf32>
    %163 = vector.shape_cast %162 : vector<1x8x1xf32> to vector<8x1xf32>
    %c0_117 = arith.constant 0 : index
    %c4_118 = arith.constant 4 : index
    %c2_119 = arith.constant 2 : index
    %164 = vector.load %arg1[%c0_117, %c4_118, %c2_119] : memref<1x8x362xf32, #tpu.memory_space<vmem>>, vector<1x1x324xf32>
    %165 = vector.shape_cast %164 : vector<1x1x324xf32> to vector<1x324xf32>
    %166 = vector.broadcast %163 : vector<8x1xf32> to vector<8x324xf32>
    %167 = vector.broadcast %165 : vector<1x324xf32> to vector<8x324xf32>
    %168 = arith.mulf %166, %167 : vector<8x324xf32>
    %169 = arith.addf %161, %168 : vector<8x324xf32>
    %c2_120 = arith.constant 2 : index
    %c0_121 = arith.constant 0 : index
    %c5_122 = arith.constant 5 : index
    %170 = vector.load %arg2[%c2_120, %c0_121, %c5_122] : memref<9x8x8xf32, #tpu.memory_space<vmem>>, vector<1x8x1xf32>
    %171 = vector.shape_cast %170 : vector<1x8x1xf32> to vector<8x1xf32>
    %c0_123 = arith.constant 0 : index
    %c5_124 = arith.constant 5 : index
    %c2_125 = arith.constant 2 : index
    %172 = vector.load %arg1[%c0_123, %c5_124, %c2_125] : memref<1x8x362xf32, #tpu.memory_space<vmem>>, vector<1x1x324xf32>
    %173 = vector.shape_cast %172 : vector<1x1x324xf32> to vector<1x324xf32>
    %174 = vector.broadcast %171 : vector<8x1xf32> to vector<8x324xf32>
    %175 = vector.broadcast %173 : vector<1x324xf32> to vector<8x324xf32>
    %176 = arith.mulf %174, %175 : vector<8x324xf32>
    %177 = arith.addf %169, %176 : vector<8x324xf32>
    %c2_126 = arith.constant 2 : index
    %c0_127 = arith.constant 0 : index
    %c6_128 = arith.constant 6 : index
    %178 = vector.load %arg2[%c2_126, %c0_127, %c6_128] : memref<9x8x8xf32, #tpu.memory_space<vmem>>, vector<1x8x1xf32>
    %179 = vector.shape_cast %178 : vector<1x8x1xf32> to vector<8x1xf32>
    %c0_129 = arith.constant 0 : index
    %c6_130 = arith.constant 6 : index
    %c2_131 = arith.constant 2 : index
    %180 = vector.load %arg1[%c0_129, %c6_130, %c2_131] : memref<1x8x362xf32, #tpu.memory_space<vmem>>, vector<1x1x324xf32>
    %181 = vector.shape_cast %180 : vector<1x1x324xf32> to vector<1x324xf32>
    %182 = vector.broadcast %179 : vector<8x1xf32> to vector<8x324xf32>
    %183 = vector.broadcast %181 : vector<1x324xf32> to vector<8x324xf32>
    %184 = arith.mulf %182, %183 : vector<8x324xf32>
    %185 = arith.addf %177, %184 : vector<8x324xf32>
    %c2_132 = arith.constant 2 : index
    %c0_133 = arith.constant 0 : index
    %c7_134 = arith.constant 7 : index
    %186 = vector.load %arg2[%c2_132, %c0_133, %c7_134] : memref<9x8x8xf32, #tpu.memory_space<vmem>>, vector<1x8x1xf32>
    %187 = vector.shape_cast %186 : vector<1x8x1xf32> to vector<8x1xf32>
    %c0_135 = arith.constant 0 : index
    %c7_136 = arith.constant 7 : index
    %c2_137 = arith.constant 2 : index
    %188 = vector.load %arg1[%c0_135, %c7_136, %c2_137] : memref<1x8x362xf32, #tpu.memory_space<vmem>>, vector<1x1x324xf32>
    %189 = vector.shape_cast %188 : vector<1x1x324xf32> to vector<1x324xf32>
    %190 = vector.broadcast %187 : vector<8x1xf32> to vector<8x324xf32>
    %191 = vector.broadcast %189 : vector<1x324xf32> to vector<8x324xf32>
    %192 = arith.mulf %190, %191 : vector<8x324xf32>
    %193 = arith.addf %185, %192 : vector<8x324xf32>
    %c3_138 = arith.constant 3 : index
    %c0_139 = arith.constant 0 : index
    %c0_140 = arith.constant 0 : index
    %194 = vector.load %arg2[%c3_138, %c0_139, %c0_140] : memref<9x8x8xf32, #tpu.memory_space<vmem>>, vector<1x8x1xf32>
    %195 = vector.shape_cast %194 : vector<1x8x1xf32> to vector<8x1xf32>
    %c0_141 = arith.constant 0 : index
    %c0_142 = arith.constant 0 : index
    %c18 = arith.constant 18 : index
    %196 = vector.load %arg1[%c0_141, %c0_142, %c18] : memref<1x8x362xf32, #tpu.memory_space<vmem>>, vector<1x1x324xf32>
    %197 = vector.shape_cast %196 : vector<1x1x324xf32> to vector<1x324xf32>
    %198 = vector.broadcast %195 : vector<8x1xf32> to vector<8x324xf32>
    %199 = vector.broadcast %197 : vector<1x324xf32> to vector<8x324xf32>
    %200 = arith.mulf %198, %199 : vector<8x324xf32>
    %201 = arith.addf %193, %200 : vector<8x324xf32>
    %c3_143 = arith.constant 3 : index
    %c0_144 = arith.constant 0 : index
    %c1_145 = arith.constant 1 : index
    %202 = vector.load %arg2[%c3_143, %c0_144, %c1_145] : memref<9x8x8xf32, #tpu.memory_space<vmem>>, vector<1x8x1xf32>
    %203 = vector.shape_cast %202 : vector<1x8x1xf32> to vector<8x1xf32>
    %c0_146 = arith.constant 0 : index
    %c1_147 = arith.constant 1 : index
    %c18_148 = arith.constant 18 : index
    %204 = vector.load %arg1[%c0_146, %c1_147, %c18_148] : memref<1x8x362xf32, #tpu.memory_space<vmem>>, vector<1x1x324xf32>
    %205 = vector.shape_cast %204 : vector<1x1x324xf32> to vector<1x324xf32>
    %206 = vector.broadcast %203 : vector<8x1xf32> to vector<8x324xf32>
    %207 = vector.broadcast %205 : vector<1x324xf32> to vector<8x324xf32>
    %208 = arith.mulf %206, %207 : vector<8x324xf32>
    %209 = arith.addf %201, %208 : vector<8x324xf32>
    %c3_149 = arith.constant 3 : index
    %c0_150 = arith.constant 0 : index
    %c2_151 = arith.constant 2 : index
    %210 = vector.load %arg2[%c3_149, %c0_150, %c2_151] : memref<9x8x8xf32, #tpu.memory_space<vmem>>, vector<1x8x1xf32>
    %211 = vector.shape_cast %210 : vector<1x8x1xf32> to vector<8x1xf32>
    %c0_152 = arith.constant 0 : index
    %c2_153 = arith.constant 2 : index
    %c18_154 = arith.constant 18 : index
    %212 = vector.load %arg1[%c0_152, %c2_153, %c18_154] : memref<1x8x362xf32, #tpu.memory_space<vmem>>, vector<1x1x324xf32>
    %213 = vector.shape_cast %212 : vector<1x1x324xf32> to vector<1x324xf32>
    %214 = vector.broadcast %211 : vector<8x1xf32> to vector<8x324xf32>
    %215 = vector.broadcast %213 : vector<1x324xf32> to vector<8x324xf32>
    %216 = arith.mulf %214, %215 : vector<8x324xf32>
    %217 = arith.addf %209, %216 : vector<8x324xf32>
    %c3_155 = arith.constant 3 : index
    %c0_156 = arith.constant 0 : index
    %c3_157 = arith.constant 3 : index
    %218 = vector.load %arg2[%c3_155, %c0_156, %c3_157] : memref<9x8x8xf32, #tpu.memory_space<vmem>>, vector<1x8x1xf32>
    %219 = vector.shape_cast %218 : vector<1x8x1xf32> to vector<8x1xf32>
    %c0_158 = arith.constant 0 : index
    %c3_159 = arith.constant 3 : index
    %c18_160 = arith.constant 18 : index
    %220 = vector.load %arg1[%c0_158, %c3_159, %c18_160] : memref<1x8x362xf32, #tpu.memory_space<vmem>>, vector<1x1x324xf32>
    %221 = vector.shape_cast %220 : vector<1x1x324xf32> to vector<1x324xf32>
    %222 = vector.broadcast %219 : vector<8x1xf32> to vector<8x324xf32>
    %223 = vector.broadcast %221 : vector<1x324xf32> to vector<8x324xf32>
    %224 = arith.mulf %222, %223 : vector<8x324xf32>
    %225 = arith.addf %217, %224 : vector<8x324xf32>
    %c3_161 = arith.constant 3 : index
    %c0_162 = arith.constant 0 : index
    %c4_163 = arith.constant 4 : index
    %226 = vector.load %arg2[%c3_161, %c0_162, %c4_163] : memref<9x8x8xf32, #tpu.memory_space<vmem>>, vector<1x8x1xf32>
    %227 = vector.shape_cast %226 : vector<1x8x1xf32> to vector<8x1xf32>
    %c0_164 = arith.constant 0 : index
    %c4_165 = arith.constant 4 : index
    %c18_166 = arith.constant 18 : index
    %228 = vector.load %arg1[%c0_164, %c4_165, %c18_166] : memref<1x8x362xf32, #tpu.memory_space<vmem>>, vector<1x1x324xf32>
    %229 = vector.shape_cast %228 : vector<1x1x324xf32> to vector<1x324xf32>
    %230 = vector.broadcast %227 : vector<8x1xf32> to vector<8x324xf32>
    %231 = vector.broadcast %229 : vector<1x324xf32> to vector<8x324xf32>
    %232 = arith.mulf %230, %231 : vector<8x324xf32>
    %233 = arith.addf %225, %232 : vector<8x324xf32>
    %c3_167 = arith.constant 3 : index
    %c0_168 = arith.constant 0 : index
    %c5_169 = arith.constant 5 : index
    %234 = vector.load %arg2[%c3_167, %c0_168, %c5_169] : memref<9x8x8xf32, #tpu.memory_space<vmem>>, vector<1x8x1xf32>
    %235 = vector.shape_cast %234 : vector<1x8x1xf32> to vector<8x1xf32>
    %c0_170 = arith.constant 0 : index
    %c5_171 = arith.constant 5 : index
    %c18_172 = arith.constant 18 : index
    %236 = vector.load %arg1[%c0_170, %c5_171, %c18_172] : memref<1x8x362xf32, #tpu.memory_space<vmem>>, vector<1x1x324xf32>
    %237 = vector.shape_cast %236 : vector<1x1x324xf32> to vector<1x324xf32>
    %238 = vector.broadcast %235 : vector<8x1xf32> to vector<8x324xf32>
    %239 = vector.broadcast %237 : vector<1x324xf32> to vector<8x324xf32>
    %240 = arith.mulf %238, %239 : vector<8x324xf32>
    %241 = arith.addf %233, %240 : vector<8x324xf32>
    %c3_173 = arith.constant 3 : index
    %c0_174 = arith.constant 0 : index
    %c6_175 = arith.constant 6 : index
    %242 = vector.load %arg2[%c3_173, %c0_174, %c6_175] : memref<9x8x8xf32, #tpu.memory_space<vmem>>, vector<1x8x1xf32>
    %243 = vector.shape_cast %242 : vector<1x8x1xf32> to vector<8x1xf32>
    %c0_176 = arith.constant 0 : index
    %c6_177 = arith.constant 6 : index
    %c18_178 = arith.constant 18 : index
    %244 = vector.load %arg1[%c0_176, %c6_177, %c18_178] : memref<1x8x362xf32, #tpu.memory_space<vmem>>, vector<1x1x324xf32>
    %245 = vector.shape_cast %244 : vector<1x1x324xf32> to vector<1x324xf32>
    %246 = vector.broadcast %243 : vector<8x1xf32> to vector<8x324xf32>
    %247 = vector.broadcast %245 : vector<1x324xf32> to vector<8x324xf32>
    %248 = arith.mulf %246, %247 : vector<8x324xf32>
    %249 = arith.addf %241, %248 : vector<8x324xf32>
    %c3_179 = arith.constant 3 : index
    %c0_180 = arith.constant 0 : index
    %c7_181 = arith.constant 7 : index
    %250 = vector.load %arg2[%c3_179, %c0_180, %c7_181] : memref<9x8x8xf32, #tpu.memory_space<vmem>>, vector<1x8x1xf32>
    %251 = vector.shape_cast %250 : vector<1x8x1xf32> to vector<8x1xf32>
    %c0_182 = arith.constant 0 : index
    %c7_183 = arith.constant 7 : index
    %c18_184 = arith.constant 18 : index
    %252 = vector.load %arg1[%c0_182, %c7_183, %c18_184] : memref<1x8x362xf32, #tpu.memory_space<vmem>>, vector<1x1x324xf32>
    %253 = vector.shape_cast %252 : vector<1x1x324xf32> to vector<1x324xf32>
    %254 = vector.broadcast %251 : vector<8x1xf32> to vector<8x324xf32>
    %255 = vector.broadcast %253 : vector<1x324xf32> to vector<8x324xf32>
    %256 = arith.mulf %254, %255 : vector<8x324xf32>
    %257 = arith.addf %249, %256 : vector<8x324xf32>
    %c4_185 = arith.constant 4 : index
    %c0_186 = arith.constant 0 : index
    %c0_187 = arith.constant 0 : index
    %258 = vector.load %arg2[%c4_185, %c0_186, %c0_187] : memref<9x8x8xf32, #tpu.memory_space<vmem>>, vector<1x8x1xf32>
    %259 = vector.shape_cast %258 : vector<1x8x1xf32> to vector<8x1xf32>
    %c0_188 = arith.constant 0 : index
    %c0_189 = arith.constant 0 : index
    %c19 = arith.constant 19 : index
    %260 = vector.load %arg1[%c0_188, %c0_189, %c19] : memref<1x8x362xf32, #tpu.memory_space<vmem>>, vector<1x1x324xf32>
    %261 = vector.shape_cast %260 : vector<1x1x324xf32> to vector<1x324xf32>
    %262 = vector.broadcast %259 : vector<8x1xf32> to vector<8x324xf32>
    %263 = vector.broadcast %261 : vector<1x324xf32> to vector<8x324xf32>
    %264 = arith.mulf %262, %263 : vector<8x324xf32>
    %265 = arith.addf %257, %264 : vector<8x324xf32>
    %c4_190 = arith.constant 4 : index
    %c0_191 = arith.constant 0 : index
    %c1_192 = arith.constant 1 : index
    %266 = vector.load %arg2[%c4_190, %c0_191, %c1_192] : memref<9x8x8xf32, #tpu.memory_space<vmem>>, vector<1x8x1xf32>
    %267 = vector.shape_cast %266 : vector<1x8x1xf32> to vector<8x1xf32>
    %c0_193 = arith.constant 0 : index
    %c1_194 = arith.constant 1 : index
    %c19_195 = arith.constant 19 : index
    %268 = vector.load %arg1[%c0_193, %c1_194, %c19_195] : memref<1x8x362xf32, #tpu.memory_space<vmem>>, vector<1x1x324xf32>
    %269 = vector.shape_cast %268 : vector<1x1x324xf32> to vector<1x324xf32>
    %270 = vector.broadcast %267 : vector<8x1xf32> to vector<8x324xf32>
    %271 = vector.broadcast %269 : vector<1x324xf32> to vector<8x324xf32>
    %272 = arith.mulf %270, %271 : vector<8x324xf32>
    %273 = arith.addf %265, %272 : vector<8x324xf32>
    %c4_196 = arith.constant 4 : index
    %c0_197 = arith.constant 0 : index
    %c2_198 = arith.constant 2 : index
    %274 = vector.load %arg2[%c4_196, %c0_197, %c2_198] : memref<9x8x8xf32, #tpu.memory_space<vmem>>, vector<1x8x1xf32>
    %275 = vector.shape_cast %274 : vector<1x8x1xf32> to vector<8x1xf32>
    %c0_199 = arith.constant 0 : index
    %c2_200 = arith.constant 2 : index
    %c19_201 = arith.constant 19 : index
    %276 = vector.load %arg1[%c0_199, %c2_200, %c19_201] : memref<1x8x362xf32, #tpu.memory_space<vmem>>, vector<1x1x324xf32>
    %277 = vector.shape_cast %276 : vector<1x1x324xf32> to vector<1x324xf32>
    %278 = vector.broadcast %275 : vector<8x1xf32> to vector<8x324xf32>
    %279 = vector.broadcast %277 : vector<1x324xf32> to vector<8x324xf32>
    %280 = arith.mulf %278, %279 : vector<8x324xf32>
    %281 = arith.addf %273, %280 : vector<8x324xf32>
    %c4_202 = arith.constant 4 : index
    %c0_203 = arith.constant 0 : index
    %c3_204 = arith.constant 3 : index
    %282 = vector.load %arg2[%c4_202, %c0_203, %c3_204] : memref<9x8x8xf32, #tpu.memory_space<vmem>>, vector<1x8x1xf32>
    %283 = vector.shape_cast %282 : vector<1x8x1xf32> to vector<8x1xf32>
    %c0_205 = arith.constant 0 : index
    %c3_206 = arith.constant 3 : index
    %c19_207 = arith.constant 19 : index
    %284 = vector.load %arg1[%c0_205, %c3_206, %c19_207] : memref<1x8x362xf32, #tpu.memory_space<vmem>>, vector<1x1x324xf32>
    %285 = vector.shape_cast %284 : vector<1x1x324xf32> to vector<1x324xf32>
    %286 = vector.broadcast %283 : vector<8x1xf32> to vector<8x324xf32>
    %287 = vector.broadcast %285 : vector<1x324xf32> to vector<8x324xf32>
    %288 = arith.mulf %286, %287 : vector<8x324xf32>
    %289 = arith.addf %281, %288 : vector<8x324xf32>
    %c4_208 = arith.constant 4 : index
    %c0_209 = arith.constant 0 : index
    %c4_210 = arith.constant 4 : index
    %290 = vector.load %arg2[%c4_208, %c0_209, %c4_210] : memref<9x8x8xf32, #tpu.memory_space<vmem>>, vector<1x8x1xf32>
    %291 = vector.shape_cast %290 : vector<1x8x1xf32> to vector<8x1xf32>
    %c0_211 = arith.constant 0 : index
    %c4_212 = arith.constant 4 : index
    %c19_213 = arith.constant 19 : index
    %292 = vector.load %arg1[%c0_211, %c4_212, %c19_213] : memref<1x8x362xf32, #tpu.memory_space<vmem>>, vector<1x1x324xf32>
    %293 = vector.shape_cast %292 : vector<1x1x324xf32> to vector<1x324xf32>
    %294 = vector.broadcast %291 : vector<8x1xf32> to vector<8x324xf32>
    %295 = vector.broadcast %293 : vector<1x324xf32> to vector<8x324xf32>
    %296 = arith.mulf %294, %295 : vector<8x324xf32>
    %297 = arith.addf %289, %296 : vector<8x324xf32>
    %c4_214 = arith.constant 4 : index
    %c0_215 = arith.constant 0 : index
    %c5_216 = arith.constant 5 : index
    %298 = vector.load %arg2[%c4_214, %c0_215, %c5_216] : memref<9x8x8xf32, #tpu.memory_space<vmem>>, vector<1x8x1xf32>
    %299 = vector.shape_cast %298 : vector<1x8x1xf32> to vector<8x1xf32>
    %c0_217 = arith.constant 0 : index
    %c5_218 = arith.constant 5 : index
    %c19_219 = arith.constant 19 : index
    %300 = vector.load %arg1[%c0_217, %c5_218, %c19_219] : memref<1x8x362xf32, #tpu.memory_space<vmem>>, vector<1x1x324xf32>
    %301 = vector.shape_cast %300 : vector<1x1x324xf32> to vector<1x324xf32>
    %302 = vector.broadcast %299 : vector<8x1xf32> to vector<8x324xf32>
    %303 = vector.broadcast %301 : vector<1x324xf32> to vector<8x324xf32>
    %304 = arith.mulf %302, %303 : vector<8x324xf32>
    %305 = arith.addf %297, %304 : vector<8x324xf32>
    %c4_220 = arith.constant 4 : index
    %c0_221 = arith.constant 0 : index
    %c6_222 = arith.constant 6 : index
    %306 = vector.load %arg2[%c4_220, %c0_221, %c6_222] : memref<9x8x8xf32, #tpu.memory_space<vmem>>, vector<1x8x1xf32>
    %307 = vector.shape_cast %306 : vector<1x8x1xf32> to vector<8x1xf32>
    %c0_223 = arith.constant 0 : index
    %c6_224 = arith.constant 6 : index
    %c19_225 = arith.constant 19 : index
    %308 = vector.load %arg1[%c0_223, %c6_224, %c19_225] : memref<1x8x362xf32, #tpu.memory_space<vmem>>, vector<1x1x324xf32>
    %309 = vector.shape_cast %308 : vector<1x1x324xf32> to vector<1x324xf32>
    %310 = vector.broadcast %307 : vector<8x1xf32> to vector<8x324xf32>
    %311 = vector.broadcast %309 : vector<1x324xf32> to vector<8x324xf32>
    %312 = arith.mulf %310, %311 : vector<8x324xf32>
    %313 = arith.addf %305, %312 : vector<8x324xf32>
    %c4_226 = arith.constant 4 : index
    %c0_227 = arith.constant 0 : index
    %c7_228 = arith.constant 7 : index
    %314 = vector.load %arg2[%c4_226, %c0_227, %c7_228] : memref<9x8x8xf32, #tpu.memory_space<vmem>>, vector<1x8x1xf32>
    %315 = vector.shape_cast %314 : vector<1x8x1xf32> to vector<8x1xf32>
    %c0_229 = arith.constant 0 : index
    %c7_230 = arith.constant 7 : index
    %c19_231 = arith.constant 19 : index
    %316 = vector.load %arg1[%c0_229, %c7_230, %c19_231] : memref<1x8x362xf32, #tpu.memory_space<vmem>>, vector<1x1x324xf32>
    %317 = vector.shape_cast %316 : vector<1x1x324xf32> to vector<1x324xf32>
    %318 = vector.broadcast %315 : vector<8x1xf32> to vector<8x324xf32>
    %319 = vector.broadcast %317 : vector<1x324xf32> to vector<8x324xf32>
    %320 = arith.mulf %318, %319 : vector<8x324xf32>
    %321 = arith.addf %313, %320 : vector<8x324xf32>
    %c5_232 = arith.constant 5 : index
    %c0_233 = arith.constant 0 : index
    %c0_234 = arith.constant 0 : index
    %322 = vector.load %arg2[%c5_232, %c0_233, %c0_234] : memref<9x8x8xf32, #tpu.memory_space<vmem>>, vector<1x8x1xf32>
    %323 = vector.shape_cast %322 : vector<1x8x1xf32> to vector<8x1xf32>
    %c0_235 = arith.constant 0 : index
    %c0_236 = arith.constant 0 : index
    %c20 = arith.constant 20 : index
    %324 = vector.load %arg1[%c0_235, %c0_236, %c20] : memref<1x8x362xf32, #tpu.memory_space<vmem>>, vector<1x1x324xf32>
    %325 = vector.shape_cast %324 : vector<1x1x324xf32> to vector<1x324xf32>
    %326 = vector.broadcast %323 : vector<8x1xf32> to vector<8x324xf32>
    %327 = vector.broadcast %325 : vector<1x324xf32> to vector<8x324xf32>
    %328 = arith.mulf %326, %327 : vector<8x324xf32>
    %329 = arith.addf %321, %328 : vector<8x324xf32>
    %c5_237 = arith.constant 5 : index
    %c0_238 = arith.constant 0 : index
    %c1_239 = arith.constant 1 : index
    %330 = vector.load %arg2[%c5_237, %c0_238, %c1_239] : memref<9x8x8xf32, #tpu.memory_space<vmem>>, vector<1x8x1xf32>
    %331 = vector.shape_cast %330 : vector<1x8x1xf32> to vector<8x1xf32>
    %c0_240 = arith.constant 0 : index
    %c1_241 = arith.constant 1 : index
    %c20_242 = arith.constant 20 : index
    %332 = vector.load %arg1[%c0_240, %c1_241, %c20_242] : memref<1x8x362xf32, #tpu.memory_space<vmem>>, vector<1x1x324xf32>
    %333 = vector.shape_cast %332 : vector<1x1x324xf32> to vector<1x324xf32>
    %334 = vector.broadcast %331 : vector<8x1xf32> to vector<8x324xf32>
    %335 = vector.broadcast %333 : vector<1x324xf32> to vector<8x324xf32>
    %336 = arith.mulf %334, %335 : vector<8x324xf32>
    %337 = arith.addf %329, %336 : vector<8x324xf32>
    %c5_243 = arith.constant 5 : index
    %c0_244 = arith.constant 0 : index
    %c2_245 = arith.constant 2 : index
    %338 = vector.load %arg2[%c5_243, %c0_244, %c2_245] : memref<9x8x8xf32, #tpu.memory_space<vmem>>, vector<1x8x1xf32>
    %339 = vector.shape_cast %338 : vector<1x8x1xf32> to vector<8x1xf32>
    %c0_246 = arith.constant 0 : index
    %c2_247 = arith.constant 2 : index
    %c20_248 = arith.constant 20 : index
    %340 = vector.load %arg1[%c0_246, %c2_247, %c20_248] : memref<1x8x362xf32, #tpu.memory_space<vmem>>, vector<1x1x324xf32>
    %341 = vector.shape_cast %340 : vector<1x1x324xf32> to vector<1x324xf32>
    %342 = vector.broadcast %339 : vector<8x1xf32> to vector<8x324xf32>
    %343 = vector.broadcast %341 : vector<1x324xf32> to vector<8x324xf32>
    %344 = arith.mulf %342, %343 : vector<8x324xf32>
    %345 = arith.addf %337, %344 : vector<8x324xf32>
    %c5_249 = arith.constant 5 : index
    %c0_250 = arith.constant 0 : index
    %c3_251 = arith.constant 3 : index
    %346 = vector.load %arg2[%c5_249, %c0_250, %c3_251] : memref<9x8x8xf32, #tpu.memory_space<vmem>>, vector<1x8x1xf32>
    %347 = vector.shape_cast %346 : vector<1x8x1xf32> to vector<8x1xf32>
    %c0_252 = arith.constant 0 : index
    %c3_253 = arith.constant 3 : index
    %c20_254 = arith.constant 20 : index
    %348 = vector.load %arg1[%c0_252, %c3_253, %c20_254] : memref<1x8x362xf32, #tpu.memory_space<vmem>>, vector<1x1x324xf32>
    %349 = vector.shape_cast %348 : vector<1x1x324xf32> to vector<1x324xf32>
    %350 = vector.broadcast %347 : vector<8x1xf32> to vector<8x324xf32>
    %351 = vector.broadcast %349 : vector<1x324xf32> to vector<8x324xf32>
    %352 = arith.mulf %350, %351 : vector<8x324xf32>
    %353 = arith.addf %345, %352 : vector<8x324xf32>
    %c5_255 = arith.constant 5 : index
    %c0_256 = arith.constant 0 : index
    %c4_257 = arith.constant 4 : index
    %354 = vector.load %arg2[%c5_255, %c0_256, %c4_257] : memref<9x8x8xf32, #tpu.memory_space<vmem>>, vector<1x8x1xf32>
    %355 = vector.shape_cast %354 : vector<1x8x1xf32> to vector<8x1xf32>
    %c0_258 = arith.constant 0 : index
    %c4_259 = arith.constant 4 : index
    %c20_260 = arith.constant 20 : index
    %356 = vector.load %arg1[%c0_258, %c4_259, %c20_260] : memref<1x8x362xf32, #tpu.memory_space<vmem>>, vector<1x1x324xf32>
    %357 = vector.shape_cast %356 : vector<1x1x324xf32> to vector<1x324xf32>
    %358 = vector.broadcast %355 : vector<8x1xf32> to vector<8x324xf32>
    %359 = vector.broadcast %357 : vector<1x324xf32> to vector<8x324xf32>
    %360 = arith.mulf %358, %359 : vector<8x324xf32>
    %361 = arith.addf %353, %360 : vector<8x324xf32>
    %c5_261 = arith.constant 5 : index
    %c0_262 = arith.constant 0 : index
    %c5_263 = arith.constant 5 : index
    %362 = vector.load %arg2[%c5_261, %c0_262, %c5_263] : memref<9x8x8xf32, #tpu.memory_space<vmem>>, vector<1x8x1xf32>
    %363 = vector.shape_cast %362 : vector<1x8x1xf32> to vector<8x1xf32>
    %c0_264 = arith.constant 0 : index
    %c5_265 = arith.constant 5 : index
    %c20_266 = arith.constant 20 : index
    %364 = vector.load %arg1[%c0_264, %c5_265, %c20_266] : memref<1x8x362xf32, #tpu.memory_space<vmem>>, vector<1x1x324xf32>
    %365 = vector.shape_cast %364 : vector<1x1x324xf32> to vector<1x324xf32>
    %366 = vector.broadcast %363 : vector<8x1xf32> to vector<8x324xf32>
    %367 = vector.broadcast %365 : vector<1x324xf32> to vector<8x324xf32>
    %368 = arith.mulf %366, %367 : vector<8x324xf32>
    %369 = arith.addf %361, %368 : vector<8x324xf32>
    %c5_267 = arith.constant 5 : index
    %c0_268 = arith.constant 0 : index
    %c6_269 = arith.constant 6 : index
    %370 = vector.load %arg2[%c5_267, %c0_268, %c6_269] : memref<9x8x8xf32, #tpu.memory_space<vmem>>, vector<1x8x1xf32>
    %371 = vector.shape_cast %370 : vector<1x8x1xf32> to vector<8x1xf32>
    %c0_270 = arith.constant 0 : index
    %c6_271 = arith.constant 6 : index
    %c20_272 = arith.constant 20 : index
    %372 = vector.load %arg1[%c0_270, %c6_271, %c20_272] : memref<1x8x362xf32, #tpu.memory_space<vmem>>, vector<1x1x324xf32>
    %373 = vector.shape_cast %372 : vector<1x1x324xf32> to vector<1x324xf32>
    %374 = vector.broadcast %371 : vector<8x1xf32> to vector<8x324xf32>
    %375 = vector.broadcast %373 : vector<1x324xf32> to vector<8x324xf32>
    %376 = arith.mulf %374, %375 : vector<8x324xf32>
    %377 = arith.addf %369, %376 : vector<8x324xf32>
    %c5_273 = arith.constant 5 : index
    %c0_274 = arith.constant 0 : index
    %c7_275 = arith.constant 7 : index
    %378 = vector.load %arg2[%c5_273, %c0_274, %c7_275] : memref<9x8x8xf32, #tpu.memory_space<vmem>>, vector<1x8x1xf32>
    %379 = vector.shape_cast %378 : vector<1x8x1xf32> to vector<8x1xf32>
    %c0_276 = arith.constant 0 : index
    %c7_277 = arith.constant 7 : index
    %c20_278 = arith.constant 20 : index
    %380 = vector.load %arg1[%c0_276, %c7_277, %c20_278] : memref<1x8x362xf32, #tpu.memory_space<vmem>>, vector<1x1x324xf32>
    %381 = vector.shape_cast %380 : vector<1x1x324xf32> to vector<1x324xf32>
    %382 = vector.broadcast %379 : vector<8x1xf32> to vector<8x324xf32>
    %383 = vector.broadcast %381 : vector<1x324xf32> to vector<8x324xf32>
    %384 = arith.mulf %382, %383 : vector<8x324xf32>
    %385 = arith.addf %377, %384 : vector<8x324xf32>
    %c6_279 = arith.constant 6 : index
    %c0_280 = arith.constant 0 : index
    %c0_281 = arith.constant 0 : index
    %386 = vector.load %arg2[%c6_279, %c0_280, %c0_281] : memref<9x8x8xf32, #tpu.memory_space<vmem>>, vector<1x8x1xf32>
    %387 = vector.shape_cast %386 : vector<1x8x1xf32> to vector<8x1xf32>
    %c0_282 = arith.constant 0 : index
    %c0_283 = arith.constant 0 : index
    %c36 = arith.constant 36 : index
    %388 = vector.load %arg1[%c0_282, %c0_283, %c36] : memref<1x8x362xf32, #tpu.memory_space<vmem>>, vector<1x1x324xf32>
    %389 = vector.shape_cast %388 : vector<1x1x324xf32> to vector<1x324xf32>
    %390 = vector.broadcast %387 : vector<8x1xf32> to vector<8x324xf32>
    %391 = vector.broadcast %389 : vector<1x324xf32> to vector<8x324xf32>
    %392 = arith.mulf %390, %391 : vector<8x324xf32>
    %393 = arith.addf %385, %392 : vector<8x324xf32>
    %c6_284 = arith.constant 6 : index
    %c0_285 = arith.constant 0 : index
    %c1_286 = arith.constant 1 : index
    %394 = vector.load %arg2[%c6_284, %c0_285, %c1_286] : memref<9x8x8xf32, #tpu.memory_space<vmem>>, vector<1x8x1xf32>
    %395 = vector.shape_cast %394 : vector<1x8x1xf32> to vector<8x1xf32>
    %c0_287 = arith.constant 0 : index
    %c1_288 = arith.constant 1 : index
    %c36_289 = arith.constant 36 : index
    %396 = vector.load %arg1[%c0_287, %c1_288, %c36_289] : memref<1x8x362xf32, #tpu.memory_space<vmem>>, vector<1x1x324xf32>
    %397 = vector.shape_cast %396 : vector<1x1x324xf32> to vector<1x324xf32>
    %398 = vector.broadcast %395 : vector<8x1xf32> to vector<8x324xf32>
    %399 = vector.broadcast %397 : vector<1x324xf32> to vector<8x324xf32>
    %400 = arith.mulf %398, %399 : vector<8x324xf32>
    %401 = arith.addf %393, %400 : vector<8x324xf32>
    %c6_290 = arith.constant 6 : index
    %c0_291 = arith.constant 0 : index
    %c2_292 = arith.constant 2 : index
    %402 = vector.load %arg2[%c6_290, %c0_291, %c2_292] : memref<9x8x8xf32, #tpu.memory_space<vmem>>, vector<1x8x1xf32>
    %403 = vector.shape_cast %402 : vector<1x8x1xf32> to vector<8x1xf32>
    %c0_293 = arith.constant 0 : index
    %c2_294 = arith.constant 2 : index
    %c36_295 = arith.constant 36 : index
    %404 = vector.load %arg1[%c0_293, %c2_294, %c36_295] : memref<1x8x362xf32, #tpu.memory_space<vmem>>, vector<1x1x324xf32>
    %405 = vector.shape_cast %404 : vector<1x1x324xf32> to vector<1x324xf32>
    %406 = vector.broadcast %403 : vector<8x1xf32> to vector<8x324xf32>
    %407 = vector.broadcast %405 : vector<1x324xf32> to vector<8x324xf32>
    %408 = arith.mulf %406, %407 : vector<8x324xf32>
    %409 = arith.addf %401, %408 : vector<8x324xf32>
    %c6_296 = arith.constant 6 : index
    %c0_297 = arith.constant 0 : index
    %c3_298 = arith.constant 3 : index
    %410 = vector.load %arg2[%c6_296, %c0_297, %c3_298] : memref<9x8x8xf32, #tpu.memory_space<vmem>>, vector<1x8x1xf32>
    %411 = vector.shape_cast %410 : vector<1x8x1xf32> to vector<8x1xf32>
    %c0_299 = arith.constant 0 : index
    %c3_300 = arith.constant 3 : index
    %c36_301 = arith.constant 36 : index
    %412 = vector.load %arg1[%c0_299, %c3_300, %c36_301] : memref<1x8x362xf32, #tpu.memory_space<vmem>>, vector<1x1x324xf32>
    %413 = vector.shape_cast %412 : vector<1x1x324xf32> to vector<1x324xf32>
    %414 = vector.broadcast %411 : vector<8x1xf32> to vector<8x324xf32>
    %415 = vector.broadcast %413 : vector<1x324xf32> to vector<8x324xf32>
    %416 = arith.mulf %414, %415 : vector<8x324xf32>
    %417 = arith.addf %409, %416 : vector<8x324xf32>
    %c6_302 = arith.constant 6 : index
    %c0_303 = arith.constant 0 : index
    %c4_304 = arith.constant 4 : index
    %418 = vector.load %arg2[%c6_302, %c0_303, %c4_304] : memref<9x8x8xf32, #tpu.memory_space<vmem>>, vector<1x8x1xf32>
    %419 = vector.shape_cast %418 : vector<1x8x1xf32> to vector<8x1xf32>
    %c0_305 = arith.constant 0 : index
    %c4_306 = arith.constant 4 : index
    %c36_307 = arith.constant 36 : index
    %420 = vector.load %arg1[%c0_305, %c4_306, %c36_307] : memref<1x8x362xf32, #tpu.memory_space<vmem>>, vector<1x1x324xf32>
    %421 = vector.shape_cast %420 : vector<1x1x324xf32> to vector<1x324xf32>
    %422 = vector.broadcast %419 : vector<8x1xf32> to vector<8x324xf32>
    %423 = vector.broadcast %421 : vector<1x324xf32> to vector<8x324xf32>
    %424 = arith.mulf %422, %423 : vector<8x324xf32>
    %425 = arith.addf %417, %424 : vector<8x324xf32>
    %c6_308 = arith.constant 6 : index
    %c0_309 = arith.constant 0 : index
    %c5_310 = arith.constant 5 : index
    %426 = vector.load %arg2[%c6_308, %c0_309, %c5_310] : memref<9x8x8xf32, #tpu.memory_space<vmem>>, vector<1x8x1xf32>
    %427 = vector.shape_cast %426 : vector<1x8x1xf32> to vector<8x1xf32>
    %c0_311 = arith.constant 0 : index
    %c5_312 = arith.constant 5 : index
    %c36_313 = arith.constant 36 : index
    %428 = vector.load %arg1[%c0_311, %c5_312, %c36_313] : memref<1x8x362xf32, #tpu.memory_space<vmem>>, vector<1x1x324xf32>
    %429 = vector.shape_cast %428 : vector<1x1x324xf32> to vector<1x324xf32>
    %430 = vector.broadcast %427 : vector<8x1xf32> to vector<8x324xf32>
    %431 = vector.broadcast %429 : vector<1x324xf32> to vector<8x324xf32>
    %432 = arith.mulf %430, %431 : vector<8x324xf32>
    %433 = arith.addf %425, %432 : vector<8x324xf32>
    %c6_314 = arith.constant 6 : index
    %c0_315 = arith.constant 0 : index
    %c6_316 = arith.constant 6 : index
    %434 = vector.load %arg2[%c6_314, %c0_315, %c6_316] : memref<9x8x8xf32, #tpu.memory_space<vmem>>, vector<1x8x1xf32>
    %435 = vector.shape_cast %434 : vector<1x8x1xf32> to vector<8x1xf32>
    %c0_317 = arith.constant 0 : index
    %c6_318 = arith.constant 6 : index
    %c36_319 = arith.constant 36 : index
    %436 = vector.load %arg1[%c0_317, %c6_318, %c36_319] : memref<1x8x362xf32, #tpu.memory_space<vmem>>, vector<1x1x324xf32>
    %437 = vector.shape_cast %436 : vector<1x1x324xf32> to vector<1x324xf32>
    %438 = vector.broadcast %435 : vector<8x1xf32> to vector<8x324xf32>
    %439 = vector.broadcast %437 : vector<1x324xf32> to vector<8x324xf32>
    %440 = arith.mulf %438, %439 : vector<8x324xf32>
    %441 = arith.addf %433, %440 : vector<8x324xf32>
    %c6_320 = arith.constant 6 : index
    %c0_321 = arith.constant 0 : index
    %c7_322 = arith.constant 7 : index
    %442 = vector.load %arg2[%c6_320, %c0_321, %c7_322] : memref<9x8x8xf32, #tpu.memory_space<vmem>>, vector<1x8x1xf32>
    %443 = vector.shape_cast %442 : vector<1x8x1xf32> to vector<8x1xf32>
    %c0_323 = arith.constant 0 : index
    %c7_324 = arith.constant 7 : index
    %c36_325 = arith.constant 36 : index
    %444 = vector.load %arg1[%c0_323, %c7_324, %c36_325] : memref<1x8x362xf32, #tpu.memory_space<vmem>>, vector<1x1x324xf32>
    %445 = vector.shape_cast %444 : vector<1x1x324xf32> to vector<1x324xf32>
    %446 = vector.broadcast %443 : vector<8x1xf32> to vector<8x324xf32>
    %447 = vector.broadcast %445 : vector<1x324xf32> to vector<8x324xf32>
    %448 = arith.mulf %446, %447 : vector<8x324xf32>
    %449 = arith.addf %441, %448 : vector<8x324xf32>
    %c7_326 = arith.constant 7 : index
    %c0_327 = arith.constant 0 : index
    %c0_328 = arith.constant 0 : index
    %450 = vector.load %arg2[%c7_326, %c0_327, %c0_328] : memref<9x8x8xf32, #tpu.memory_space<vmem>>, vector<1x8x1xf32>
    %451 = vector.shape_cast %450 : vector<1x8x1xf32> to vector<8x1xf32>
    %c0_329 = arith.constant 0 : index
    %c0_330 = arith.constant 0 : index
    %c37 = arith.constant 37 : index
    %452 = vector.load %arg1[%c0_329, %c0_330, %c37] : memref<1x8x362xf32, #tpu.memory_space<vmem>>, vector<1x1x324xf32>
    %453 = vector.shape_cast %452 : vector<1x1x324xf32> to vector<1x324xf32>
    %454 = vector.broadcast %451 : vector<8x1xf32> to vector<8x324xf32>
    %455 = vector.broadcast %453 : vector<1x324xf32> to vector<8x324xf32>
    %456 = arith.mulf %454, %455 : vector<8x324xf32>
    %457 = arith.addf %449, %456 : vector<8x324xf32>
    %c7_331 = arith.constant 7 : index
    %c0_332 = arith.constant 0 : index
    %c1_333 = arith.constant 1 : index
    %458 = vector.load %arg2[%c7_331, %c0_332, %c1_333] : memref<9x8x8xf32, #tpu.memory_space<vmem>>, vector<1x8x1xf32>
    %459 = vector.shape_cast %458 : vector<1x8x1xf32> to vector<8x1xf32>
    %c0_334 = arith.constant 0 : index
    %c1_335 = arith.constant 1 : index
    %c37_336 = arith.constant 37 : index
    %460 = vector.load %arg1[%c0_334, %c1_335, %c37_336] : memref<1x8x362xf32, #tpu.memory_space<vmem>>, vector<1x1x324xf32>
    %461 = vector.shape_cast %460 : vector<1x1x324xf32> to vector<1x324xf32>
    %462 = vector.broadcast %459 : vector<8x1xf32> to vector<8x324xf32>
    %463 = vector.broadcast %461 : vector<1x324xf32> to vector<8x324xf32>
    %464 = arith.mulf %462, %463 : vector<8x324xf32>
    %465 = arith.addf %457, %464 : vector<8x324xf32>
    %c7_337 = arith.constant 7 : index
    %c0_338 = arith.constant 0 : index
    %c2_339 = arith.constant 2 : index
    %466 = vector.load %arg2[%c7_337, %c0_338, %c2_339] : memref<9x8x8xf32, #tpu.memory_space<vmem>>, vector<1x8x1xf32>
    %467 = vector.shape_cast %466 : vector<1x8x1xf32> to vector<8x1xf32>
    %c0_340 = arith.constant 0 : index
    %c2_341 = arith.constant 2 : index
    %c37_342 = arith.constant 37 : index
    %468 = vector.load %arg1[%c0_340, %c2_341, %c37_342] : memref<1x8x362xf32, #tpu.memory_space<vmem>>, vector<1x1x324xf32>
    %469 = vector.shape_cast %468 : vector<1x1x324xf32> to vector<1x324xf32>
    %470 = vector.broadcast %467 : vector<8x1xf32> to vector<8x324xf32>
    %471 = vector.broadcast %469 : vector<1x324xf32> to vector<8x324xf32>
    %472 = arith.mulf %470, %471 : vector<8x324xf32>
    %473 = arith.addf %465, %472 : vector<8x324xf32>
    %c7_343 = arith.constant 7 : index
    %c0_344 = arith.constant 0 : index
    %c3_345 = arith.constant 3 : index
    %474 = vector.load %arg2[%c7_343, %c0_344, %c3_345] : memref<9x8x8xf32, #tpu.memory_space<vmem>>, vector<1x8x1xf32>
    %475 = vector.shape_cast %474 : vector<1x8x1xf32> to vector<8x1xf32>
    %c0_346 = arith.constant 0 : index
    %c3_347 = arith.constant 3 : index
    %c37_348 = arith.constant 37 : index
    %476 = vector.load %arg1[%c0_346, %c3_347, %c37_348] : memref<1x8x362xf32, #tpu.memory_space<vmem>>, vector<1x1x324xf32>
    %477 = vector.shape_cast %476 : vector<1x1x324xf32> to vector<1x324xf32>
    %478 = vector.broadcast %475 : vector<8x1xf32> to vector<8x324xf32>
    %479 = vector.broadcast %477 : vector<1x324xf32> to vector<8x324xf32>
    %480 = arith.mulf %478, %479 : vector<8x324xf32>
    %481 = arith.addf %473, %480 : vector<8x324xf32>
    %c7_349 = arith.constant 7 : index
    %c0_350 = arith.constant 0 : index
    %c4_351 = arith.constant 4 : index
    %482 = vector.load %arg2[%c7_349, %c0_350, %c4_351] : memref<9x8x8xf32, #tpu.memory_space<vmem>>, vector<1x8x1xf32>
    %483 = vector.shape_cast %482 : vector<1x8x1xf32> to vector<8x1xf32>
    %c0_352 = arith.constant 0 : index
    %c4_353 = arith.constant 4 : index
    %c37_354 = arith.constant 37 : index
    %484 = vector.load %arg1[%c0_352, %c4_353, %c37_354] : memref<1x8x362xf32, #tpu.memory_space<vmem>>, vector<1x1x324xf32>
    %485 = vector.shape_cast %484 : vector<1x1x324xf32> to vector<1x324xf32>
    %486 = vector.broadcast %483 : vector<8x1xf32> to vector<8x324xf32>
    %487 = vector.broadcast %485 : vector<1x324xf32> to vector<8x324xf32>
    %488 = arith.mulf %486, %487 : vector<8x324xf32>
    %489 = arith.addf %481, %488 : vector<8x324xf32>
    %c7_355 = arith.constant 7 : index
    %c0_356 = arith.constant 0 : index
    %c5_357 = arith.constant 5 : index
    %490 = vector.load %arg2[%c7_355, %c0_356, %c5_357] : memref<9x8x8xf32, #tpu.memory_space<vmem>>, vector<1x8x1xf32>
    %491 = vector.shape_cast %490 : vector<1x8x1xf32> to vector<8x1xf32>
    %c0_358 = arith.constant 0 : index
    %c5_359 = arith.constant 5 : index
    %c37_360 = arith.constant 37 : index
    %492 = vector.load %arg1[%c0_358, %c5_359, %c37_360] : memref<1x8x362xf32, #tpu.memory_space<vmem>>, vector<1x1x324xf32>
    %493 = vector.shape_cast %492 : vector<1x1x324xf32> to vector<1x324xf32>
    %494 = vector.broadcast %491 : vector<8x1xf32> to vector<8x324xf32>
    %495 = vector.broadcast %493 : vector<1x324xf32> to vector<8x324xf32>
    %496 = arith.mulf %494, %495 : vector<8x324xf32>
    %497 = arith.addf %489, %496 : vector<8x324xf32>
    %c7_361 = arith.constant 7 : index
    %c0_362 = arith.constant 0 : index
    %c6_363 = arith.constant 6 : index
    %498 = vector.load %arg2[%c7_361, %c0_362, %c6_363] : memref<9x8x8xf32, #tpu.memory_space<vmem>>, vector<1x8x1xf32>
    %499 = vector.shape_cast %498 : vector<1x8x1xf32> to vector<8x1xf32>
    %c0_364 = arith.constant 0 : index
    %c6_365 = arith.constant 6 : index
    %c37_366 = arith.constant 37 : index
    %500 = vector.load %arg1[%c0_364, %c6_365, %c37_366] : memref<1x8x362xf32, #tpu.memory_space<vmem>>, vector<1x1x324xf32>
    %501 = vector.shape_cast %500 : vector<1x1x324xf32> to vector<1x324xf32>
    %502 = vector.broadcast %499 : vector<8x1xf32> to vector<8x324xf32>
    %503 = vector.broadcast %501 : vector<1x324xf32> to vector<8x324xf32>
    %504 = arith.mulf %502, %503 : vector<8x324xf32>
    %505 = arith.addf %497, %504 : vector<8x324xf32>
    %c7_367 = arith.constant 7 : index
    %c0_368 = arith.constant 0 : index
    %c7_369 = arith.constant 7 : index
    %506 = vector.load %arg2[%c7_367, %c0_368, %c7_369] : memref<9x8x8xf32, #tpu.memory_space<vmem>>, vector<1x8x1xf32>
    %507 = vector.shape_cast %506 : vector<1x8x1xf32> to vector<8x1xf32>
    %c0_370 = arith.constant 0 : index
    %c7_371 = arith.constant 7 : index
    %c37_372 = arith.constant 37 : index
    %508 = vector.load %arg1[%c0_370, %c7_371, %c37_372] : memref<1x8x362xf32, #tpu.memory_space<vmem>>, vector<1x1x324xf32>
    %509 = vector.shape_cast %508 : vector<1x1x324xf32> to vector<1x324xf32>
    %510 = vector.broadcast %507 : vector<8x1xf32> to vector<8x324xf32>
    %511 = vector.broadcast %509 : vector<1x324xf32> to vector<8x324xf32>
    %512 = arith.mulf %510, %511 : vector<8x324xf32>
    %513 = arith.addf %505, %512 : vector<8x324xf32>
    %c8 = arith.constant 8 : index
    %c0_373 = arith.constant 0 : index
    %c0_374 = arith.constant 0 : index
    %514 = vector.load %arg2[%c8, %c0_373, %c0_374] : memref<9x8x8xf32, #tpu.memory_space<vmem>>, vector<1x8x1xf32>
    %515 = vector.shape_cast %514 : vector<1x8x1xf32> to vector<8x1xf32>
    %c0_375 = arith.constant 0 : index
    %c0_376 = arith.constant 0 : index
    %c38 = arith.constant 38 : index
    %516 = vector.load %arg1[%c0_375, %c0_376, %c38] : memref<1x8x362xf32, #tpu.memory_space<vmem>>, vector<1x1x324xf32>
    %517 = vector.shape_cast %516 : vector<1x1x324xf32> to vector<1x324xf32>
    %518 = vector.broadcast %515 : vector<8x1xf32> to vector<8x324xf32>
    %519 = vector.broadcast %517 : vector<1x324xf32> to vector<8x324xf32>
    %520 = arith.mulf %518, %519 : vector<8x324xf32>
    %521 = arith.addf %513, %520 : vector<8x324xf32>
    %c8_377 = arith.constant 8 : index
    %c0_378 = arith.constant 0 : index
    %c1_379 = arith.constant 1 : index
    %522 = vector.load %arg2[%c8_377, %c0_378, %c1_379] : memref<9x8x8xf32, #tpu.memory_space<vmem>>, vector<1x8x1xf32>
    %523 = vector.shape_cast %522 : vector<1x8x1xf32> to vector<8x1xf32>
    %c0_380 = arith.constant 0 : index
    %c1_381 = arith.constant 1 : index
    %c38_382 = arith.constant 38 : index
    %524 = vector.load %arg1[%c0_380, %c1_381, %c38_382] : memref<1x8x362xf32, #tpu.memory_space<vmem>>, vector<1x1x324xf32>
    %525 = vector.shape_cast %524 : vector<1x1x324xf32> to vector<1x324xf32>
    %526 = vector.broadcast %523 : vector<8x1xf32> to vector<8x324xf32>
    %527 = vector.broadcast %525 : vector<1x324xf32> to vector<8x324xf32>
    %528 = arith.mulf %526, %527 : vector<8x324xf32>
    %529 = arith.addf %521, %528 : vector<8x324xf32>
    %c8_383 = arith.constant 8 : index
    %c0_384 = arith.constant 0 : index
    %c2_385 = arith.constant 2 : index
    %530 = vector.load %arg2[%c8_383, %c0_384, %c2_385] : memref<9x8x8xf32, #tpu.memory_space<vmem>>, vector<1x8x1xf32>
    %531 = vector.shape_cast %530 : vector<1x8x1xf32> to vector<8x1xf32>
    %c0_386 = arith.constant 0 : index
    %c2_387 = arith.constant 2 : index
    %c38_388 = arith.constant 38 : index
    %532 = vector.load %arg1[%c0_386, %c2_387, %c38_388] : memref<1x8x362xf32, #tpu.memory_space<vmem>>, vector<1x1x324xf32>
    %533 = vector.shape_cast %532 : vector<1x1x324xf32> to vector<1x324xf32>
    %534 = vector.broadcast %531 : vector<8x1xf32> to vector<8x324xf32>
    %535 = vector.broadcast %533 : vector<1x324xf32> to vector<8x324xf32>
    %536 = arith.mulf %534, %535 : vector<8x324xf32>
    %537 = arith.addf %529, %536 : vector<8x324xf32>
    %c8_389 = arith.constant 8 : index
    %c0_390 = arith.constant 0 : index
    %c3_391 = arith.constant 3 : index
    %538 = vector.load %arg2[%c8_389, %c0_390, %c3_391] : memref<9x8x8xf32, #tpu.memory_space<vmem>>, vector<1x8x1xf32>
    %539 = vector.shape_cast %538 : vector<1x8x1xf32> to vector<8x1xf32>
    %c0_392 = arith.constant 0 : index
    %c3_393 = arith.constant 3 : index
    %c38_394 = arith.constant 38 : index
    %540 = vector.load %arg1[%c0_392, %c3_393, %c38_394] : memref<1x8x362xf32, #tpu.memory_space<vmem>>, vector<1x1x324xf32>
    %541 = vector.shape_cast %540 : vector<1x1x324xf32> to vector<1x324xf32>
    %542 = vector.broadcast %539 : vector<8x1xf32> to vector<8x324xf32>
    %543 = vector.broadcast %541 : vector<1x324xf32> to vector<8x324xf32>
    %544 = arith.mulf %542, %543 : vector<8x324xf32>
    %545 = arith.addf %537, %544 : vector<8x324xf32>
    %c8_395 = arith.constant 8 : index
    %c0_396 = arith.constant 0 : index
    %c4_397 = arith.constant 4 : index
    %546 = vector.load %arg2[%c8_395, %c0_396, %c4_397] : memref<9x8x8xf32, #tpu.memory_space<vmem>>, vector<1x8x1xf32>
    %547 = vector.shape_cast %546 : vector<1x8x1xf32> to vector<8x1xf32>
    %c0_398 = arith.constant 0 : index
    %c4_399 = arith.constant 4 : index
    %c38_400 = arith.constant 38 : index
    %548 = vector.load %arg1[%c0_398, %c4_399, %c38_400] : memref<1x8x362xf32, #tpu.memory_space<vmem>>, vector<1x1x324xf32>
    %549 = vector.shape_cast %548 : vector<1x1x324xf32> to vector<1x324xf32>
    %550 = vector.broadcast %547 : vector<8x1xf32> to vector<8x324xf32>
    %551 = vector.broadcast %549 : vector<1x324xf32> to vector<8x324xf32>
    %552 = arith.mulf %550, %551 : vector<8x324xf32>
    %553 = arith.addf %545, %552 : vector<8x324xf32>
    %c8_401 = arith.constant 8 : index
    %c0_402 = arith.constant 0 : index
    %c5_403 = arith.constant 5 : index
    %554 = vector.load %arg2[%c8_401, %c0_402, %c5_403] : memref<9x8x8xf32, #tpu.memory_space<vmem>>, vector<1x8x1xf32>
    %555 = vector.shape_cast %554 : vector<1x8x1xf32> to vector<8x1xf32>
    %c0_404 = arith.constant 0 : index
    %c5_405 = arith.constant 5 : index
    %c38_406 = arith.constant 38 : index
    %556 = vector.load %arg1[%c0_404, %c5_405, %c38_406] : memref<1x8x362xf32, #tpu.memory_space<vmem>>, vector<1x1x324xf32>
    %557 = vector.shape_cast %556 : vector<1x1x324xf32> to vector<1x324xf32>
    %558 = vector.broadcast %555 : vector<8x1xf32> to vector<8x324xf32>
    %559 = vector.broadcast %557 : vector<1x324xf32> to vector<8x324xf32>
    %560 = arith.mulf %558, %559 : vector<8x324xf32>
    %561 = arith.addf %553, %560 : vector<8x324xf32>
    %c8_407 = arith.constant 8 : index
    %c0_408 = arith.constant 0 : index
    %c6_409 = arith.constant 6 : index
    %562 = vector.load %arg2[%c8_407, %c0_408, %c6_409] : memref<9x8x8xf32, #tpu.memory_space<vmem>>, vector<1x8x1xf32>
    %563 = vector.shape_cast %562 : vector<1x8x1xf32> to vector<8x1xf32>
    %c0_410 = arith.constant 0 : index
    %c6_411 = arith.constant 6 : index
    %c38_412 = arith.constant 38 : index
    %564 = vector.load %arg1[%c0_410, %c6_411, %c38_412] : memref<1x8x362xf32, #tpu.memory_space<vmem>>, vector<1x1x324xf32>
    %565 = vector.shape_cast %564 : vector<1x1x324xf32> to vector<1x324xf32>
    %566 = vector.broadcast %563 : vector<8x1xf32> to vector<8x324xf32>
    %567 = vector.broadcast %565 : vector<1x324xf32> to vector<8x324xf32>
    %568 = arith.mulf %566, %567 : vector<8x324xf32>
    %569 = arith.addf %561, %568 : vector<8x324xf32>
    %c8_413 = arith.constant 8 : index
    %c0_414 = arith.constant 0 : index
    %c7_415 = arith.constant 7 : index
    %570 = vector.load %arg2[%c8_413, %c0_414, %c7_415] : memref<9x8x8xf32, #tpu.memory_space<vmem>>, vector<1x8x1xf32>
    %571 = vector.shape_cast %570 : vector<1x8x1xf32> to vector<8x1xf32>
    %c0_416 = arith.constant 0 : index
    %c7_417 = arith.constant 7 : index
    %c38_418 = arith.constant 38 : index
    %572 = vector.load %arg1[%c0_416, %c7_417, %c38_418] : memref<1x8x362xf32, #tpu.memory_space<vmem>>, vector<1x1x324xf32>
    %573 = vector.shape_cast %572 : vector<1x1x324xf32> to vector<1x324xf32>
    %574 = vector.broadcast %571 : vector<8x1xf32> to vector<8x324xf32>
    %575 = vector.broadcast %573 : vector<1x324xf32> to vector<8x324xf32>
    %576 = arith.mulf %574, %575 : vector<8x324xf32>
    %577 = arith.addf %569, %576 : vector<8x324xf32>
    %c0_419 = arith.constant 0 : index
    %c0_420 = arith.constant 0 : index
    %578 = vector.load %arg3[%c0_419, %c0_420] : memref<8x1xf32, #tpu.memory_space<vmem>>, vector<8x1xf32>
    %579 = vector.broadcast %578 : vector<8x1xf32> to vector<8x324xf32>
    %580 = arith.addf %577, %579 : vector<8x324xf32>
    %cst_421 = arith.constant 0.000000e+00 : f32
    %581 = vector.broadcast %cst_421 : f32 to vector<8x324xf32>
    %582 = arith.maximumf %580, %581 : vector<8x324xf32>
    %583 = vector.broadcast %0 : vector<1x324xf32> to vector<8x324xf32>
    %584 = arith.mulf %582, %583 : vector<8x324xf32>
    %cst_422 = arith.constant 0.000000e+00 : f32
    %585 = vector.broadcast %cst_422 : f32 to vector<8x362xf32>
    %c0_423 = arith.constant 0 : index
    %c0_424 = arith.constant 0 : index
    %586 = vector.load %arg8[%c0_423, %c0_424] : memref<8x362xf32, #tpu.memory_space<vmem>>, vector<8x362xf32>
    tpu.vector_store %arg8[%c0_423, %c0_424], %585 {strides = array<i32>} : memref<8x362xf32, #tpu.memory_space<vmem>>, vector<8x362xf32>,
    %c0_425 = arith.constant 0 : index
    %c19_426 = arith.constant 19 : index
    %587 = vector.load %arg8[%c0_425, %c19_426] : memref<8x362xf32, #tpu.memory_space<vmem>>, vector<8x324xf32>
    tpu.vector_store %arg8[%c0_425, %c19_426], %584 {strides = array<i32>} : memref<8x362xf32, #tpu.memory_space<vmem>>, vector<8x324xf32>,
    %cst_427 = arith.constant 0.000000e+00 : f32
    %588 = vector.broadcast %cst_427 : f32 to vector<4x324xf32>
    %c0_428 = arith.constant 0 : index
    %c0_429 = arith.constant 0 : index
    %c0_430 = arith.constant 0 : index
    %589 = vector.load %arg4[%c0_428, %c0_429, %c0_430] : memref<9x4x8xf32, #tpu.memory_space<vmem>>, vector<1x4x1xf32>
    %590 = vector.shape_cast %589 : vector<1x4x1xf32> to vector<4x1xf32>
    %c0_431 = arith.constant 0 : index
    %c0_432 = arith.constant 0 : index
    %591 = vector.load %arg8[%c0_431, %c0_432] : memref<8x362xf32, #tpu.memory_space<vmem>>, vector<1x324xf32>
    %592 = vector.broadcast %590 : vector<4x1xf32> to vector<4x324xf32>
    %593 = vector.broadcast %591 : vector<1x324xf32> to vector<4x324xf32>
    %594 = arith.mulf %592, %593 : vector<4x324xf32>
    %595 = arith.addf %588, %594 : vector<4x324xf32>
    %c0_433 = arith.constant 0 : index
    %c0_434 = arith.constant 0 : index
    %c1_435 = arith.constant 1 : index
    %596 = vector.load %arg4[%c0_433, %c0_434, %c1_435] : memref<9x4x8xf32, #tpu.memory_space<vmem>>, vector<1x4x1xf32>
    %597 = vector.shape_cast %596 : vector<1x4x1xf32> to vector<4x1xf32>
    %c1_436 = arith.constant 1 : index
    %c0_437 = arith.constant 0 : index
    %598 = vector.load %arg8[%c1_436, %c0_437] : memref<8x362xf32, #tpu.memory_space<vmem>>, vector<1x324xf32>
    %599 = vector.broadcast %597 : vector<4x1xf32> to vector<4x324xf32>
    %600 = vector.broadcast %598 : vector<1x324xf32> to vector<4x324xf32>
    %601 = arith.mulf %599, %600 : vector<4x324xf32>
    %602 = arith.addf %595, %601 : vector<4x324xf32>
    %c0_438 = arith.constant 0 : index
    %c0_439 = arith.constant 0 : index
    %c2_440 = arith.constant 2 : index
    %603 = vector.load %arg4[%c0_438, %c0_439, %c2_440] : memref<9x4x8xf32, #tpu.memory_space<vmem>>, vector<1x4x1xf32>
    %604 = vector.shape_cast %603 : vector<1x4x1xf32> to vector<4x1xf32>
    %c2_441 = arith.constant 2 : index
    %c0_442 = arith.constant 0 : index
    %605 = vector.load %arg8[%c2_441, %c0_442] : memref<8x362xf32, #tpu.memory_space<vmem>>, vector<1x324xf32>
    %606 = vector.broadcast %604 : vector<4x1xf32> to vector<4x324xf32>
    %607 = vector.broadcast %605 : vector<1x324xf32> to vector<4x324xf32>
    %608 = arith.mulf %606, %607 : vector<4x324xf32>
    %609 = arith.addf %602, %608 : vector<4x324xf32>
    %c0_443 = arith.constant 0 : index
    %c0_444 = arith.constant 0 : index
    %c3_445 = arith.constant 3 : index
    %610 = vector.load %arg4[%c0_443, %c0_444, %c3_445] : memref<9x4x8xf32, #tpu.memory_space<vmem>>, vector<1x4x1xf32>
    %611 = vector.shape_cast %610 : vector<1x4x1xf32> to vector<4x1xf32>
    %c3_446 = arith.constant 3 : index
    %c0_447 = arith.constant 0 : index
    %612 = vector.load %arg8[%c3_446, %c0_447] : memref<8x362xf32, #tpu.memory_space<vmem>>, vector<1x324xf32>
    %613 = vector.broadcast %611 : vector<4x1xf32> to vector<4x324xf32>
    %614 = vector.broadcast %612 : vector<1x324xf32> to vector<4x324xf32>
    %615 = arith.mulf %613, %614 : vector<4x324xf32>
    %616 = arith.addf %609, %615 : vector<4x324xf32>
    %c0_448 = arith.constant 0 : index
    %c0_449 = arith.constant 0 : index
    %c4_450 = arith.constant 4 : index
    %617 = vector.load %arg4[%c0_448, %c0_449, %c4_450] : memref<9x4x8xf32, #tpu.memory_space<vmem>>, vector<1x4x1xf32>
    %618 = vector.shape_cast %617 : vector<1x4x1xf32> to vector<4x1xf32>
    %c4_451 = arith.constant 4 : index
    %c0_452 = arith.constant 0 : index
    %619 = vector.load %arg8[%c4_451, %c0_452] : memref<8x362xf32, #tpu.memory_space<vmem>>, vector<1x324xf32>
    %620 = vector.broadcast %618 : vector<4x1xf32> to vector<4x324xf32>
    %621 = vector.broadcast %619 : vector<1x324xf32> to vector<4x324xf32>
    %622 = arith.mulf %620, %621 : vector<4x324xf32>
    %623 = arith.addf %616, %622 : vector<4x324xf32>
    %c0_453 = arith.constant 0 : index
    %c0_454 = arith.constant 0 : index
    %c5_455 = arith.constant 5 : index
    %624 = vector.load %arg4[%c0_453, %c0_454, %c5_455] : memref<9x4x8xf32, #tpu.memory_space<vmem>>, vector<1x4x1xf32>
    %625 = vector.shape_cast %624 : vector<1x4x1xf32> to vector<4x1xf32>
    %c5_456 = arith.constant 5 : index
    %c0_457 = arith.constant 0 : index
    %626 = vector.load %arg8[%c5_456, %c0_457] : memref<8x362xf32, #tpu.memory_space<vmem>>, vector<1x324xf32>
    %627 = vector.broadcast %625 : vector<4x1xf32> to vector<4x324xf32>
    %628 = vector.broadcast %626 : vector<1x324xf32> to vector<4x324xf32>
    %629 = arith.mulf %627, %628 : vector<4x324xf32>
    %630 = arith.addf %623, %629 : vector<4x324xf32>
    %c0_458 = arith.constant 0 : index
    %c0_459 = arith.constant 0 : index
    %c6_460 = arith.constant 6 : index
    %631 = vector.load %arg4[%c0_458, %c0_459, %c6_460] : memref<9x4x8xf32, #tpu.memory_space<vmem>>, vector<1x4x1xf32>
    %632 = vector.shape_cast %631 : vector<1x4x1xf32> to vector<4x1xf32>
    %c6_461 = arith.constant 6 : index
    %c0_462 = arith.constant 0 : index
    %633 = vector.load %arg8[%c6_461, %c0_462] : memref<8x362xf32, #tpu.memory_space<vmem>>, vector<1x324xf32>
    %634 = vector.broadcast %632 : vector<4x1xf32> to vector<4x324xf32>
    %635 = vector.broadcast %633 : vector<1x324xf32> to vector<4x324xf32>
    %636 = arith.mulf %634, %635 : vector<4x324xf32>
    %637 = arith.addf %630, %636 : vector<4x324xf32>
    %c0_463 = arith.constant 0 : index
    %c0_464 = arith.constant 0 : index
    %c7_465 = arith.constant 7 : index
    %638 = vector.load %arg4[%c0_463, %c0_464, %c7_465] : memref<9x4x8xf32, #tpu.memory_space<vmem>>, vector<1x4x1xf32>
    %639 = vector.shape_cast %638 : vector<1x4x1xf32> to vector<4x1xf32>
    %c7_466 = arith.constant 7 : index
    %c0_467 = arith.constant 0 : index
    %640 = vector.load %arg8[%c7_466, %c0_467] : memref<8x362xf32, #tpu.memory_space<vmem>>, vector<1x324xf32>
    %641 = vector.broadcast %639 : vector<4x1xf32> to vector<4x324xf32>
    %642 = vector.broadcast %640 : vector<1x324xf32> to vector<4x324xf32>
    %643 = arith.mulf %641, %642 : vector<4x324xf32>
    %644 = arith.addf %637, %643 : vector<4x324xf32>
    %c1_468 = arith.constant 1 : index
    %c0_469 = arith.constant 0 : index
    %c0_470 = arith.constant 0 : index
    %645 = vector.load %arg4[%c1_468, %c0_469, %c0_470] : memref<9x4x8xf32, #tpu.memory_space<vmem>>, vector<1x4x1xf32>
    %646 = vector.shape_cast %645 : vector<1x4x1xf32> to vector<4x1xf32>
    %c0_471 = arith.constant 0 : index
    %c1_472 = arith.constant 1 : index
    %647 = vector.load %arg8[%c0_471, %c1_472] : memref<8x362xf32, #tpu.memory_space<vmem>>, vector<1x324xf32>
    %648 = vector.broadcast %646 : vector<4x1xf32> to vector<4x324xf32>
    %649 = vector.broadcast %647 : vector<1x324xf32> to vector<4x324xf32>
    %650 = arith.mulf %648, %649 : vector<4x324xf32>
    %651 = arith.addf %644, %650 : vector<4x324xf32>
    %c1_473 = arith.constant 1 : index
    %c0_474 = arith.constant 0 : index
    %c1_475 = arith.constant 1 : index
    %652 = vector.load %arg4[%c1_473, %c0_474, %c1_475] : memref<9x4x8xf32, #tpu.memory_space<vmem>>, vector<1x4x1xf32>
    %653 = vector.shape_cast %652 : vector<1x4x1xf32> to vector<4x1xf32>
    %c1_476 = arith.constant 1 : index
    %c1_477 = arith.constant 1 : index
    %654 = vector.load %arg8[%c1_476, %c1_477] : memref<8x362xf32, #tpu.memory_space<vmem>>, vector<1x324xf32>
    %655 = vector.broadcast %653 : vector<4x1xf32> to vector<4x324xf32>
    %656 = vector.broadcast %654 : vector<1x324xf32> to vector<4x324xf32>
    %657 = arith.mulf %655, %656 : vector<4x324xf32>
    %658 = arith.addf %651, %657 : vector<4x324xf32>
    %c1_478 = arith.constant 1 : index
    %c0_479 = arith.constant 0 : index
    %c2_480 = arith.constant 2 : index
    %659 = vector.load %arg4[%c1_478, %c0_479, %c2_480] : memref<9x4x8xf32, #tpu.memory_space<vmem>>, vector<1x4x1xf32>
    %660 = vector.shape_cast %659 : vector<1x4x1xf32> to vector<4x1xf32>
    %c2_481 = arith.constant 2 : index
    %c1_482 = arith.constant 1 : index
    %661 = vector.load %arg8[%c2_481, %c1_482] : memref<8x362xf32, #tpu.memory_space<vmem>>, vector<1x324xf32>
    %662 = vector.broadcast %660 : vector<4x1xf32> to vector<4x324xf32>
    %663 = vector.broadcast %661 : vector<1x324xf32> to vector<4x324xf32>
    %664 = arith.mulf %662, %663 : vector<4x324xf32>
    %665 = arith.addf %658, %664 : vector<4x324xf32>
    %c1_483 = arith.constant 1 : index
    %c0_484 = arith.constant 0 : index
    %c3_485 = arith.constant 3 : index
    %666 = vector.load %arg4[%c1_483, %c0_484, %c3_485] : memref<9x4x8xf32, #tpu.memory_space<vmem>>, vector<1x4x1xf32>
    %667 = vector.shape_cast %666 : vector<1x4x1xf32> to vector<4x1xf32>
    %c3_486 = arith.constant 3 : index
    %c1_487 = arith.constant 1 : index
    %668 = vector.load %arg8[%c3_486, %c1_487] : memref<8x362xf32, #tpu.memory_space<vmem>>, vector<1x324xf32>
    %669 = vector.broadcast %667 : vector<4x1xf32> to vector<4x324xf32>
    %670 = vector.broadcast %668 : vector<1x324xf32> to vector<4x324xf32>
    %671 = arith.mulf %669, %670 : vector<4x324xf32>
    %672 = arith.addf %665, %671 : vector<4x324xf32>
    %c1_488 = arith.constant 1 : index
    %c0_489 = arith.constant 0 : index
    %c4_490 = arith.constant 4 : index
    %673 = vector.load %arg4[%c1_488, %c0_489, %c4_490] : memref<9x4x8xf32, #tpu.memory_space<vmem>>, vector<1x4x1xf32>
    %674 = vector.shape_cast %673 : vector<1x4x1xf32> to vector<4x1xf32>
    %c4_491 = arith.constant 4 : index
    %c1_492 = arith.constant 1 : index
    %675 = vector.load %arg8[%c4_491, %c1_492] : memref<8x362xf32, #tpu.memory_space<vmem>>, vector<1x324xf32>
    %676 = vector.broadcast %674 : vector<4x1xf32> to vector<4x324xf32>
    %677 = vector.broadcast %675 : vector<1x324xf32> to vector<4x324xf32>
    %678 = arith.mulf %676, %677 : vector<4x324xf32>
    %679 = arith.addf %672, %678 : vector<4x324xf32>
    %c1_493 = arith.constant 1 : index
    %c0_494 = arith.constant 0 : index
    %c5_495 = arith.constant 5 : index
    %680 = vector.load %arg4[%c1_493, %c0_494, %c5_495] : memref<9x4x8xf32, #tpu.memory_space<vmem>>, vector<1x4x1xf32>
    %681 = vector.shape_cast %680 : vector<1x4x1xf32> to vector<4x1xf32>
    %c5_496 = arith.constant 5 : index
    %c1_497 = arith.constant 1 : index
    %682 = vector.load %arg8[%c5_496, %c1_497] : memref<8x362xf32, #tpu.memory_space<vmem>>, vector<1x324xf32>
    %683 = vector.broadcast %681 : vector<4x1xf32> to vector<4x324xf32>
    %684 = vector.broadcast %682 : vector<1x324xf32> to vector<4x324xf32>
    %685 = arith.mulf %683, %684 : vector<4x324xf32>
    %686 = arith.addf %679, %685 : vector<4x324xf32>
    %c1_498 = arith.constant 1 : index
    %c0_499 = arith.constant 0 : index
    %c6_500 = arith.constant 6 : index
    %687 = vector.load %arg4[%c1_498, %c0_499, %c6_500] : memref<9x4x8xf32, #tpu.memory_space<vmem>>, vector<1x4x1xf32>
    %688 = vector.shape_cast %687 : vector<1x4x1xf32> to vector<4x1xf32>
    %c6_501 = arith.constant 6 : index
    %c1_502 = arith.constant 1 : index
    %689 = vector.load %arg8[%c6_501, %c1_502] : memref<8x362xf32, #tpu.memory_space<vmem>>, vector<1x324xf32>
    %690 = vector.broadcast %688 : vector<4x1xf32> to vector<4x324xf32>
    %691 = vector.broadcast %689 : vector<1x324xf32> to vector<4x324xf32>
    %692 = arith.mulf %690, %691 : vector<4x324xf32>
    %693 = arith.addf %686, %692 : vector<4x324xf32>
    %c1_503 = arith.constant 1 : index
    %c0_504 = arith.constant 0 : index
    %c7_505 = arith.constant 7 : index
    %694 = vector.load %arg4[%c1_503, %c0_504, %c7_505] : memref<9x4x8xf32, #tpu.memory_space<vmem>>, vector<1x4x1xf32>
    %695 = vector.shape_cast %694 : vector<1x4x1xf32> to vector<4x1xf32>
    %c7_506 = arith.constant 7 : index
    %c1_507 = arith.constant 1 : index
    %696 = vector.load %arg8[%c7_506, %c1_507] : memref<8x362xf32, #tpu.memory_space<vmem>>, vector<1x324xf32>
    %697 = vector.broadcast %695 : vector<4x1xf32> to vector<4x324xf32>
    %698 = vector.broadcast %696 : vector<1x324xf32> to vector<4x324xf32>
    %699 = arith.mulf %697, %698 : vector<4x324xf32>
    %700 = arith.addf %693, %699 : vector<4x324xf32>
    %c2_508 = arith.constant 2 : index
    %c0_509 = arith.constant 0 : index
    %c0_510 = arith.constant 0 : index
    %701 = vector.load %arg4[%c2_508, %c0_509, %c0_510] : memref<9x4x8xf32, #tpu.memory_space<vmem>>, vector<1x4x1xf32>
    %702 = vector.shape_cast %701 : vector<1x4x1xf32> to vector<4x1xf32>
    %c0_511 = arith.constant 0 : index
    %c2_512 = arith.constant 2 : index
    %703 = vector.load %arg8[%c0_511, %c2_512] : memref<8x362xf32, #tpu.memory_space<vmem>>, vector<1x324xf32>
    %704 = vector.broadcast %702 : vector<4x1xf32> to vector<4x324xf32>
    %705 = vector.broadcast %703 : vector<1x324xf32> to vector<4x324xf32>
    %706 = arith.mulf %704, %705 : vector<4x324xf32>
    %707 = arith.addf %700, %706 : vector<4x324xf32>
    %c2_513 = arith.constant 2 : index
    %c0_514 = arith.constant 0 : index
    %c1_515 = arith.constant 1 : index
    %708 = vector.load %arg4[%c2_513, %c0_514, %c1_515] : memref<9x4x8xf32, #tpu.memory_space<vmem>>, vector<1x4x1xf32>
    %709 = vector.shape_cast %708 : vector<1x4x1xf32> to vector<4x1xf32>
    %c1_516 = arith.constant 1 : index
    %c2_517 = arith.constant 2 : index
    %710 = vector.load %arg8[%c1_516, %c2_517] : memref<8x362xf32, #tpu.memory_space<vmem>>, vector<1x324xf32>
    %711 = vector.broadcast %709 : vector<4x1xf32> to vector<4x324xf32>
    %712 = vector.broadcast %710 : vector<1x324xf32> to vector<4x324xf32>
    %713 = arith.mulf %711, %712 : vector<4x324xf32>
    %714 = arith.addf %707, %713 : vector<4x324xf32>
    %c2_518 = arith.constant 2 : index
    %c0_519 = arith.constant 0 : index
    %c2_520 = arith.constant 2 : index
    %715 = vector.load %arg4[%c2_518, %c0_519, %c2_520] : memref<9x4x8xf32, #tpu.memory_space<vmem>>, vector<1x4x1xf32>
    %716 = vector.shape_cast %715 : vector<1x4x1xf32> to vector<4x1xf32>
    %c2_521 = arith.constant 2 : index
    %c2_522 = arith.constant 2 : index
    %717 = vector.load %arg8[%c2_521, %c2_522] : memref<8x362xf32, #tpu.memory_space<vmem>>, vector<1x324xf32>
    %718 = vector.broadcast %716 : vector<4x1xf32> to vector<4x324xf32>
    %719 = vector.broadcast %717 : vector<1x324xf32> to vector<4x324xf32>
    %720 = arith.mulf %718, %719 : vector<4x324xf32>
    %721 = arith.addf %714, %720 : vector<4x324xf32>
    %c2_523 = arith.constant 2 : index
    %c0_524 = arith.constant 0 : index
    %c3_525 = arith.constant 3 : index
    %722 = vector.load %arg4[%c2_523, %c0_524, %c3_525] : memref<9x4x8xf32, #tpu.memory_space<vmem>>, vector<1x4x1xf32>
    %723 = vector.shape_cast %722 : vector<1x4x1xf32> to vector<4x1xf32>
    %c3_526 = arith.constant 3 : index
    %c2_527 = arith.constant 2 : index
    %724 = vector.load %arg8[%c3_526, %c2_527] : memref<8x362xf32, #tpu.memory_space<vmem>>, vector<1x324xf32>
    %725 = vector.broadcast %723 : vector<4x1xf32> to vector<4x324xf32>
    %726 = vector.broadcast %724 : vector<1x324xf32> to vector<4x324xf32>
    %727 = arith.mulf %725, %726 : vector<4x324xf32>
    %728 = arith.addf %721, %727 : vector<4x324xf32>
    %c2_528 = arith.constant 2 : index
    %c0_529 = arith.constant 0 : index
    %c4_530 = arith.constant 4 : index
    %729 = vector.load %arg4[%c2_528, %c0_529, %c4_530] : memref<9x4x8xf32, #tpu.memory_space<vmem>>, vector<1x4x1xf32>
    %730 = vector.shape_cast %729 : vector<1x4x1xf32> to vector<4x1xf32>
    %c4_531 = arith.constant 4 : index
    %c2_532 = arith.constant 2 : index
    %731 = vector.load %arg8[%c4_531, %c2_532] : memref<8x362xf32, #tpu.memory_space<vmem>>, vector<1x324xf32>
    %732 = vector.broadcast %730 : vector<4x1xf32> to vector<4x324xf32>
    %733 = vector.broadcast %731 : vector<1x324xf32> to vector<4x324xf32>
    %734 = arith.mulf %732, %733 : vector<4x324xf32>
    %735 = arith.addf %728, %734 : vector<4x324xf32>
    %c2_533 = arith.constant 2 : index
    %c0_534 = arith.constant 0 : index
    %c5_535 = arith.constant 5 : index
    %736 = vector.load %arg4[%c2_533, %c0_534, %c5_535] : memref<9x4x8xf32, #tpu.memory_space<vmem>>, vector<1x4x1xf32>
    %737 = vector.shape_cast %736 : vector<1x4x1xf32> to vector<4x1xf32>
    %c5_536 = arith.constant 5 : index
    %c2_537 = arith.constant 2 : index
    %738 = vector.load %arg8[%c5_536, %c2_537] : memref<8x362xf32, #tpu.memory_space<vmem>>, vector<1x324xf32>
    %739 = vector.broadcast %737 : vector<4x1xf32> to vector<4x324xf32>
    %740 = vector.broadcast %738 : vector<1x324xf32> to vector<4x324xf32>
    %741 = arith.mulf %739, %740 : vector<4x324xf32>
    %742 = arith.addf %735, %741 : vector<4x324xf32>
    %c2_538 = arith.constant 2 : index
    %c0_539 = arith.constant 0 : index
    %c6_540 = arith.constant 6 : index
    %743 = vector.load %arg4[%c2_538, %c0_539, %c6_540] : memref<9x4x8xf32, #tpu.memory_space<vmem>>, vector<1x4x1xf32>
    %744 = vector.shape_cast %743 : vector<1x4x1xf32> to vector<4x1xf32>
    %c6_541 = arith.constant 6 : index
    %c2_542 = arith.constant 2 : index
    %745 = vector.load %arg8[%c6_541, %c2_542] : memref<8x362xf32, #tpu.memory_space<vmem>>, vector<1x324xf32>
    %746 = vector.broadcast %744 : vector<4x1xf32> to vector<4x324xf32>
    %747 = vector.broadcast %745 : vector<1x324xf32> to vector<4x324xf32>
    %748 = arith.mulf %746, %747 : vector<4x324xf32>
    %749 = arith.addf %742, %748 : vector<4x324xf32>
    %c2_543 = arith.constant 2 : index
    %c0_544 = arith.constant 0 : index
    %c7_545 = arith.constant 7 : index
    %750 = vector.load %arg4[%c2_543, %c0_544, %c7_545] : memref<9x4x8xf32, #tpu.memory_space<vmem>>, vector<1x4x1xf32>
    %751 = vector.shape_cast %750 : vector<1x4x1xf32> to vector<4x1xf32>
    %c7_546 = arith.constant 7 : index
    %c2_547 = arith.constant 2 : index
    %752 = vector.load %arg8[%c7_546, %c2_547] : memref<8x362xf32, #tpu.memory_space<vmem>>, vector<1x324xf32>
    %753 = vector.broadcast %751 : vector<4x1xf32> to vector<4x324xf32>
    %754 = vector.broadcast %752 : vector<1x324xf32> to vector<4x324xf32>
    %755 = arith.mulf %753, %754 : vector<4x324xf32>
    %756 = arith.addf %749, %755 : vector<4x324xf32>
    %c3_548 = arith.constant 3 : index
    %c0_549 = arith.constant 0 : index
    %c0_550 = arith.constant 0 : index
    %757 = vector.load %arg4[%c3_548, %c0_549, %c0_550] : memref<9x4x8xf32, #tpu.memory_space<vmem>>, vector<1x4x1xf32>
    %758 = vector.shape_cast %757 : vector<1x4x1xf32> to vector<4x1xf32>
    %c0_551 = arith.constant 0 : index
    %c18_552 = arith.constant 18 : index
    %759 = vector.load %arg8[%c0_551, %c18_552] : memref<8x362xf32, #tpu.memory_space<vmem>>, vector<1x324xf32>
    %760 = vector.broadcast %758 : vector<4x1xf32> to vector<4x324xf32>
    %761 = vector.broadcast %759 : vector<1x324xf32> to vector<4x324xf32>
    %762 = arith.mulf %760, %761 : vector<4x324xf32>
    %763 = arith.addf %756, %762 : vector<4x324xf32>
    %c3_553 = arith.constant 3 : index
    %c0_554 = arith.constant 0 : index
    %c1_555 = arith.constant 1 : index
    %764 = vector.load %arg4[%c3_553, %c0_554, %c1_555] : memref<9x4x8xf32, #tpu.memory_space<vmem>>, vector<1x4x1xf32>
    %765 = vector.shape_cast %764 : vector<1x4x1xf32> to vector<4x1xf32>
    %c1_556 = arith.constant 1 : index
    %c18_557 = arith.constant 18 : index
    %766 = vector.load %arg8[%c1_556, %c18_557] : memref<8x362xf32, #tpu.memory_space<vmem>>, vector<1x324xf32>
    %767 = vector.broadcast %765 : vector<4x1xf32> to vector<4x324xf32>
    %768 = vector.broadcast %766 : vector<1x324xf32> to vector<4x324xf32>
    %769 = arith.mulf %767, %768 : vector<4x324xf32>
    %770 = arith.addf %763, %769 : vector<4x324xf32>
    %c3_558 = arith.constant 3 : index
    %c0_559 = arith.constant 0 : index
    %c2_560 = arith.constant 2 : index
    %771 = vector.load %arg4[%c3_558, %c0_559, %c2_560] : memref<9x4x8xf32, #tpu.memory_space<vmem>>, vector<1x4x1xf32>
    %772 = vector.shape_cast %771 : vector<1x4x1xf32> to vector<4x1xf32>
    %c2_561 = arith.constant 2 : index
    %c18_562 = arith.constant 18 : index
    %773 = vector.load %arg8[%c2_561, %c18_562] : memref<8x362xf32, #tpu.memory_space<vmem>>, vector<1x324xf32>
    %774 = vector.broadcast %772 : vector<4x1xf32> to vector<4x324xf32>
    %775 = vector.broadcast %773 : vector<1x324xf32> to vector<4x324xf32>
    %776 = arith.mulf %774, %775 : vector<4x324xf32>
    %777 = arith.addf %770, %776 : vector<4x324xf32>
    %c3_563 = arith.constant 3 : index
    %c0_564 = arith.constant 0 : index
    %c3_565 = arith.constant 3 : index
    %778 = vector.load %arg4[%c3_563, %c0_564, %c3_565] : memref<9x4x8xf32, #tpu.memory_space<vmem>>, vector<1x4x1xf32>
    %779 = vector.shape_cast %778 : vector<1x4x1xf32> to vector<4x1xf32>
    %c3_566 = arith.constant 3 : index
    %c18_567 = arith.constant 18 : index
    %780 = vector.load %arg8[%c3_566, %c18_567] : memref<8x362xf32, #tpu.memory_space<vmem>>, vector<1x324xf32>
    %781 = vector.broadcast %779 : vector<4x1xf32> to vector<4x324xf32>
    %782 = vector.broadcast %780 : vector<1x324xf32> to vector<4x324xf32>
    %783 = arith.mulf %781, %782 : vector<4x324xf32>
    %784 = arith.addf %777, %783 : vector<4x324xf32>
    %c3_568 = arith.constant 3 : index
    %c0_569 = arith.constant 0 : index
    %c4_570 = arith.constant 4 : index
    %785 = vector.load %arg4[%c3_568, %c0_569, %c4_570] : memref<9x4x8xf32, #tpu.memory_space<vmem>>, vector<1x4x1xf32>
    %786 = vector.shape_cast %785 : vector<1x4x1xf32> to vector<4x1xf32>
    %c4_571 = arith.constant 4 : index
    %c18_572 = arith.constant 18 : index
    %787 = vector.load %arg8[%c4_571, %c18_572] : memref<8x362xf32, #tpu.memory_space<vmem>>, vector<1x324xf32>
    %788 = vector.broadcast %786 : vector<4x1xf32> to vector<4x324xf32>
    %789 = vector.broadcast %787 : vector<1x324xf32> to vector<4x324xf32>
    %790 = arith.mulf %788, %789 : vector<4x324xf32>
    %791 = arith.addf %784, %790 : vector<4x324xf32>
    %c3_573 = arith.constant 3 : index
    %c0_574 = arith.constant 0 : index
    %c5_575 = arith.constant 5 : index
    %792 = vector.load %arg4[%c3_573, %c0_574, %c5_575] : memref<9x4x8xf32, #tpu.memory_space<vmem>>, vector<1x4x1xf32>
    %793 = vector.shape_cast %792 : vector<1x4x1xf32> to vector<4x1xf32>
    %c5_576 = arith.constant 5 : index
    %c18_577 = arith.constant 18 : index
    %794 = vector.load %arg8[%c5_576, %c18_577] : memref<8x362xf32, #tpu.memory_space<vmem>>, vector<1x324xf32>
    %795 = vector.broadcast %793 : vector<4x1xf32> to vector<4x324xf32>
    %796 = vector.broadcast %794 : vector<1x324xf32> to vector<4x324xf32>
    %797 = arith.mulf %795, %796 : vector<4x324xf32>
    %798 = arith.addf %791, %797 : vector<4x324xf32>
    %c3_578 = arith.constant 3 : index
    %c0_579 = arith.constant 0 : index
    %c6_580 = arith.constant 6 : index
    %799 = vector.load %arg4[%c3_578, %c0_579, %c6_580] : memref<9x4x8xf32, #tpu.memory_space<vmem>>, vector<1x4x1xf32>
    %800 = vector.shape_cast %799 : vector<1x4x1xf32> to vector<4x1xf32>
    %c6_581 = arith.constant 6 : index
    %c18_582 = arith.constant 18 : index
    %801 = vector.load %arg8[%c6_581, %c18_582] : memref<8x362xf32, #tpu.memory_space<vmem>>, vector<1x324xf32>
    %802 = vector.broadcast %800 : vector<4x1xf32> to vector<4x324xf32>
    %803 = vector.broadcast %801 : vector<1x324xf32> to vector<4x324xf32>
    %804 = arith.mulf %802, %803 : vector<4x324xf32>
    %805 = arith.addf %798, %804 : vector<4x324xf32>
    %c3_583 = arith.constant 3 : index
    %c0_584 = arith.constant 0 : index
    %c7_585 = arith.constant 7 : index
    %806 = vector.load %arg4[%c3_583, %c0_584, %c7_585] : memref<9x4x8xf32, #tpu.memory_space<vmem>>, vector<1x4x1xf32>
    %807 = vector.shape_cast %806 : vector<1x4x1xf32> to vector<4x1xf32>
    %c7_586 = arith.constant 7 : index
    %c18_587 = arith.constant 18 : index
    %808 = vector.load %arg8[%c7_586, %c18_587] : memref<8x362xf32, #tpu.memory_space<vmem>>, vector<1x324xf32>
    %809 = vector.broadcast %807 : vector<4x1xf32> to vector<4x324xf32>
    %810 = vector.broadcast %808 : vector<1x324xf32> to vector<4x324xf32>
    %811 = arith.mulf %809, %810 : vector<4x324xf32>
    %812 = arith.addf %805, %811 : vector<4x324xf32>
    %c4_588 = arith.constant 4 : index
    %c0_589 = arith.constant 0 : index
    %c0_590 = arith.constant 0 : index
    %813 = vector.load %arg4[%c4_588, %c0_589, %c0_590] : memref<9x4x8xf32, #tpu.memory_space<vmem>>, vector<1x4x1xf32>
    %814 = vector.shape_cast %813 : vector<1x4x1xf32> to vector<4x1xf32>
    %c0_591 = arith.constant 0 : index
    %c19_592 = arith.constant 19 : index
    %815 = vector.load %arg8[%c0_591, %c19_592] : memref<8x362xf32, #tpu.memory_space<vmem>>, vector<1x324xf32>
    %816 = vector.broadcast %814 : vector<4x1xf32> to vector<4x324xf32>
    %817 = vector.broadcast %815 : vector<1x324xf32> to vector<4x324xf32>
    %818 = arith.mulf %816, %817 : vector<4x324xf32>
    %819 = arith.addf %812, %818 : vector<4x324xf32>
    %c4_593 = arith.constant 4 : index
    %c0_594 = arith.constant 0 : index
    %c1_595 = arith.constant 1 : index
    %820 = vector.load %arg4[%c4_593, %c0_594, %c1_595] : memref<9x4x8xf32, #tpu.memory_space<vmem>>, vector<1x4x1xf32>
    %821 = vector.shape_cast %820 : vector<1x4x1xf32> to vector<4x1xf32>
    %c1_596 = arith.constant 1 : index
    %c19_597 = arith.constant 19 : index
    %822 = vector.load %arg8[%c1_596, %c19_597] : memref<8x362xf32, #tpu.memory_space<vmem>>, vector<1x324xf32>
    %823 = vector.broadcast %821 : vector<4x1xf32> to vector<4x324xf32>
    %824 = vector.broadcast %822 : vector<1x324xf32> to vector<4x324xf32>
    %825 = arith.mulf %823, %824 : vector<4x324xf32>
    %826 = arith.addf %819, %825 : vector<4x324xf32>
    %c4_598 = arith.constant 4 : index
    %c0_599 = arith.constant 0 : index
    %c2_600 = arith.constant 2 : index
    %827 = vector.load %arg4[%c4_598, %c0_599, %c2_600] : memref<9x4x8xf32, #tpu.memory_space<vmem>>, vector<1x4x1xf32>
    %828 = vector.shape_cast %827 : vector<1x4x1xf32> to vector<4x1xf32>
    %c2_601 = arith.constant 2 : index
    %c19_602 = arith.constant 19 : index
    %829 = vector.load %arg8[%c2_601, %c19_602] : memref<8x362xf32, #tpu.memory_space<vmem>>, vector<1x324xf32>
    %830 = vector.broadcast %828 : vector<4x1xf32> to vector<4x324xf32>
    %831 = vector.broadcast %829 : vector<1x324xf32> to vector<4x324xf32>
    %832 = arith.mulf %830, %831 : vector<4x324xf32>
    %833 = arith.addf %826, %832 : vector<4x324xf32>
    %c4_603 = arith.constant 4 : index
    %c0_604 = arith.constant 0 : index
    %c3_605 = arith.constant 3 : index
    %834 = vector.load %arg4[%c4_603, %c0_604, %c3_605] : memref<9x4x8xf32, #tpu.memory_space<vmem>>, vector<1x4x1xf32>
    %835 = vector.shape_cast %834 : vector<1x4x1xf32> to vector<4x1xf32>
    %c3_606 = arith.constant 3 : index
    %c19_607 = arith.constant 19 : index
    %836 = vector.load %arg8[%c3_606, %c19_607] : memref<8x362xf32, #tpu.memory_space<vmem>>, vector<1x324xf32>
    %837 = vector.broadcast %835 : vector<4x1xf32> to vector<4x324xf32>
    %838 = vector.broadcast %836 : vector<1x324xf32> to vector<4x324xf32>
    %839 = arith.mulf %837, %838 : vector<4x324xf32>
    %840 = arith.addf %833, %839 : vector<4x324xf32>
    %c4_608 = arith.constant 4 : index
    %c0_609 = arith.constant 0 : index
    %c4_610 = arith.constant 4 : index
    %841 = vector.load %arg4[%c4_608, %c0_609, %c4_610] : memref<9x4x8xf32, #tpu.memory_space<vmem>>, vector<1x4x1xf32>
    %842 = vector.shape_cast %841 : vector<1x4x1xf32> to vector<4x1xf32>
    %c4_611 = arith.constant 4 : index
    %c19_612 = arith.constant 19 : index
    %843 = vector.load %arg8[%c4_611, %c19_612] : memref<8x362xf32, #tpu.memory_space<vmem>>, vector<1x324xf32>
    %844 = vector.broadcast %842 : vector<4x1xf32> to vector<4x324xf32>
    %845 = vector.broadcast %843 : vector<1x324xf32> to vector<4x324xf32>
    %846 = arith.mulf %844, %845 : vector<4x324xf32>
    %847 = arith.addf %840, %846 : vector<4x324xf32>
    %c4_613 = arith.constant 4 : index
    %c0_614 = arith.constant 0 : index
    %c5_615 = arith.constant 5 : index
    %848 = vector.load %arg4[%c4_613, %c0_614, %c5_615] : memref<9x4x8xf32, #tpu.memory_space<vmem>>, vector<1x4x1xf32>
    %849 = vector.shape_cast %848 : vector<1x4x1xf32> to vector<4x1xf32>
    %c5_616 = arith.constant 5 : index
    %c19_617 = arith.constant 19 : index
    %850 = vector.load %arg8[%c5_616, %c19_617] : memref<8x362xf32, #tpu.memory_space<vmem>>, vector<1x324xf32>
    %851 = vector.broadcast %849 : vector<4x1xf32> to vector<4x324xf32>
    %852 = vector.broadcast %850 : vector<1x324xf32> to vector<4x324xf32>
    %853 = arith.mulf %851, %852 : vector<4x324xf32>
    %854 = arith.addf %847, %853 : vector<4x324xf32>
    %c4_618 = arith.constant 4 : index
    %c0_619 = arith.constant 0 : index
    %c6_620 = arith.constant 6 : index
    %855 = vector.load %arg4[%c4_618, %c0_619, %c6_620] : memref<9x4x8xf32, #tpu.memory_space<vmem>>, vector<1x4x1xf32>
    %856 = vector.shape_cast %855 : vector<1x4x1xf32> to vector<4x1xf32>
    %c6_621 = arith.constant 6 : index
    %c19_622 = arith.constant 19 : index
    %857 = vector.load %arg8[%c6_621, %c19_622] : memref<8x362xf32, #tpu.memory_space<vmem>>, vector<1x324xf32>
    %858 = vector.broadcast %856 : vector<4x1xf32> to vector<4x324xf32>
    %859 = vector.broadcast %857 : vector<1x324xf32> to vector<4x324xf32>
    %860 = arith.mulf %858, %859 : vector<4x324xf32>
    %861 = arith.addf %854, %860 : vector<4x324xf32>
    %c4_623 = arith.constant 4 : index
    %c0_624 = arith.constant 0 : index
    %c7_625 = arith.constant 7 : index
    %862 = vector.load %arg4[%c4_623, %c0_624, %c7_625] : memref<9x4x8xf32, #tpu.memory_space<vmem>>, vector<1x4x1xf32>
    %863 = vector.shape_cast %862 : vector<1x4x1xf32> to vector<4x1xf32>
    %c7_626 = arith.constant 7 : index
    %c19_627 = arith.constant 19 : index
    %864 = vector.load %arg8[%c7_626, %c19_627] : memref<8x362xf32, #tpu.memory_space<vmem>>, vector<1x324xf32>
    %865 = vector.broadcast %863 : vector<4x1xf32> to vector<4x324xf32>
    %866 = vector.broadcast %864 : vector<1x324xf32> to vector<4x324xf32>
    %867 = arith.mulf %865, %866 : vector<4x324xf32>
    %868 = arith.addf %861, %867 : vector<4x324xf32>
    %c5_628 = arith.constant 5 : index
    %c0_629 = arith.constant 0 : index
    %c0_630 = arith.constant 0 : index
    %869 = vector.load %arg4[%c5_628, %c0_629, %c0_630] : memref<9x4x8xf32, #tpu.memory_space<vmem>>, vector<1x4x1xf32>
    %870 = vector.shape_cast %869 : vector<1x4x1xf32> to vector<4x1xf32>
    %c0_631 = arith.constant 0 : index
    %c20_632 = arith.constant 20 : index
    %871 = vector.load %arg8[%c0_631, %c20_632] : memref<8x362xf32, #tpu.memory_space<vmem>>, vector<1x324xf32>
    %872 = vector.broadcast %870 : vector<4x1xf32> to vector<4x324xf32>
    %873 = vector.broadcast %871 : vector<1x324xf32> to vector<4x324xf32>
    %874 = arith.mulf %872, %873 : vector<4x324xf32>
    %875 = arith.addf %868, %874 : vector<4x324xf32>
    %c5_633 = arith.constant 5 : index
    %c0_634 = arith.constant 0 : index
    %c1_635 = arith.constant 1 : index
    %876 = vector.load %arg4[%c5_633, %c0_634, %c1_635] : memref<9x4x8xf32, #tpu.memory_space<vmem>>, vector<1x4x1xf32>
    %877 = vector.shape_cast %876 : vector<1x4x1xf32> to vector<4x1xf32>
    %c1_636 = arith.constant 1 : index
    %c20_637 = arith.constant 20 : index
    %878 = vector.load %arg8[%c1_636, %c20_637] : memref<8x362xf32, #tpu.memory_space<vmem>>, vector<1x324xf32>
    %879 = vector.broadcast %877 : vector<4x1xf32> to vector<4x324xf32>
    %880 = vector.broadcast %878 : vector<1x324xf32> to vector<4x324xf32>
    %881 = arith.mulf %879, %880 : vector<4x324xf32>
    %882 = arith.addf %875, %881 : vector<4x324xf32>
    %c5_638 = arith.constant 5 : index
    %c0_639 = arith.constant 0 : index
    %c2_640 = arith.constant 2 : index
    %883 = vector.load %arg4[%c5_638, %c0_639, %c2_640] : memref<9x4x8xf32, #tpu.memory_space<vmem>>, vector<1x4x1xf32>
    %884 = vector.shape_cast %883 : vector<1x4x1xf32> to vector<4x1xf32>
    %c2_641 = arith.constant 2 : index
    %c20_642 = arith.constant 20 : index
    %885 = vector.load %arg8[%c2_641, %c20_642] : memref<8x362xf32, #tpu.memory_space<vmem>>, vector<1x324xf32>
    %886 = vector.broadcast %884 : vector<4x1xf32> to vector<4x324xf32>
    %887 = vector.broadcast %885 : vector<1x324xf32> to vector<4x324xf32>
    %888 = arith.mulf %886, %887 : vector<4x324xf32>
    %889 = arith.addf %882, %888 : vector<4x324xf32>
    %c5_643 = arith.constant 5 : index
    %c0_644 = arith.constant 0 : index
    %c3_645 = arith.constant 3 : index
    %890 = vector.load %arg4[%c5_643, %c0_644, %c3_645] : memref<9x4x8xf32, #tpu.memory_space<vmem>>, vector<1x4x1xf32>
    %891 = vector.shape_cast %890 : vector<1x4x1xf32> to vector<4x1xf32>
    %c3_646 = arith.constant 3 : index
    %c20_647 = arith.constant 20 : index
    %892 = vector.load %arg8[%c3_646, %c20_647] : memref<8x362xf32, #tpu.memory_space<vmem>>, vector<1x324xf32>
    %893 = vector.broadcast %891 : vector<4x1xf32> to vector<4x324xf32>
    %894 = vector.broadcast %892 : vector<1x324xf32> to vector<4x324xf32>
    %895 = arith.mulf %893, %894 : vector<4x324xf32>
    %896 = arith.addf %889, %895 : vector<4x324xf32>
    %c5_648 = arith.constant 5 : index
    %c0_649 = arith.constant 0 : index
    %c4_650 = arith.constant 4 : index
    %897 = vector.load %arg4[%c5_648, %c0_649, %c4_650] : memref<9x4x8xf32, #tpu.memory_space<vmem>>, vector<1x4x1xf32>
    %898 = vector.shape_cast %897 : vector<1x4x1xf32> to vector<4x1xf32>
    %c4_651 = arith.constant 4 : index
    %c20_652 = arith.constant 20 : index
    %899 = vector.load %arg8[%c4_651, %c20_652] : memref<8x362xf32, #tpu.memory_space<vmem>>, vector<1x324xf32>
    %900 = vector.broadcast %898 : vector<4x1xf32> to vector<4x324xf32>
    %901 = vector.broadcast %899 : vector<1x324xf32> to vector<4x324xf32>
    %902 = arith.mulf %900, %901 : vector<4x324xf32>
    %903 = arith.addf %896, %902 : vector<4x324xf32>
    %c5_653 = arith.constant 5 : index
    %c0_654 = arith.constant 0 : index
    %c5_655 = arith.constant 5 : index
    %904 = vector.load %arg4[%c5_653, %c0_654, %c5_655] : memref<9x4x8xf32, #tpu.memory_space<vmem>>, vector<1x4x1xf32>
    %905 = vector.shape_cast %904 : vector<1x4x1xf32> to vector<4x1xf32>
    %c5_656 = arith.constant 5 : index
    %c20_657 = arith.constant 20 : index
    %906 = vector.load %arg8[%c5_656, %c20_657] : memref<8x362xf32, #tpu.memory_space<vmem>>, vector<1x324xf32>
    %907 = vector.broadcast %905 : vector<4x1xf32> to vector<4x324xf32>
    %908 = vector.broadcast %906 : vector<1x324xf32> to vector<4x324xf32>
    %909 = arith.mulf %907, %908 : vector<4x324xf32>
    %910 = arith.addf %903, %909 : vector<4x324xf32>
    %c5_658 = arith.constant 5 : index
    %c0_659 = arith.constant 0 : index
    %c6_660 = arith.constant 6 : index
    %911 = vector.load %arg4[%c5_658, %c0_659, %c6_660] : memref<9x4x8xf32, #tpu.memory_space<vmem>>, vector<1x4x1xf32>
    %912 = vector.shape_cast %911 : vector<1x4x1xf32> to vector<4x1xf32>
    %c6_661 = arith.constant 6 : index
    %c20_662 = arith.constant 20 : index
    %913 = vector.load %arg8[%c6_661, %c20_662] : memref<8x362xf32, #tpu.memory_space<vmem>>, vector<1x324xf32>
    %914 = vector.broadcast %912 : vector<4x1xf32> to vector<4x324xf32>
    %915 = vector.broadcast %913 : vector<1x324xf32> to vector<4x324xf32>
    %916 = arith.mulf %914, %915 : vector<4x324xf32>
    %917 = arith.addf %910, %916 : vector<4x324xf32>
    %c5_663 = arith.constant 5 : index
    %c0_664 = arith.constant 0 : index
    %c7_665 = arith.constant 7 : index
    %918 = vector.load %arg4[%c5_663, %c0_664, %c7_665] : memref<9x4x8xf32, #tpu.memory_space<vmem>>, vector<1x4x1xf32>
    %919 = vector.shape_cast %918 : vector<1x4x1xf32> to vector<4x1xf32>
    %c7_666 = arith.constant 7 : index
    %c20_667 = arith.constant 20 : index
    %920 = vector.load %arg8[%c7_666, %c20_667] : memref<8x362xf32, #tpu.memory_space<vmem>>, vector<1x324xf32>
    %921 = vector.broadcast %919 : vector<4x1xf32> to vector<4x324xf32>
    %922 = vector.broadcast %920 : vector<1x324xf32> to vector<4x324xf32>
    %923 = arith.mulf %921, %922 : vector<4x324xf32>
    %924 = arith.addf %917, %923 : vector<4x324xf32>
    %c6_668 = arith.constant 6 : index
    %c0_669 = arith.constant 0 : index
    %c0_670 = arith.constant 0 : index
    %925 = vector.load %arg4[%c6_668, %c0_669, %c0_670] : memref<9x4x8xf32, #tpu.memory_space<vmem>>, vector<1x4x1xf32>
    %926 = vector.shape_cast %925 : vector<1x4x1xf32> to vector<4x1xf32>
    %c0_671 = arith.constant 0 : index
    %c36_672 = arith.constant 36 : index
    %927 = vector.load %arg8[%c0_671, %c36_672] : memref<8x362xf32, #tpu.memory_space<vmem>>, vector<1x324xf32>
    %928 = vector.broadcast %926 : vector<4x1xf32> to vector<4x324xf32>
    %929 = vector.broadcast %927 : vector<1x324xf32> to vector<4x324xf32>
    %930 = arith.mulf %928, %929 : vector<4x324xf32>
    %931 = arith.addf %924, %930 : vector<4x324xf32>
    %c6_673 = arith.constant 6 : index
    %c0_674 = arith.constant 0 : index
    %c1_675 = arith.constant 1 : index
    %932 = vector.load %arg4[%c6_673, %c0_674, %c1_675] : memref<9x4x8xf32, #tpu.memory_space<vmem>>, vector<1x4x1xf32>
    %933 = vector.shape_cast %932 : vector<1x4x1xf32> to vector<4x1xf32>
    %c1_676 = arith.constant 1 : index
    %c36_677 = arith.constant 36 : index
    %934 = vector.load %arg8[%c1_676, %c36_677] : memref<8x362xf32, #tpu.memory_space<vmem>>, vector<1x324xf32>
    %935 = vector.broadcast %933 : vector<4x1xf32> to vector<4x324xf32>
    %936 = vector.broadcast %934 : vector<1x324xf32> to vector<4x324xf32>
    %937 = arith.mulf %935, %936 : vector<4x324xf32>
    %938 = arith.addf %931, %937 : vector<4x324xf32>
    %c6_678 = arith.constant 6 : index
    %c0_679 = arith.constant 0 : index
    %c2_680 = arith.constant 2 : index
    %939 = vector.load %arg4[%c6_678, %c0_679, %c2_680] : memref<9x4x8xf32, #tpu.memory_space<vmem>>, vector<1x4x1xf32>
    %940 = vector.shape_cast %939 : vector<1x4x1xf32> to vector<4x1xf32>
    %c2_681 = arith.constant 2 : index
    %c36_682 = arith.constant 36 : index
    %941 = vector.load %arg8[%c2_681, %c36_682] : memref<8x362xf32, #tpu.memory_space<vmem>>, vector<1x324xf32>
    %942 = vector.broadcast %940 : vector<4x1xf32> to vector<4x324xf32>
    %943 = vector.broadcast %941 : vector<1x324xf32> to vector<4x324xf32>
    %944 = arith.mulf %942, %943 : vector<4x324xf32>
    %945 = arith.addf %938, %944 : vector<4x324xf32>
    %c6_683 = arith.constant 6 : index
    %c0_684 = arith.constant 0 : index
    %c3_685 = arith.constant 3 : index
    %946 = vector.load %arg4[%c6_683, %c0_684, %c3_685] : memref<9x4x8xf32, #tpu.memory_space<vmem>>, vector<1x4x1xf32>
    %947 = vector.shape_cast %946 : vector<1x4x1xf32> to vector<4x1xf32>
    %c3_686 = arith.constant 3 : index
    %c36_687 = arith.constant 36 : index
    %948 = vector.load %arg8[%c3_686, %c36_687] : memref<8x362xf32, #tpu.memory_space<vmem>>, vector<1x324xf32>
    %949 = vector.broadcast %947 : vector<4x1xf32> to vector<4x324xf32>
    %950 = vector.broadcast %948 : vector<1x324xf32> to vector<4x324xf32>
    %951 = arith.mulf %949, %950 : vector<4x324xf32>
    %952 = arith.addf %945, %951 : vector<4x324xf32>
    %c6_688 = arith.constant 6 : index
    %c0_689 = arith.constant 0 : index
    %c4_690 = arith.constant 4 : index
    %953 = vector.load %arg4[%c6_688, %c0_689, %c4_690] : memref<9x4x8xf32, #tpu.memory_space<vmem>>, vector<1x4x1xf32>
    %954 = vector.shape_cast %953 : vector<1x4x1xf32> to vector<4x1xf32>
    %c4_691 = arith.constant 4 : index
    %c36_692 = arith.constant 36 : index
    %955 = vector.load %arg8[%c4_691, %c36_692] : memref<8x362xf32, #tpu.memory_space<vmem>>, vector<1x324xf32>
    %956 = vector.broadcast %954 : vector<4x1xf32> to vector<4x324xf32>
    %957 = vector.broadcast %955 : vector<1x324xf32> to vector<4x324xf32>
    %958 = arith.mulf %956, %957 : vector<4x324xf32>
    %959 = arith.addf %952, %958 : vector<4x324xf32>
    %c6_693 = arith.constant 6 : index
    %c0_694 = arith.constant 0 : index
    %c5_695 = arith.constant 5 : index
    %960 = vector.load %arg4[%c6_693, %c0_694, %c5_695] : memref<9x4x8xf32, #tpu.memory_space<vmem>>, vector<1x4x1xf32>
    %961 = vector.shape_cast %960 : vector<1x4x1xf32> to vector<4x1xf32>
    %c5_696 = arith.constant 5 : index
    %c36_697 = arith.constant 36 : index
    %962 = vector.load %arg8[%c5_696, %c36_697] : memref<8x362xf32, #tpu.memory_space<vmem>>, vector<1x324xf32>
    %963 = vector.broadcast %961 : vector<4x1xf32> to vector<4x324xf32>
    %964 = vector.broadcast %962 : vector<1x324xf32> to vector<4x324xf32>
    %965 = arith.mulf %963, %964 : vector<4x324xf32>
    %966 = arith.addf %959, %965 : vector<4x324xf32>
    %c6_698 = arith.constant 6 : index
    %c0_699 = arith.constant 0 : index
    %c6_700 = arith.constant 6 : index
    %967 = vector.load %arg4[%c6_698, %c0_699, %c6_700] : memref<9x4x8xf32, #tpu.memory_space<vmem>>, vector<1x4x1xf32>
    %968 = vector.shape_cast %967 : vector<1x4x1xf32> to vector<4x1xf32>
    %c6_701 = arith.constant 6 : index
    %c36_702 = arith.constant 36 : index
    %969 = vector.load %arg8[%c6_701, %c36_702] : memref<8x362xf32, #tpu.memory_space<vmem>>, vector<1x324xf32>
    %970 = vector.broadcast %968 : vector<4x1xf32> to vector<4x324xf32>
    %971 = vector.broadcast %969 : vector<1x324xf32> to vector<4x324xf32>
    %972 = arith.mulf %970, %971 : vector<4x324xf32>
    %973 = arith.addf %966, %972 : vector<4x324xf32>
    %c6_703 = arith.constant 6 : index
    %c0_704 = arith.constant 0 : index
    %c7_705 = arith.constant 7 : index
    %974 = vector.load %arg4[%c6_703, %c0_704, %c7_705] : memref<9x4x8xf32, #tpu.memory_space<vmem>>, vector<1x4x1xf32>
    %975 = vector.shape_cast %974 : vector<1x4x1xf32> to vector<4x1xf32>
    %c7_706 = arith.constant 7 : index
    %c36_707 = arith.constant 36 : index
    %976 = vector.load %arg8[%c7_706, %c36_707] : memref<8x362xf32, #tpu.memory_space<vmem>>, vector<1x324xf32>
    %977 = vector.broadcast %975 : vector<4x1xf32> to vector<4x324xf32>
    %978 = vector.broadcast %976 : vector<1x324xf32> to vector<4x324xf32>
    %979 = arith.mulf %977, %978 : vector<4x324xf32>
    %980 = arith.addf %973, %979 : vector<4x324xf32>
    %c7_708 = arith.constant 7 : index
    %c0_709 = arith.constant 0 : index
    %c0_710 = arith.constant 0 : index
    %981 = vector.load %arg4[%c7_708, %c0_709, %c0_710] : memref<9x4x8xf32, #tpu.memory_space<vmem>>, vector<1x4x1xf32>
    %982 = vector.shape_cast %981 : vector<1x4x1xf32> to vector<4x1xf32>
    %c0_711 = arith.constant 0 : index
    %c37_712 = arith.constant 37 : index
    %983 = vector.load %arg8[%c0_711, %c37_712] : memref<8x362xf32, #tpu.memory_space<vmem>>, vector<1x324xf32>
    %984 = vector.broadcast %982 : vector<4x1xf32> to vector<4x324xf32>
    %985 = vector.broadcast %983 : vector<1x324xf32> to vector<4x324xf32>
    %986 = arith.mulf %984, %985 : vector<4x324xf32>
    %987 = arith.addf %980, %986 : vector<4x324xf32>
    %c7_713 = arith.constant 7 : index
    %c0_714 = arith.constant 0 : index
    %c1_715 = arith.constant 1 : index
    %988 = vector.load %arg4[%c7_713, %c0_714, %c1_715] : memref<9x4x8xf32, #tpu.memory_space<vmem>>, vector<1x4x1xf32>
    %989 = vector.shape_cast %988 : vector<1x4x1xf32> to vector<4x1xf32>
    %c1_716 = arith.constant 1 : index
    %c37_717 = arith.constant 37 : index
    %990 = vector.load %arg8[%c1_716, %c37_717] : memref<8x362xf32, #tpu.memory_space<vmem>>, vector<1x324xf32>
    %991 = vector.broadcast %989 : vector<4x1xf32> to vector<4x324xf32>
    %992 = vector.broadcast %990 : vector<1x324xf32> to vector<4x324xf32>
    %993 = arith.mulf %991, %992 : vector<4x324xf32>
    %994 = arith.addf %987, %993 : vector<4x324xf32>
    %c7_718 = arith.constant 7 : index
    %c0_719 = arith.constant 0 : index
    %c2_720 = arith.constant 2 : index
    %995 = vector.load %arg4[%c7_718, %c0_719, %c2_720] : memref<9x4x8xf32, #tpu.memory_space<vmem>>, vector<1x4x1xf32>
    %996 = vector.shape_cast %995 : vector<1x4x1xf32> to vector<4x1xf32>
    %c2_721 = arith.constant 2 : index
    %c37_722 = arith.constant 37 : index
    %997 = vector.load %arg8[%c2_721, %c37_722] : memref<8x362xf32, #tpu.memory_space<vmem>>, vector<1x324xf32>
    %998 = vector.broadcast %996 : vector<4x1xf32> to vector<4x324xf32>
    %999 = vector.broadcast %997 : vector<1x324xf32> to vector<4x324xf32>
    %1000 = arith.mulf %998, %999 : vector<4x324xf32>
    %1001 = arith.addf %994, %1000 : vector<4x324xf32>
    %c7_723 = arith.constant 7 : index
    %c0_724 = arith.constant 0 : index
    %c3_725 = arith.constant 3 : index
    %1002 = vector.load %arg4[%c7_723, %c0_724, %c3_725] : memref<9x4x8xf32, #tpu.memory_space<vmem>>, vector<1x4x1xf32>
    %1003 = vector.shape_cast %1002 : vector<1x4x1xf32> to vector<4x1xf32>
    %c3_726 = arith.constant 3 : index
    %c37_727 = arith.constant 37 : index
    %1004 = vector.load %arg8[%c3_726, %c37_727] : memref<8x362xf32, #tpu.memory_space<vmem>>, vector<1x324xf32>
    %1005 = vector.broadcast %1003 : vector<4x1xf32> to vector<4x324xf32>
    %1006 = vector.broadcast %1004 : vector<1x324xf32> to vector<4x324xf32>
    %1007 = arith.mulf %1005, %1006 : vector<4x324xf32>
    %1008 = arith.addf %1001, %1007 : vector<4x324xf32>
    %c7_728 = arith.constant 7 : index
    %c0_729 = arith.constant 0 : index
    %c4_730 = arith.constant 4 : index
    %1009 = vector.load %arg4[%c7_728, %c0_729, %c4_730] : memref<9x4x8xf32, #tpu.memory_space<vmem>>, vector<1x4x1xf32>
    %1010 = vector.shape_cast %1009 : vector<1x4x1xf32> to vector<4x1xf32>
    %c4_731 = arith.constant 4 : index
    %c37_732 = arith.constant 37 : index
    %1011 = vector.load %arg8[%c4_731, %c37_732] : memref<8x362xf32, #tpu.memory_space<vmem>>, vector<1x324xf32>
    %1012 = vector.broadcast %1010 : vector<4x1xf32> to vector<4x324xf32>
    %1013 = vector.broadcast %1011 : vector<1x324xf32> to vector<4x324xf32>
    %1014 = arith.mulf %1012, %1013 : vector<4x324xf32>
    %1015 = arith.addf %1008, %1014 : vector<4x324xf32>
    %c7_733 = arith.constant 7 : index
    %c0_734 = arith.constant 0 : index
    %c5_735 = arith.constant 5 : index
    %1016 = vector.load %arg4[%c7_733, %c0_734, %c5_735] : memref<9x4x8xf32, #tpu.memory_space<vmem>>, vector<1x4x1xf32>
    %1017 = vector.shape_cast %1016 : vector<1x4x1xf32> to vector<4x1xf32>
    %c5_736 = arith.constant 5 : index
    %c37_737 = arith.constant 37 : index
    %1018 = vector.load %arg8[%c5_736, %c37_737] : memref<8x362xf32, #tpu.memory_space<vmem>>, vector<1x324xf32>
    %1019 = vector.broadcast %1017 : vector<4x1xf32> to vector<4x324xf32>
    %1020 = vector.broadcast %1018 : vector<1x324xf32> to vector<4x324xf32>
    %1021 = arith.mulf %1019, %1020 : vector<4x324xf32>
    %1022 = arith.addf %1015, %1021 : vector<4x324xf32>
    %c7_738 = arith.constant 7 : index
    %c0_739 = arith.constant 0 : index
    %c6_740 = arith.constant 6 : index
    %1023 = vector.load %arg4[%c7_738, %c0_739, %c6_740] : memref<9x4x8xf32, #tpu.memory_space<vmem>>, vector<1x4x1xf32>
    %1024 = vector.shape_cast %1023 : vector<1x4x1xf32> to vector<4x1xf32>
    %c6_741 = arith.constant 6 : index
    %c37_742 = arith.constant 37 : index
    %1025 = vector.load %arg8[%c6_741, %c37_742] : memref<8x362xf32, #tpu.memory_space<vmem>>, vector<1x324xf32>
    %1026 = vector.broadcast %1024 : vector<4x1xf32> to vector<4x324xf32>
    %1027 = vector.broadcast %1025 : vector<1x324xf32> to vector<4x324xf32>
    %1028 = arith.mulf %1026, %1027 : vector<4x324xf32>
    %1029 = arith.addf %1022, %1028 : vector<4x324xf32>
    %c7_743 = arith.constant 7 : index
    %c0_744 = arith.constant 0 : index
    %c7_745 = arith.constant 7 : index
    %1030 = vector.load %arg4[%c7_743, %c0_744, %c7_745] : memref<9x4x8xf32, #tpu.memory_space<vmem>>, vector<1x4x1xf32>
    %1031 = vector.shape_cast %1030 : vector<1x4x1xf32> to vector<4x1xf32>
    %c7_746 = arith.constant 7 : index
    %c37_747 = arith.constant 37 : index
    %1032 = vector.load %arg8[%c7_746, %c37_747] : memref<8x362xf32, #tpu.memory_space<vmem>>, vector<1x324xf32>
    %1033 = vector.broadcast %1031 : vector<4x1xf32> to vector<4x324xf32>
    %1034 = vector.broadcast %1032 : vector<1x324xf32> to vector<4x324xf32>
    %1035 = arith.mulf %1033, %1034 : vector<4x324xf32>
    %1036 = arith.addf %1029, %1035 : vector<4x324xf32>
    %c8_748 = arith.constant 8 : index
    %c0_749 = arith.constant 0 : index
    %c0_750 = arith.constant 0 : index
    %1037 = vector.load %arg4[%c8_748, %c0_749, %c0_750] : memref<9x4x8xf32, #tpu.memory_space<vmem>>, vector<1x4x1xf32>
    %1038 = vector.shape_cast %1037 : vector<1x4x1xf32> to vector<4x1xf32>
    %c0_751 = arith.constant 0 : index
    %c38_752 = arith.constant 38 : index
    %1039 = vector.load %arg8[%c0_751, %c38_752] : memref<8x362xf32, #tpu.memory_space<vmem>>, vector<1x324xf32>
    %1040 = vector.broadcast %1038 : vector<4x1xf32> to vector<4x324xf32>
    %1041 = vector.broadcast %1039 : vector<1x324xf32> to vector<4x324xf32>
    %1042 = arith.mulf %1040, %1041 : vector<4x324xf32>
    %1043 = arith.addf %1036, %1042 : vector<4x324xf32>
    %c8_753 = arith.constant 8 : index
    %c0_754 = arith.constant 0 : index
    %c1_755 = arith.constant 1 : index
    %1044 = vector.load %arg4[%c8_753, %c0_754, %c1_755] : memref<9x4x8xf32, #tpu.memory_space<vmem>>, vector<1x4x1xf32>
    %1045 = vector.shape_cast %1044 : vector<1x4x1xf32> to vector<4x1xf32>
    %c1_756 = arith.constant 1 : index
    %c38_757 = arith.constant 38 : index
    %1046 = vector.load %arg8[%c1_756, %c38_757] : memref<8x362xf32, #tpu.memory_space<vmem>>, vector<1x324xf32>
    %1047 = vector.broadcast %1045 : vector<4x1xf32> to vector<4x324xf32>
    %1048 = vector.broadcast %1046 : vector<1x324xf32> to vector<4x324xf32>
    %1049 = arith.mulf %1047, %1048 : vector<4x324xf32>
    %1050 = arith.addf %1043, %1049 : vector<4x324xf32>
    %c8_758 = arith.constant 8 : index
    %c0_759 = arith.constant 0 : index
    %c2_760 = arith.constant 2 : index
    %1051 = vector.load %arg4[%c8_758, %c0_759, %c2_760] : memref<9x4x8xf32, #tpu.memory_space<vmem>>, vector<1x4x1xf32>
    %1052 = vector.shape_cast %1051 : vector<1x4x1xf32> to vector<4x1xf32>
    %c2_761 = arith.constant 2 : index
    %c38_762 = arith.constant 38 : index
    %1053 = vector.load %arg8[%c2_761, %c38_762] : memref<8x362xf32, #tpu.memory_space<vmem>>, vector<1x324xf32>
    %1054 = vector.broadcast %1052 : vector<4x1xf32> to vector<4x324xf32>
    %1055 = vector.broadcast %1053 : vector<1x324xf32> to vector<4x324xf32>
    %1056 = arith.mulf %1054, %1055 : vector<4x324xf32>
    %1057 = arith.addf %1050, %1056 : vector<4x324xf32>
    %c8_763 = arith.constant 8 : index
    %c0_764 = arith.constant 0 : index
    %c3_765 = arith.constant 3 : index
    %1058 = vector.load %arg4[%c8_763, %c0_764, %c3_765] : memref<9x4x8xf32, #tpu.memory_space<vmem>>, vector<1x4x1xf32>
    %1059 = vector.shape_cast %1058 : vector<1x4x1xf32> to vector<4x1xf32>
    %c3_766 = arith.constant 3 : index
    %c38_767 = arith.constant 38 : index
    %1060 = vector.load %arg8[%c3_766, %c38_767] : memref<8x362xf32, #tpu.memory_space<vmem>>, vector<1x324xf32>
    %1061 = vector.broadcast %1059 : vector<4x1xf32> to vector<4x324xf32>
    %1062 = vector.broadcast %1060 : vector<1x324xf32> to vector<4x324xf32>
    %1063 = arith.mulf %1061, %1062 : vector<4x324xf32>
    %1064 = arith.addf %1057, %1063 : vector<4x324xf32>
    %c8_768 = arith.constant 8 : index
    %c0_769 = arith.constant 0 : index
    %c4_770 = arith.constant 4 : index
    %1065 = vector.load %arg4[%c8_768, %c0_769, %c4_770] : memref<9x4x8xf32, #tpu.memory_space<vmem>>, vector<1x4x1xf32>
    %1066 = vector.shape_cast %1065 : vector<1x4x1xf32> to vector<4x1xf32>
    %c4_771 = arith.constant 4 : index
    %c38_772 = arith.constant 38 : index
    %1067 = vector.load %arg8[%c4_771, %c38_772] : memref<8x362xf32, #tpu.memory_space<vmem>>, vector<1x324xf32>
    %1068 = vector.broadcast %1066 : vector<4x1xf32> to vector<4x324xf32>
    %1069 = vector.broadcast %1067 : vector<1x324xf32> to vector<4x324xf32>
    %1070 = arith.mulf %1068, %1069 : vector<4x324xf32>
    %1071 = arith.addf %1064, %1070 : vector<4x324xf32>
    %c8_773 = arith.constant 8 : index
    %c0_774 = arith.constant 0 : index
    %c5_775 = arith.constant 5 : index
    %1072 = vector.load %arg4[%c8_773, %c0_774, %c5_775] : memref<9x4x8xf32, #tpu.memory_space<vmem>>, vector<1x4x1xf32>
    %1073 = vector.shape_cast %1072 : vector<1x4x1xf32> to vector<4x1xf32>
    %c5_776 = arith.constant 5 : index
    %c38_777 = arith.constant 38 : index
    %1074 = vector.load %arg8[%c5_776, %c38_777] : memref<8x362xf32, #tpu.memory_space<vmem>>, vector<1x324xf32>
    %1075 = vector.broadcast %1073 : vector<4x1xf32> to vector<4x324xf32>
    %1076 = vector.broadcast %1074 : vector<1x324xf32> to vector<4x324xf32>
    %1077 = arith.mulf %1075, %1076 : vector<4x324xf32>
    %1078 = arith.addf %1071, %1077 : vector<4x324xf32>
    %c8_778 = arith.constant 8 : index
    %c0_779 = arith.constant 0 : index
    %c6_780 = arith.constant 6 : index
    %1079 = vector.load %arg4[%c8_778, %c0_779, %c6_780] : memref<9x4x8xf32, #tpu.memory_space<vmem>>, vector<1x4x1xf32>
    %1080 = vector.shape_cast %1079 : vector<1x4x1xf32> to vector<4x1xf32>
    %c6_781 = arith.constant 6 : index
    %c38_782 = arith.constant 38 : index
    %1081 = vector.load %arg8[%c6_781, %c38_782] : memref<8x362xf32, #tpu.memory_space<vmem>>, vector<1x324xf32>
    %1082 = vector.broadcast %1080 : vector<4x1xf32> to vector<4x324xf32>
    %1083 = vector.broadcast %1081 : vector<1x324xf32> to vector<4x324xf32>
    %1084 = arith.mulf %1082, %1083 : vector<4x324xf32>
    %1085 = arith.addf %1078, %1084 : vector<4x324xf32>
    %c8_783 = arith.constant 8 : index
    %c0_784 = arith.constant 0 : index
    %c7_785 = arith.constant 7 : index
    %1086 = vector.load %arg4[%c8_783, %c0_784, %c7_785] : memref<9x4x8xf32, #tpu.memory_space<vmem>>, vector<1x4x1xf32>
    %1087 = vector.shape_cast %1086 : vector<1x4x1xf32> to vector<4x1xf32>
    %c7_786 = arith.constant 7 : index
    %c38_787 = arith.constant 38 : index
    %1088 = vector.load %arg8[%c7_786, %c38_787] : memref<8x362xf32, #tpu.memory_space<vmem>>, vector<1x324xf32>
    %1089 = vector.broadcast %1087 : vector<4x1xf32> to vector<4x324xf32>
    %1090 = vector.broadcast %1088 : vector<1x324xf32> to vector<4x324xf32>
    %1091 = arith.mulf %1089, %1090 : vector<4x324xf32>
    %1092 = arith.addf %1085, %1091 : vector<4x324xf32>
    %c0_788 = arith.constant 0 : index
    %c0_789 = arith.constant 0 : index
    %1093 = vector.load %arg5[%c0_788, %c0_789] : memref<4x1xf32, #tpu.memory_space<vmem>>, vector<4x1xf32>
    %1094 = vector.broadcast %1093 : vector<4x1xf32> to vector<4x324xf32>
    %1095 = arith.addf %1092, %1094 : vector<4x324xf32>
    %1096 = vector.broadcast %0 : vector<1x324xf32> to vector<4x324xf32>
    %1097 = arith.mulf %1095, %1096 : vector<4x324xf32>
    %cst_790 = arith.constant dense<0.000000e+00> : vector<4xf32>
    %1098 = vector.multi_reduction <add>, %1097, %cst_790 [1] : vector<4x324xf32> to vector<4xf32>
    %1099 = vector.shape_cast %1098 : vector<4xf32> to vector<4x1xf32>
    %cst_791 = arith.constant dense<0.000000e+00> : vector<1xf32>
    %1100 = vector.multi_reduction <add>, %1099, %cst_791 [0] : vector<4x1xf32> to vector<1xf32>
    %1101 = vector.shape_cast %1100 : vector<1xf32> to vector<1x1xf32>
    %cst_792 = arith.constant 1.024000e+03 : f32
    %1102 = vector.broadcast %cst_792 : f32 to vector<1x1xf32>
    %1103 = arith.divf %1101, %1102 : vector<1x1xf32>
    %1104 = vector.broadcast %1103 : vector<1x1xf32> to vector<4x324xf32>
    %1105 = arith.subf %1095, %1104 : vector<4x324xf32>
    %1106 = vector.broadcast %0 : vector<1x324xf32> to vector<4x324xf32>
    %1107 = arith.mulf %1105, %1106 : vector<4x324xf32>
    %1108 = arith.mulf %1107, %1107 : vector<4x324xf32>
    %cst_793 = arith.constant dense<0.000000e+00> : vector<4xf32>
    %1109 = vector.multi_reduction <add>, %1108, %cst_793 [1] : vector<4x324xf32> to vector<4xf32>
    %1110 = vector.shape_cast %1109 : vector<4xf32> to vector<4x1xf32>
    %cst_794 = arith.constant dense<0.000000e+00> : vector<1xf32>
    %1111 = vector.multi_reduction <add>, %1110, %cst_794 [0] : vector<4x1xf32> to vector<1xf32>
    %1112 = vector.shape_cast %1111 : vector<1xf32> to vector<1x1xf32>
    %cst_795 = arith.constant 1.024000e+03 : f32
    %1113 = vector.broadcast %cst_795 : f32 to vector<1x1xf32>
    %1114 = arith.divf %1112, %1113 : vector<1x1xf32>
    %cst_796 = arith.constant 9.99999974E-6 : f32
    %1115 = vector.broadcast %cst_796 : f32 to vector<1x1xf32>
    %1116 = arith.addf %1114, %1115 : vector<1x1xf32>
    %1117 = math.rsqrt %1116 : vector<1x1xf32>
    %1118 = vector.broadcast %1103 : vector<1x1xf32> to vector<4x324xf32>
    %1119 = arith.subf %1095, %1118 : vector<4x324xf32>
    %1120 = vector.broadcast %1117 : vector<1x1xf32> to vector<4x324xf32>
    %1121 = arith.mulf %1119, %1120 : vector<4x324xf32>
    %cst_797 = arith.constant 0.000000e+00 : f32
    %1122 = vector.broadcast %cst_797 : f32 to vector<4x324xf32>
    %1123 = arith.maximumf %1121, %1122 : vector<4x324xf32>
    %c0_798 = arith.constant 0 : index
    %c0_799 = arith.constant 0 : index
    %c0_800 = arith.constant 0 : index
    %1124 = vector.load %arg7[%c0_798, %c0_799, %c0_800] : memref<1x4x324xf32, #tpu.memory_space<vmem>>, vector<1x4x324xf32>
    %1125 = vector.shape_cast %1124 : vector<1x4x324xf32> to vector<4x324xf32>
    %1126 = vector.shape_cast %1123 : vector<4x324xf32> to vector<1x4x324xf32>
    tpu.vector_store %arg7[%c0_798, %c0_799, %c0_800], %1126 {strides = array<i32>} : memref<1x4x324xf32, #tpu.memory_space<vmem>>, vector<1x4x324xf32>,
    return
  }
  func.func @transform_0(%arg0: i32) -> (i32, i32, i32) {
    %c0_i32 = arith.constant 0 : i32
    %c0_i32_0 = arith.constant 0 : i32
    %c0_i32_1 = arith.constant 0 : i32
    return %arg0, %c0_i32, %c0_i32_0 : i32, i32, i32
  }
  func.func @transform_1(%arg0: i32) -> (i32, i32, i32) {
    %c0_i32 = arith.constant 0 : i32
    %c0_i32_0 = arith.constant 0 : i32
    %c0_i32_1 = arith.constant 0 : i32
    %c0_i32_2 = arith.constant 0 : i32
    return %c0_i32, %c0_i32_0, %c0_i32_1 : i32, i32, i32
  }
  func.func @transform_2(%arg0: i32) -> (i32, i32) {
    %c0_i32 = arith.constant 0 : i32
    %c0_i32_0 = arith.constant 0 : i32
    %c0_i32_1 = arith.constant 0 : i32
    return %c0_i32, %c0_i32_0 : i32, i32
  }
  func.func @transform_3(%arg0: i32) -> (i32, i32, i32) {
    %c0_i32 = arith.constant 0 : i32
    %c0_i32_0 = arith.constant 0 : i32
    %c0_i32_1 = arith.constant 0 : i32
    %c0_i32_2 = arith.constant 0 : i32
    return %c0_i32, %c0_i32_0, %c0_i32_1 : i32, i32, i32
  }
  func.func @transform_4(%arg0: i32) -> (i32, i32) {
    %c0_i32 = arith.constant 0 : i32
    %c0_i32_0 = arith.constant 0 : i32
    %c0_i32_1 = arith.constant 0 : i32
    return %c0_i32, %c0_i32_0 : i32, i32
  }
  func.func @transform_5(%arg0: i32) -> (i32, i32) {
    %c0_i32 = arith.constant 0 : i32
    %c0_i32_0 = arith.constant 0 : i32
    %c0_i32_1 = arith.constant 0 : i32
    return %c0_i32, %c0_i32_0 : i32, i32
  }
  func.func @transform_6(%arg0: i32) -> (i32, i32, i32) {
    %c0_i32 = arith.constant 0 : i32
    %c0_i32_0 = arith.constant 0 : i32
    %c0_i32_1 = arith.constant 0 : i32
    return %arg0, %c0_i32, %c0_i32_0 : i32, i32, i32
  }
}

</mosaic_0001>

<llo_original>
// kernel: tpu_custom_call.1
$region0: #{tpu_custom_call.1}
  #allocation0 [shape = 'u32[]', space=smem, size = 0x4, offset = 0x4, fixed_abs, tag = 'smem constant byte address 0x4 - core index']
  #allocation1 [shape = 'u32[144,128]{1,0:T(1,128)}', space=vmem, size = 0x12000, scoped, tag = 'internal scratch']
  #allocation2 [shape = 'f32[8,362]{1,0:T(8,128)}', space=vmem, size = 0x3000, scoped, tag = 'scratch operand']
  %s0 = inlined_call_operand.vmem [shape: f32[2,8,362], index: 0, kind: input, shape index: {}]
  %s1 = inlined_call_operand.vmem [shape: f32[9,8,8], index: 1, kind: input, shape index: {}]
  %s2 = inlined_call_operand.vmem [shape: f32[8,1], index: 2, kind: input, shape index: {}]
  %s3 = inlined_call_operand.vmem [shape: f32[9,4,8], index: 3, kind: input, shape index: {}]
  %s4 = inlined_call_operand.vmem [shape: f32[4,1], index: 4, kind: input, shape index: {}]
  %s5 = inlined_call_operand.vmem [shape: f32[1,324], index: 5, kind: input, shape index: {}]
  %s6 = inlined_call_operand.hbm [shape: f32[2,4,324], index: 6, kind: output, shape index: {}]
  %s7 = sld [smem:[#allocation0]]
  $region57: #{tpu_custom_call.1} parent=0
    _
  %s9 = ssub.s32 1, %s7
  %s10 = scalar_select 0, %s9, %s7
  $region1: #{tpu_custom_call.1} parent=0
    #allocation3 [shape = 'u8[12288]{0}', space=vmem, size = 0x3000, scoped, tag = 'output window, operand 0']
    #allocation4 [shape = 's32[2]{0}', space=sflag, size = 0x8, scoped, tag = 'scoped memory for tpu_custom_call.1']
    %11 = vsyncpa [#allocation4], 0
    %s12 = scalar_lea.sflag [#allocation4], 1
    %13 = vsyncpa %s12, 0
    loop: start=0, step=1, limit=4
    $region2: #{tpu_custom_call.1} parent=1 // loop_pre_header
      _
    $region3: #{tpu_custom_call.1} parent=1 // loop_header
      %s15 = sphi 0, %s19
      %p16 = scmp.ge.s32.totalorder %s15, 4
      %s25 = sphi 0, %s27
      %s28 = sphi 0, %s25
      %s29 = sphi 0, %s28
      %s45 = sphi 0, %s29
      %s49 = sphi 0, %s49
      %s51 = sphi 0, %s49
      %s52 = sphi 0, %s51
      %s66 = sphi 0, %s52
      %s70 = sphi 0, %s70
      %s72 = sphi 0, %s70
      %s73 = sphi 0, %s72
      %s87 = sphi 0, %s73
      %s91 = sphi 0, %s91
      %s93 = sphi 0, %s91
      %s94 = sphi 0, %s93
      %s108 = sphi 0, %s94
      %s112 = sphi 0, %s112
      %s114 = sphi 0, %s112
      %s115 = sphi 0, %s114
      %s129 = sphi 0, %s115
      %s133 = sphi 0, %s133
      %s135 = sphi 0, %s133
      %s136 = sphi 0, %s135
      %s150 = sphi 0, %s136
      %s156 = sphi 0, %s158
      %s159 = sphi 0, %s156
      %s160 = sphi 0, %s159
      %s176 = sphi 0, %s160
    $region4: #{tpu_custom_call.1} parent=1 // loop_header_branch
      %18 = sbr.rel (%p16) target = $region8
    $region5: #{tpu_custom_call.1} parent=1 // loop_body
      %s20 = ssub.s32 %s15, 1
      %s21 = ssub.s32 %s15, 2
      %s22 = sadd.s32 %s15, 1
      %s23 = ssub.s32 %s15, %s22
      %p24 = scmp.eq.s32.totalorder %s23, 0
      %s26 = sadd.s32 %s25, 1
      %s27 = scalar_select %p24, %s25, %s26
      %p30 = pneg %p24
      %p31 = scmp.eq.s32.totalorder %s15, 1
      %p32 = por %p30, %p31
      %p33 = scmp.ne.s32.totalorder %s25, %s28
      %p34 = scmp.eq.s32.totalorder %s15, 0
      %p35 = por %p33, %p34
      %p36 = scmp.ne.s32.totalorder %s25, %s28
      %p37 = scmp.eq.s32.totalorder %s20, 1
      %p38 = por %p36, %p37
      %p39 = scmp.ne.s32.totalorder %s28, %s29
      %p40 = scmp.eq.s32.totalorder %s20, 0
      %p41 = por %p39, %p40
      %p42 = scmp.ne.s32.totalorder %s28, %s29
      %p43 = scmp.eq.s32.totalorder %s21, 1
      %p44 = por %p42, %p43
      %p46 = scmp.ne.s32.totalorder %s29, %s45
      %p47 = scmp.eq.s32.totalorder %s21, 0
      %p48 = por %p46, %p47
      %s50 = sadd.s32 %s49, 1
      %p53 = scmp.eq.s32.totalorder %s15, 1
      %p54 = scmp.ne.s32.totalorder %s49, %s51
      %p55 = scmp.eq.s32.totalorder %s15, 0
      %p56 = por %p54, %p55
      %p57 = scmp.ne.s32.totalorder %s49, %s51
      %p58 = scmp.eq.s32.totalorder %s20, 1
      %p59 = por %p57, %p58
      %p60 = scmp.ne.s32.totalorder %s51, %s52
      %p61 = scmp.eq.s32.totalorder %s20, 0
      %p62 = por %p60, %p61
      %p63 = scmp.ne.s32.totalorder %s51, %s52
      %p64 = scmp.eq.s32.totalorder %s21, 1
      %p65 = por %p63, %p64
      %p67 = scmp.ne.s32.totalorder %s52, %s66
      %p68 = scmp.eq.s32.totalorder %s21, 0
      %p69 = por %p67, %p68
      %s71 = sadd.s32 %s70, 1
      %p74 = scmp.eq.s32.totalorder %s15, 1
      %p75 = scmp.ne.s32.totalorder %s70, %s72
      %p76 = scmp.eq.s32.totalorder %s15, 0
      %p77 = por %p75, %p76
      %p78 = scmp.ne.s32.totalorder %s70, %s72
      %p79 = scmp.eq.s32.totalorder %s20, 1
      %p80 = por %p78, %p79
      %p81 = scmp.ne.s32.totalorder %s72, %s73
      %p82 = scmp.eq.s32.totalorder %s20, 0
      %p83 = por %p81, %p82
      %p84 = scmp.ne.s32.totalorder %s72, %s73
      %p85 = scmp.eq.s32.totalorder %s21, 1
      %p86 = por %p84, %p85
      %p88 = scmp.ne.s32.totalorder %s73, %s87
      %p89 = scmp.eq.s32.totalorder %s21, 0
      %p90 = por %p88, %p89
      %s92 = sadd.s32 %s91, 1
      %p95 = scmp.eq.s32.totalorder %s15, 1
      %p96 = scmp.ne.s32.totalorder %s91, %s93
      %p97 = scmp.eq.s32.totalorder %s15, 0
      %p98 = por %p96, %p97
      %p99 = scmp.ne.s32.totalorder %s91, %s93
      %p100 = scmp.eq.s32.totalorder %s20, 1
      %p101 = por %p99, %p100
      %p102 = scmp.ne.s32.totalorder %s93, %s94
      %p103 = scmp.eq.s32.totalorder %s20, 0
      %p104 = por %p102, %p103
      %p105 = scmp.ne.s32.totalorder %s93, %s94
      %p106 = scmp.eq.s32.totalorder %s21, 1
      %p107 = por %p105, %p106
      %p109 = scmp.ne.s32.totalorder %s94, %s108
      %p110 = scmp.eq.s32.totalorder %s21, 0
      %p111 = por %p109, %p110
      %s113 = sadd.s32 %s112, 1
      %p116 = scmp.eq.s32.totalorder %s15, 1
      %p117 = scmp.ne.s32.totalorder %s112, %s114
      %p118 = scmp.eq.s32.totalorder %s15, 0
      %p119 = por %p117, %p118
      %p120 = scmp.ne.s32.totalorder %s112, %s114
      %p121 = scmp.eq.s32.totalorder %s20, 1
      %p122 = por %p120, %p121
      %p123 = scmp.ne.s32.totalorder %s114, %s115
      %p124 = scmp.eq.s32.totalorder %s20, 0
      %p125 = por %p123, %p124
      %p126 = scmp.ne.s32.totalorder %s114, %s115
      %p127 = scmp.eq.s32.totalorder %s21, 1
      %p128 = por %p126, %p127
      %p130 = scmp.ne.s32.totalorder %s115, %s129
      %p131 = scmp.eq.s32.totalorder %s21, 0
      %p132 = por %p130, %p131
      %s134 = sadd.s32 %s133, 1
      %p137 = scmp.eq.s32.totalorder %s15, 1
      %p138 = scmp.ne.s32.totalorder %s133, %s135
      %p139 = scmp.eq.s32.totalorder %s15, 0
      %p140 = por %p138, %p139
      %p141 = scmp.ne.s32.totalorder %s133, %s135
      %p142 = scmp.eq.s32.totalorder %s20, 1
      %p143 = por %p141, %p142
      %p144 = scmp.ne.s32.totalorder %s135, %s136
      %p145 = scmp.eq.s32.totalorder %s20, 0
      %p146 = por %p144, %p145
      %p147 = scmp.ne.s32.totalorder %s135, %s136
      %p148 = scmp.eq.s32.totalorder %s21, 1
      %p149 = por %p147, %p148
      %p151 = scmp.ne.s32.totalorder %s136, %s150
      %p152 = scmp.eq.s32.totalorder %s21, 0
      %p153 = por %p151, %p152
      %s154 = ssub.s32 %s15, %s22
      %p155 = scmp.eq.s32.totalorder %s154, 0
      %s157 = sadd.s32 %s156, 1
      %s158 = scalar_select %p155, %s156, %s157
      %p161 = pneg %p155
      %p162 = scmp.eq.s32.totalorder %s15, 1
      %p163 = por %p161, %p162
      %p164 = scmp.ne.s32.totalorder %s156, %s159
      %p165 = scmp.eq.s32.totalorder %s15, 0
      %p166 = por %p164, %p165
      %p167 = scmp.ne.s32.totalorder %s156, %s159
      %p168 = scmp.eq.s32.totalorder %s20, 1
      %p169 = por %p167, %p168
      %p170 = scmp.ne.s32.totalorder %s159, %s160
      %p171 = scmp.eq.s32.totalorder %s20, 0
      %p172 = por %p170, %p171
      %p173 = scmp.ne.s32.totalorder %s159, %s160
      %p174 = scmp.eq.s32.totalorder %s21, 1
      %p175 = por %p173, %p174
      %p177 = scmp.ne.s32.totalorder %s160, %s176
      %p178 = scmp.eq.s32.totalorder %s21, 0
      %p179 = por %p177, %p178
      %p180 = scmp.le.s32.totalorder 1, %s15
      %p181 = scmp.lt.s32.totalorder %s15, 3
      %p182 = pnand %p180, %p181
      %p183 = pneg %p182
      // Predicated region
      $region9: #{tpu_custom_call.1} parent=5 // pred_check
        _
      $region10: #{tpu_custom_call.1} parent=5 // pred_check_branch
        %185 = sbr.rel (%p182) target = $region12
      $region11: #{tpu_custom_call.1} parent=5 // pred_region
        %s186 = ssub.s32 %s15, 1
        // Predicated region
        $region13: #{tpu_custom_call.1} parent=11 // pred_check
          %p187 = pneg %p62
        $region14: #{tpu_custom_call.1} parent=11 // pred_check_branch
          %189 = sbr.rel (%p187) target = $region16
        $region15: #{tpu_custom_call.1} parent=11 // pred_region
          _
        $region16: #{tpu_custom_call.1} parent=11 // pred_fallthru
          _
        // Predicated region
        $region17: #{tpu_custom_call.1} parent=11 // pred_check
          %p190 = pneg %p83
        $region18: #{tpu_custom_call.1} parent=11 // pred_check_branch
          %192 = sbr.rel (%p190) target = $region20
        $region19: #{tpu_custom_call.1} parent=11 // pred_region
          _
        $region20: #{tpu_custom_call.1} parent=11 // pred_fallthru
          _
        // Predicated region
        $region21: #{tpu_custom_call.1} parent=11 // pred_check
          %p193 = pneg %p104
        $region22: #{tpu_custom_call.1} parent=11 // pred_check_branch
          %195 = sbr.rel (%p193) target = $region24
        $region23: #{tpu_custom_call.1} parent=11 // pred_region
          _
        $region24: #{tpu_custom_call.1} parent=11 // pred_fallthru
          _
        // Predicated region
        $region25: #{tpu_custom_call.1} parent=11 // pred_check
          %p196 = pneg %p125
        $region26: #{tpu_custom_call.1} parent=11 // pred_check_branch
          %198 = sbr.rel (%p196) target = $region28
        $region27: #{tpu_custom_call.1} parent=11 // pred_region
          _
        $region28: #{tpu_custom_call.1} parent=11 // pred_fallthru
          _
        // Predicated region
        $region29: #{tpu_custom_call.1} parent=11 // pred_check
          %p199 = pneg %p146
        $region30: #{tpu_custom_call.1} parent=11 // pred_check_branch
          %201 = sbr.rel (%p199) target = $region32
        $region31: #{tpu_custom_call.1} parent=11 // pred_region
          _
        $region32: #{tpu_custom_call.1} parent=11 // pred_fallthru
          _
      $region12: #{tpu_custom_call.1} parent=5 // pred_fallthru
        _
      %p202 = scmp.lt.s32.totalorder %s15, 2
      // Predicated region
      $region33: #{tpu_custom_call.1} parent=5 // pred_check
        %p203 = pneg %p202
      $region34: #{tpu_custom_call.1} parent=5 // pred_check_branch
        %205 = sbr.rel (%p203) target = $region36
      $region35: #{tpu_custom_call.1} parent=5 // pred_region
        // Predicated region
        $region37: #{tpu_custom_call.1} parent=35 // pred_check
          %p206 = pneg %p35
        $region38: #{tpu_custom_call.1} parent=35 // pred_check_branch
          %208 = sbr.rel (%p206) target = $region40
        $region39: #{tpu_custom_call.1} parent=35 // pred_region
          %p209 = scmp.lt.s32.totalorder %s15, 1
          %s210 = scalar_select %p209, %s15, 1
          %s211 = smul.addr %s210, 3
          %s212 = smul.addr %s211, 8
          %s213 = scalar_lea.vmem %s0, %s212
        $region40: #{tpu_custom_call.1} parent=35 // pred_fallthru
          _
      $region36: #{tpu_custom_call.1} parent=5 // pred_fallthru
        _
      %p214 = scmp.le.s32.totalorder 1, %s15
      %p215 = scmp.lt.s32.totalorder %s15, 3
      %p216 = pnand %p214, %p215
      %p217 = pneg %p216
      // Predicated region
      $region41: #{tpu_custom_call.1} parent=5 // pred_check
        _
      $region42: #{tpu_custom_call.1} parent=5 // pred_check_branch
        %219 = sbr.rel (%p216) target = $region44
      $region43: #{tpu_custom_call.1} parent=5 // pred_region
        %s220 = ssub.s32 %s15, 1
        %p221 = scmp.lt.s32.totalorder %s20, 1
        %s222 = scalar_select %p221, %s20, 1
        %s223 = smul.addr %s222, 3
        %s224 = smul.addr %s223, 8
        %s225 = scalar_lea.vmem %s0, %s224
        %p226 = pneg %p41
        %p227 = pneg %p38
        %p228 = pneg %p62
        %p229 = pneg %p59
        %p230 = pneg %p83
        %p231 = pneg %p80
        %p232 = pneg %p104
        %p233 = pneg %p101
        %p234 = pneg %p125
        %p235 = pneg %p122
        %p236 = pneg %p146
        %p237 = pneg %p143
        %p238 = pneg %p172
        %p239 = pneg %p169
        %s240 = sand.u32 %s159, 1
        %s241 = scalar_lea.sflag [#allocation4], %s240
        %s242 = sand.u32 %s159, 1
        %s243 = smul.addr %s242, 12
        %s244 = scalar_lea.vmem [#allocation3], %s243
        %p245 = scmp.lt.s32.totalorder %s20, 1
        %s246 = scalar_select %p245, %s20, 1
        %s247 = smul.addr %s246, 3
        %s248 = smul.addr %s247, 8
        %s249 = scalar_lea.vmem %s0, %s248
        %v250 = vld [vmem:[%s5] sm:$0x7]
        %v251 = vld [vmem:[%s1] sm:$0xff]
        %v252 = vld [vmem:[%s249] ss:$8 sm:$0x7]
        %254 = vset.pattern.permute.xlu0 0
        %255 = vperm.xlu0 %254, %v251
        %v256 = vpop.permute.xlu0 %255
        %v259 = vlaneseq
        %v260 = vshrl.u32 %v259, 7
        %v261 = vsub.s32 0, %v260
        %v262 = vrot.slane %v252, %v261
        %v263 = vlaneseq
        %v264 = vshrl.u32 %v263, 7
        %v265 = vsub.s32 1, %v264
        %v266 = vrot.slane %v252, %v265
        %v267 = vlaneseq
        %v268 = vshrl.u32 %v267, 7
        %v269 = vsub.s32 2, %v268
        %v270 = vrot.slane %v252, %v269
        %v274 = vmul.f32 %v256, %v262
        %v275 = vmul.f32 %v256, %v266
        %v276 = vmul.f32 %v256, %v270
        %v277 = vadd.f32 %v274, 0.0
        %v278 = vadd.f32 %v275, 0.0
        %v279 = vadd.f32 %v276, 0.0
        %s280 = scalar_lea.vmem %s249, 1
        %v281 = vld [vmem:[%s280] ss:$8 sm:$0x7]
        %282 = vset.pattern.permute.xlu0 1
        %283 = vperm.xlu0 %282, %v251
        %v284 = vpop.permute.xlu0 %283
        %v287 = vlaneseq
        %v288 = vshrl.u32 %v287, 7
        %v289 = vsub.s32 0, %v288
        %v290 = vrot.slane %v281, %v289
        %v291 = vlaneseq
        %v292 = vshrl.u32 %v291, 7
        %v293 = vsub.s32 1, %v292
        %v294 = vrot.slane %v281, %v293
        %v295 = vlaneseq
        %v296 = vshrl.u32 %v295, 7
        %v297 = vsub.s32 2, %v296
        %v298 = vrot.slane %v281, %v297
        %v302 = vmul.f32 %v284, %v290
        %v303 = vmul.f32 %v284, %v294
        %v304 = vmul.f32 %v284, %v298
        %v305 = vadd.f32 %v277, %v302
        %v306 = vadd.f32 %v278, %v303
        %v307 = vadd.f32 %v279, %v304
        %s308 = scalar_lea.vmem %s249, 2
        %v309 = vld [vmem:[%s308] ss:$8 sm:$0x7]
        %310 = vset.pattern.permute.xlu0 2
        %311 = vperm.xlu0 %310, %v251
        %v312 = vpop.permute.xlu0 %311
        %v315 = vlaneseq
        %v316 = vshrl.u32 %v315, 7
        %v317 = vsub.s32 0, %v316
        %v318 = vrot.slane %v309, %v317
        %v319 = vlaneseq
        %v320 = vshrl.u32 %v319, 7
        %v321 = vsub.s32 1, %v320
        %v322 = vrot.slane %v309, %v321
        %v323 = vlaneseq
        %v324 = vshrl.u32 %v323, 7
        %v325 = vsub.s32 2, %v324
        %v326 = vrot.slane %v309, %v325
        %v330 = vmul.f32 %v312, %v318
        %v331 = vmul.f32 %v312, %v322
        %v332 = vmul.f32 %v312, %v326
        %v333 = vadd.f32 %v305, %v330
        %v334 = vadd.f32 %v306, %v331
        %v335 = vadd.f32 %v307, %v332
        %s336 = scalar_lea.vmem %s249, 3
        %v337 = vld [vmem:[%s336] ss:$8 sm:$0x7]
        %338 = vset.pattern.permute.xlu0 3
        %339 = vperm.xlu0 %338, %v251
        %v340 = vpop.permute.xlu0 %339
        %v343 = vlaneseq
        %v344 = vshrl.u32 %v343, 7
        %v345 = vsub.s32 0, %v344
        %v346 = vrot.slane %v337, %v345
        %v347 = vlaneseq
        %v348 = vshrl.u32 %v347, 7
        %v349 = vsub.s32 1, %v348
        %v350 = vrot.slane %v337, %v349
        %v351 = vlaneseq
        %v352 = vshrl.u32 %v351, 7
        %v353 = vsub.s32 2, %v352
        %v354 = vrot.slane %v337, %v353
        %v358 = vmul.f32 %v340, %v346
        %v359 = vmul.f32 %v340, %v350
        %v360 = vmul.f32 %v340, %v354
        %v361 = vadd.f32 %v333, %v358
        %v362 = vadd.f32 %v334, %v359
        %v363 = vadd.f32 %v335, %v360
        %s364 = scalar_lea.vmem %s249, 4
        %v365 = vld [vmem:[%s364] ss:$8 sm:$0x7]
        %366 = vset.pattern.permute.xlu0 4
        %367 = vperm.xlu0 %366, %v251
        %v368 = vpop.permute.xlu0 %367
        %v371 = vlaneseq
        %v372 = vshrl.u32 %v371, 7
        %v373 = vsub.s32 0, %v372
        %v374 = vrot.slane %v365, %v373
        %v375 = vlaneseq
        %v376 = vshrl.u32 %v375, 7
        %v377 = vsub.s32 1, %v376
        %v378 = vrot.slane %v365, %v377
        %v379 = vlaneseq
        %v380 = vshrl.u32 %v379, 7
        %v381 = vsub.s32 2, %v380
        %v382 = vrot.slane %v365, %v381
        %v386 = vmul.f32 %v368, %v374
        %v387 = vmul.f32 %v368, %v378
        %v388 = vmul.f32 %v368, %v382
        %v389 = vadd.f32 %v361, %v386
        %v390 = vadd.f32 %v362, %v387
        %v391 = vadd.f32 %v363, %v388
        %s392 = scalar_lea.vmem %s249, 5
        %v393 = vld [vmem:[%s392] ss:$8 sm:$0x7]
        %394 = vset.pattern.permute.xlu0 5
        %395 = vperm.xlu0 %394, %v251
        %v396 = vpop.permute.xlu0 %395
        %v399 = vlaneseq
        %v400 = vshrl.u32 %v399, 7
        %v401 = vsub.s32 0, %v400
        %v402 = vrot.slane %v393, %v401
        %v403 = vlaneseq
        %v404 = vshrl.u32 %v403, 7
        %v405 = vsub.s32 1, %v404
        %v406 = vrot.slane %v393, %v405
        %v407 = vlaneseq
        %v408 = vshrl.u32 %v407, 7
        %v409 = vsub.s32 2, %v408
        %v410 = vrot.slane %v393, %v409
        %v414 = vmul.f32 %v396, %v402
        %v415 = vmul.f32 %v396, %v406
        %v416 = vmul.f32 %v396, %v410
        %v417 = vadd.f32 %v389, %v414
        %v418 = vadd.f32 %v390, %v415
        %v419 = vadd.f32 %v391, %v416
        %s420 = scalar_lea.vmem %s249, 6
        %v421 = vld [vmem:[%s420] ss:$8 sm:$0x7]
        %422 = vset.pattern.permute.xlu0 6
        %423 = vperm.xlu0 %422, %v251
        %v424 = vpop.permute.xlu0 %423
        %v427 = vlaneseq
        %v428 = vshrl.u32 %v427, 7
        %v429 = vsub.s32 0, %v428
        %v430 = vrot.slane %v421, %v429
        %v431 = vlaneseq
        %v432 = vshrl.u32 %v431, 7
        %v433 = vsub.s32 1, %v432
        %v434 = vrot.slane %v421, %v433
        %v435 = vlaneseq
        %v436 = vshrl.u32 %v435, 7
        %v437 = vsub.s32 2, %v436
        %v438 = vrot.slane %v421, %v437
        %v442 = vmul.f32 %v424, %v430
        %v443 = vmul.f32 %v424, %v434
        %v444 = vmul.f32 %v424, %v438
        %v445 = vadd.f32 %v417, %v442
        %v446 = vadd.f32 %v418, %v443
        %v447 = vadd.f32 %v419, %v444
        %s448 = scalar_lea.vmem %s249, 7
        %v449 = vld [vmem:[%s448] ss:$8 sm:$0x7]
        %450 = vset.pattern.permute.xlu0 7
        %451 = vperm.xlu0 %450, %v251
        %v452 = vpop.permute.xlu0 %451
        %v455 = vlaneseq
        %v456 = vshrl.u32 %v455, 7
        %v457 = vsub.s32 0, %v456
        %v458 = vrot.slane %v449, %v457
        %v459 = vlaneseq
        %v460 = vshrl.u32 %v459, 7
        %v461 = vsub.s32 1, %v460
        %v462 = vrot.slane %v449, %v461
        %v463 = vlaneseq
        %v464 = vshrl.u32 %v463, 7
        %v465 = vsub.s32 2, %v464
        %v466 = vrot.slane %v449, %v465
        %v470 = vmul.f32 %v452, %v458
        %v471 = vmul.f32 %v452, %v462
        %v472 = vmul.f32 %v452, %v466
        %v473 = vadd.f32 %v445, %v470
        %v474 = vadd.f32 %v446, %v471
        %v475 = vadd.f32 %v447, %v472
        %s476 = scalar_lea.vmem %s1, 8
        %v477 = vld [vmem:[%s476] sm:$0xff]
        %479 = vset.pattern.permute.xlu0 0
        %480 = vperm.xlu0 %479, %v477
        %v481 = vpop.permute.xlu0 %480
        %v483 = vmul.f32 %v481, %v262
        %v484 = vmul.f32 %v481, %v266
        %v485 = vmul.f32 %v481, %v270
        %489 = vrot.lane.b32.xlu0 %v483, 127
        %v490 = vpop.permute.xlu0 %489
        %491 = vrot.lane.b32.xlu0 %v484, 127
        %v492 = vpop.permute.xlu0 %491
        %493 = vrot.lane.b32.xlu0 %v485, 127
        %v494 = vpop.permute.xlu0 %493
        %vm495 = vcmask 1039360
        %v496 = vsel %vm495, %v490, %v492
        %v497 = vsel %vm495, %v492, %v494
        %v501 = vadd.f32 %v473, %v496
        %v502 = vadd.f32 %v474, %v497
        %v503 = vadd.f32 %v475, %v494
        %504 = vset.pattern.permute.xlu0 1
        %505 = vperm.xlu0 %504, %v477
        %v506 = vpop.permute.xlu0 %505
        %v508 = vmul.f32 %v506, %v290
        %v509 = vmul.f32 %v506, %v294
        %v510 = vmul.f32 %v506, %v298
        %514 = vrot.lane.b32.xlu0 %v508, 127
        %v515 = vpop.permute.xlu0 %514
        %516 = vrot.lane.b32.xlu0 %v509, 127
        %v517 = vpop.permute.xlu0 %516
        %518 = vrot.lane.b32.xlu0 %v510, 127
        %v519 = vpop.permute.xlu0 %518
        %v520 = vsel %vm495, %v515, %v517
        %v521 = vsel %vm495, %v517, %v519
        %v525 = vadd.f32 %v501, %v520
        %v526 = vadd.f32 %v502, %v521
        %v527 = vadd.f32 %v503, %v519
        %528 = vset.pattern.permute.xlu0 2
        %529 = vperm.xlu0 %528, %v477
        %v530 = vpop.permute.xlu0 %529
        %v532 = vmul.f32 %v530, %v318
        %v533 = vmul.f32 %v530, %v322
        %v534 = vmul.f32 %v530, %v326
        %538 = vrot.lane.b32.xlu0 %v532, 127
        %v539 = vpop.permute.xlu0 %538
        %540 = vrot.lane.b32.xlu0 %v533, 127
        %v541 = vpop.permute.xlu0 %540
        %542 = vrot.lane.b32.xlu0 %v534, 127
        %v543 = vpop.permute.xlu0 %542
        %v544 = vsel %vm495, %v539, %v541
        %v545 = vsel %vm495, %v541, %v543
        %v549 = vadd.f32 %v525, %v544
        %v550 = vadd.f32 %v526, %v545
        %v551 = vadd.f32 %v527, %v543
        %552 = vset.pattern.permute.xlu0 3
        %553 = vperm.xlu0 %552, %v477
        %v554 = vpop.permute.xlu0 %553
        %v556 = vmul.f32 %v554, %v346
        %v557 = vmul.f32 %v554, %v350
        %v558 = vmul.f32 %v554, %v354
        %562 = vrot.lane.b32.xlu0 %v556, 127
        %v563 = vpop.permute.xlu0 %562
        %564 = vrot.lane.b32.xlu0 %v557, 127
        %v565 = vpop.permute.xlu0 %564
        %566 = vrot.lane.b32.xlu0 %v558, 127
        %v567 = vpop.permute.xlu0 %566
        %v568 = vsel %vm495, %v563, %v565
        %v569 = vsel %vm495, %v565, %v567
        %v573 = vadd.f32 %v549, %v568
        %v574 = vadd.f32 %v550, %v569
        %v575 = vadd.f32 %v551, %v567
        %576 = vset.pattern.permute.xlu0 4
        %577 = vperm.xlu0 %576, %v477
        %v578 = vpop.permute.xlu0 %577
        %v580 = vmul.f32 %v578, %v374
        %v581 = vmul.f32 %v578, %v378
        %v582 = vmul.f32 %v578, %v382
        %586 = vrot.lane.b32.xlu0 %v580, 127
        %v587 = vpop.permute.xlu0 %586
        %588 = vrot.lane.b32.xlu0 %v581, 127
        %v589 = vpop.permute.xlu0 %588
        %590 = vrot.lane.b32.xlu0 %v582, 127
        %v591 = vpop.permute.xlu0 %590
        %v592 = vsel %vm495, %v587, %v589
        %v593 = vsel %vm495, %v589, %v591
        %v597 = vadd.f32 %v573, %v592
        %v598 = vadd.f32 %v574, %v593
        %v599 = vadd.f32 %v575, %v591
        %600 = vset.pattern.permute.xlu0 5
        %601 = vperm.xlu0 %600, %v477
        %v602 = vpop.permute.xlu0 %601
        %v604 = vmul.f32 %v602, %v402
        %v605 = vmul.f32 %v602, %v406
        %v606 = vmul.f32 %v602, %v410
        %610 = vrot.lane.b32.xlu0 %v604, 127
        %v611 = vpop.permute.xlu0 %610
        %612 = vrot.lane.b32.xlu0 %v605, 127
        %v613 = vpop.permute.xlu0 %612
        %614 = vrot.lane.b32.xlu0 %v606, 127
        %v615 = vpop.permute.xlu0 %614
        %v616 = vsel %vm495, %v611, %v613
        %v617 = vsel %vm495, %v613, %v615
        %v621 = vadd.f32 %v597, %v616
        %v622 = vadd.f32 %v598, %v617
        %v623 = vadd.f32 %v599, %v615
        %624 = vset.pattern.permute.xlu0 6
        %625 = vperm.xlu0 %624, %v477
        %v626 = vpop.permute.xlu0 %625
        %v628 = vmul.f32 %v626, %v430
        %v629 = vmul.f32 %v626, %v434
        %v630 = vmul.f32 %v626, %v438
        %634 = vrot.lane.b32.xlu0 %v628, 127
        %v635 = vpop.permute.xlu0 %634
        %636 = vrot.lane.b32.xlu0 %v629, 127
        %v637 = vpop.permute.xlu0 %636
        %638 = vrot.lane.b32.xlu0 %v630, 127
        %v639 = vpop.permute.xlu0 %638
        %v640 = vsel %vm495, %v635, %v637
        %v641 = vsel %vm495, %v637, %v639
        %v645 = vadd.f32 %v621, %v640
        %v646 = vadd.f32 %v622, %v641
        %v647 = vadd.f32 %v623, %v639
        %648 = vset.pattern.permute.xlu0 7
        %649 = vperm.xlu0 %648, %v477
        %v650 = vpop.permute.xlu0 %649
        %v652 = vmul.f32 %v650, %v458
        %v653 = vmul.f32 %v650, %v462
        %v654 = vmul.f32 %v650, %v466
        %658 = vrot.lane.b32.xlu0 %v652, 127
        %v659 = vpop.permute.xlu0 %658
        %660 = vrot.lane.b32.xlu0 %v653, 127
        %v661 = vpop.permute.xlu0 %660
        %662 = vrot.lane.b32.xlu0 %v654, 127
        %v663 = vpop.permute.xlu0 %662
        %v664 = vsel %vm495, %v659, %v661
        %v665 = vsel %vm495, %v661, %v663
        %v669 = vadd.f32 %v645, %v664
        %v670 = vadd.f32 %v646, %v665
        %v671 = vadd.f32 %v647, %v663
        %s672 = scalar_lea.vmem %s1, 16
        %v673 = vld [vmem:[%s672] sm:$0xff]
        %675 = vset.pattern.permute.xlu0 0
        %676 = vperm.xlu0 %675, %v673
        %v677 = vpop.permute.xlu0 %676
        %v679 = vmul.f32 %v677, %v262
        %v680 = vmul.f32 %v677, %v266
        %v681 = vmul.f32 %v677, %v270
        %685 = vrot.lane.b32.xlu0 %v679, 126
        %v686 = vpop.permute.xlu0 %685
        %687 = vrot.lane.b32.xlu0 %v680, 126
        %v688 = vpop.permute.xlu0 %687
        %689 = vrot.lane.b32.xlu0 %v681, 126
        %v690 = vpop.permute.xlu0 %689
        %vm691 = vcmask 1031168
        %v692 = vsel %vm691, %v686, %v688
        %v693 = vsel %vm691, %v688, %v690
        %v697 = vadd.f32 %v669, %v692
        %v698 = vadd.f32 %v670, %v693
        %v699 = vadd.f32 %v671, %v690
        %700 = vset.pattern.permute.xlu0 1
        %701 = vperm.xlu0 %700, %v673
        %v702 = vpop.permute.xlu0 %701
        %v704 = vmul.f32 %v702, %v290
        %v705 = vmul.f32 %v702, %v294
        %v706 = vmul.f32 %v702, %v298
        %710 = vrot.lane.b32.xlu0 %v704, 126
        %v711 = vpop.permute.xlu0 %710
        %712 = vrot.lane.b32.xlu0 %v705, 126
        %v713 = vpop.permute.xlu0 %712
        %714 = vrot.lane.b32.xlu0 %v706, 126
        %v715 = vpop.permute.xlu0 %714
        %v716 = vsel %vm691, %v711, %v713
        %v717 = vsel %vm691, %v713, %v715
        %v721 = vadd.f32 %v697, %v716
        %v722 = vadd.f32 %v698, %v717
        %v723 = vadd.f32 %v699, %v715
        %724 = vset.pattern.permute.xlu0 2
        %725 = vperm.xlu0 %724, %v673
        %v726 = vpop.permute.xlu0 %725
        %v728 = vmul.f32 %v726, %v318
        %v729 = vmul.f32 %v726, %v322
        %v730 = vmul.f32 %v726, %v326
        %734 = vrot.lane.b32.xlu0 %v728, 126
        %v735 = vpop.permute.xlu0 %734
        %736 = vrot.lane.b32.xlu0 %v729, 126
        %v737 = vpop.permute.xlu0 %736
        %738 = vrot.lane.b32.xlu0 %v730, 126
        %v739 = vpop.permute.xlu0 %738
        %v740 = vsel %vm691, %v735, %v737
        %v741 = vsel %vm691, %v737, %v739
        %v745 = vadd.f32 %v721, %v740
        %v746 = vadd.f32 %v722, %v741
        %v747 = vadd.f32 %v723, %v739
        %748 = vset.pattern.permute.xlu0 3
        %749 = vperm.xlu0 %748, %v673
        %v750 = vpop.permute.xlu0 %749
        %v752 = vmul.f32 %v750, %v346
        %v753 = vmul.f32 %v750, %v350
        %v754 = vmul.f32 %v750, %v354
        %758 = vrot.lane.b32.xlu0 %v752, 126
        %v759 = vpop.permute.xlu0 %758
        %760 = vrot.lane.b32.xlu0 %v753, 126
        %v761 = vpop.permute.xlu0 %760
        %762 = vrot.lane.b32.xlu0 %v754, 126
        %v763 = vpop.permute.xlu0 %762
        %v764 = vsel %vm691, %v759, %v761
        %v765 = vsel %vm691, %v761, %v763
        %v769 = vadd.f32 %v745, %v764
        %v770 = vadd.f32 %v746, %v765
        %v771 = vadd.f32 %v747, %v763
        %772 = vset.pattern.permute.xlu0 4
        %773 = vperm.xlu0 %772, %v673
        %v774 = vpop.permute.xlu0 %773
        %v776 = vmul.f32 %v774, %v374
        %v777 = vmul.f32 %v774, %v378
        %v778 = vmul.f32 %v774, %v382
        %782 = vrot.lane.b32.xlu0 %v776, 126
        %v783 = vpop.permute.xlu0 %782
        %784 = vrot.lane.b32.xlu0 %v777, 126
        %v785 = vpop.permute.xlu0 %784
        %786 = vrot.lane.b32.xlu0 %v778, 126
        %v787 = vpop.permute.xlu0 %786
        %v788 = vsel %vm691, %v783, %v785
        %v789 = vsel %vm691, %v785, %v787
        %v793 = vadd.f32 %v769, %v788
        %v794 = vadd.f32 %v770, %v789
        %v795 = vadd.f32 %v771, %v787
        %796 = vset.pattern.permute.xlu0 5
        %797 = vperm.xlu0 %796, %v673
        %v798 = vpop.permute.xlu0 %797
        %v800 = vmul.f32 %v798, %v402
        %v801 = vmul.f32 %v798, %v406
        %v802 = vmul.f32 %v798, %v410
        %806 = vrot.lane.b32.xlu0 %v800, 126
        %v807 = vpop.permute.xlu0 %806
        %808 = vrot.lane.b32.xlu0 %v801, 126
        %v809 = vpop.permute.xlu0 %808
        %810 = vrot.lane.b32.xlu0 %v802, 126
        %v811 = vpop.permute.xlu0 %810
        %v812 = vsel %vm691, %v807, %v809
        %v813 = vsel %vm691, %v809, %v811
        %v817 = vadd.f32 %v793, %v812
        %v818 = vadd.f32 %v794, %v813
        %v819 = vadd.f32 %v795, %v811
        %820 = vset.pattern.permute.xlu0 6
        %821 = vperm.xlu0 %820, %v673
        %v822 = vpop.permute.xlu0 %821
        %v824 = vmul.f32 %v822, %v430
        %v825 = vmul.f32 %v822, %v434
        %v826 = vmul.f32 %v822, %v438
        %830 = vrot.lane.b32.xlu0 %v824, 126
        %v831 = vpop.permute.xlu0 %830
        %832 = vrot.lane.b32.xlu0 %v825, 126
        %v833 = vpop.permute.xlu0 %832
        %834 = vrot.lane.b32.xlu0 %v826, 126
        %v835 = vpop.permute.xlu0 %834
        %v836 = vsel %vm691, %v831, %v833
        %v837 = vsel %vm691, %v833, %v835
        %v841 = vadd.f32 %v817, %v836
        %v842 = vadd.f32 %v818, %v837
        %v843 = vadd.f32 %v819, %v835
        %844 = vset.pattern.permute.xlu0 7
        %845 = vperm.xlu0 %844, %v673
        %v846 = vpop.permute.xlu0 %845
        %v848 = vmul.f32 %v846, %v458
        %v849 = vmul.f32 %v846, %v462
        %v850 = vmul.f32 %v846, %v466
        %854 = vrot.lane.b32.xlu0 %v848, 126
        %v855 = vpop.permute.xlu0 %854
        %856 = vrot.lane.b32.xlu0 %v849, 126
        %v857 = vpop.permute.xlu0 %856
        %858 = vrot.lane.b32.xlu0 %v850, 126
        %v859 = vpop.permute.xlu0 %858
        %v860 = vsel %vm691, %v855, %v857
        %v861 = vsel %vm691, %v857, %v859
        %v865 = vadd.f32 %v841, %v860
        %v866 = vadd.f32 %v842, %v861
        %v867 = vadd.f32 %v843, %v859
        %s868 = scalar_lea.vmem %s1, 24
        %v869 = vld [vmem:[%s868] sm:$0xff]
        %871 = vset.pattern.permute.xlu0 0
        %872 = vperm.xlu0 %871, %v869
        %v873 = vpop.permute.xlu0 %872
        %v875 = vmul.f32 %v873, %v262
        %v876 = vmul.f32 %v873, %v266
        %v877 = vmul.f32 %v873, %v270
        %881 = vrot.lane.b32.xlu0 %v875, 110
        %v882 = vpop.permute.xlu0 %881
        %883 = vrot.lane.b32.xlu0 %v876, 110
        %v884 = vpop.permute.xlu0 %883
        %885 = vrot.lane.b32.xlu0 %v877, 110
        %v886 = vpop.permute.xlu0 %885
        %vm887 = vcmask 900096
        %v888 = vsel %vm887, %v882, %v884
        %v889 = vsel %vm887, %v884, %v886
        %v893 = vadd.f32 %v865, %v888
        %v894 = vadd.f32 %v866, %v889
        %v895 = vadd.f32 %v867, %v886
        %896 = vset.pattern.permute.xlu0 1
        %897 = vperm.xlu0 %896, %v869
        %v898 = vpop.permute.xlu0 %897
        %v900 = vmul.f32 %v898, %v290
        %v901 = vmul.f32 %v898, %v294
        %v902 = vmul.f32 %v898, %v298
        %906 = vrot.lane.b32.xlu0 %v900, 110
        %v907 = vpop.permute.xlu0 %906
        %908 = vrot.lane.b32.xlu0 %v901, 110
        %v909 = vpop.permute.xlu0 %908
        %910 = vrot.lane.b32.xlu0 %v902, 110
        %v911 = vpop.permute.xlu0 %910
        %v912 = vsel %vm887, %v907, %v909
        %v913 = vsel %vm887, %v909, %v911
        %v917 = vadd.f32 %v893, %v912
        %v918 = vadd.f32 %v894, %v913
        %v919 = vadd.f32 %v895, %v911
        %920 = vset.pattern.permute.xlu0 2
        %921 = vperm.xlu0 %920, %v869
        %v922 = vpop.permute.xlu0 %921
        %v924 = vmul.f32 %v922, %v318
        %v925 = vmul.f32 %v922, %v322
        %v926 = vmul.f32 %v922, %v326
        %930 = vrot.lane.b32.xlu0 %v924, 110
        %v931 = vpop.permute.xlu0 %930
        %932 = vrot.lane.b32.xlu0 %v925, 110
        %v933 = vpop.permute.xlu0 %932
        %934 = vrot.lane.b32.xlu0 %v926, 110
        %v935 = vpop.permute.xlu0 %934
        %v936 = vsel %vm887, %v931, %v933
        %v937 = vsel %vm887, %v933, %v935
        %v941 = vadd.f32 %v917, %v936
        %v942 = vadd.f32 %v918, %v937
        %v943 = vadd.f32 %v919, %v935
        %944 = vset.pattern.permute.xlu0 3
        %945 = vperm.xlu0 %944, %v869
        %v946 = vpop.permute.xlu0 %945
        %v948 = vmul.f32 %v946, %v346
        %v949 = vmul.f32 %v946, %v350
        %v950 = vmul.f32 %v946, %v354
        %954 = vrot.lane.b32.xlu0 %v948, 110
        %v955 = vpop.permute.xlu0 %954
        %956 = vrot.lane.b32.xlu0 %v949, 110
        %v957 = vpop.permute.xlu0 %956
        %958 = vrot.lane.b32.xlu0 %v950, 110
        %v959 = vpop.permute.xlu0 %958
        %v960 = vsel %vm887, %v955, %v957
        %v961 = vsel %vm887, %v957, %v959
        %v965 = vadd.f32 %v941, %v960
        %v966 = vadd.f32 %v942, %v961
        %v967 = vadd.f32 %v943, %v959
        %968 = vset.pattern.permute.xlu0 4
        %969 = vperm.xlu0 %968, %v869
        %v970 = vpop.permute.xlu0 %969
        %v972 = vmul.f32 %v970, %v374
        %v973 = vmul.f32 %v970, %v378
        %v974 = vmul.f32 %v970, %v382
        %978 = vrot.lane.b32.xlu0 %v972, 110
        %v979 = vpop.permute.xlu0 %978
        %980 = vrot.lane.b32.xlu0 %v973, 110
        %v981 = vpop.permute.xlu0 %980
        %982 = vrot.lane.b32.xlu0 %v974, 110
        %v983 = vpop.permute.xlu0 %982
        %v984 = vsel %vm887, %v979, %v981
        %v985 = vsel %vm887, %v981, %v983
        %v989 = vadd.f32 %v965, %v984
        %v990 = vadd.f32 %v966, %v985
        %v991 = vadd.f32 %v967, %v983
        %992 = vset.pattern.permute.xlu0 5
        %993 = vperm.xlu0 %992, %v869
        %v994 = vpop.permute.xlu0 %993
        %v996 = vmul.f32 %v994, %v402
        %v997 = vmul.f32 %v994, %v406
        %v998 = vmul.f32 %v994, %v410
        %1002 = vrot.lane.b32.xlu0 %v996, 110
        %v1003 = vpop.permute.xlu0 %1002
        %1004 = vrot.lane.b32.xlu0 %v997, 110
        %v1005 = vpop.permute.xlu0 %1004
        %1006 = vrot.lane.b32.xlu0 %v998, 110
        %v1007 = vpop.permute.xlu0 %1006
        %v1008 = vsel %vm887, %v1003, %v1005
        %v1009 = vsel %vm887, %v1005, %v1007
        %v1013 = vadd.f32 %v989, %v1008
        %v1014 = vadd.f32 %v990, %v1009
        %v1015 = vadd.f32 %v991, %v1007
        %1016 = vset.pattern.permute.xlu0 6
        %1017 = vperm.xlu0 %1016, %v869
        %v1018 = vpop.permute.xlu0 %1017
        %v1020 = vmul.f32 %v1018, %v430
        %v1021 = vmul.f32 %v1018, %v434
        %v1022 = vmul.f32 %v1018, %v438
        %1026 = vrot.lane.b32.xlu0 %v1020, 110
        %v1027 = vpop.permute.xlu0 %1026
        %1028 = vrot.lane.b32.xlu0 %v1021, 110
        %v1029 = vpop.permute.xlu0 %1028
        %1030 = vrot.lane.b32.xlu0 %v1022, 110
        %v1031 = vpop.permute.xlu0 %1030
        %v1032 = vsel %vm887, %v1027, %v1029
        %v1033 = vsel %vm887, %v1029, %v1031
        %v1037 = vadd.f32 %v1013, %v1032
        %v1038 = vadd.f32 %v1014, %v1033
        %v1039 = vadd.f32 %v1015, %v1031
        %1040 = vset.pattern.permute.xlu0 7
        %1041 = vperm.xlu0 %1040, %v869
        %v1042 = vpop.permute.xlu0 %1041
        %v1044 = vmul.f32 %v1042, %v458
        %v1045 = vmul.f32 %v1042, %v462
        %v1046 = vmul.f32 %v1042, %v466
        %1050 = vrot.lane.b32.xlu0 %v1044, 110
        %v1051 = vpop.permute.xlu0 %1050
        %1052 = vrot.lane.b32.xlu0 %v1045, 110
        %v1053 = vpop.permute.xlu0 %1052
        %1054 = vrot.lane.b32.xlu0 %v1046, 110
        %v1055 = vpop.permute.xlu0 %1054
        %v1056 = vsel %vm887, %v1051, %v1053
        %v1057 = vsel %vm887, %v1053, %v1055
        %v1061 = vadd.f32 %v1037, %v1056
        %v1062 = vadd.f32 %v1038, %v1057
        %v1063 = vadd.f32 %v1039, %v1055
        %s1064 = scalar_lea.vmem %s1, 32
        %v1065 = vld [vmem:[%s1064] sm:$0xff]
        %1067 = vset.pattern.permute.xlu0 0
        %1068 = vperm.xlu0 %1067, %v1065
        %v1069 = vpop.permute.xlu0 %1068
        %v1071 = vmul.f32 %v1069, %v262
        %v1072 = vmul.f32 %v1069, %v266
        %v1073 = vmul.f32 %v1069, %v270
        %1077 = vrot.lane.b32.xlu0 %v1071, 109
        %v1078 = vpop.permute.xlu0 %1077
        %1079 = vrot.lane.b32.xlu0 %v1072, 109
        %v1080 = vpop.permute.xlu0 %1079
        %1081 = vrot.lane.b32.xlu0 %v1073, 109
        %v1082 = vpop.permute.xlu0 %1081
        %vm1083 = vcmask 891904
        %v1084 = vsel %vm1083, %v1078, %v1080
        %v1085 = vsel %vm1083, %v1080, %v1082
        %v1089 = vadd.f32 %v1061, %v1084
        %v1090 = vadd.f32 %v1062, %v1085
        %v1091 = vadd.f32 %v1063, %v1082
        %1092 = vset.pattern.permute.xlu0 1
        %1093 = vperm.xlu0 %1092, %v1065
        %v1094 = vpop.permute.xlu0 %1093
        %v1096 = vmul.f32 %v1094, %v290
        %v1097 = vmul.f32 %v1094, %v294
        %v1098 = vmul.f32 %v1094, %v298
        %1102 = vrot.lane.b32.xlu0 %v1096, 109
        %v1103 = vpop.permute.xlu0 %1102
        %1104 = vrot.lane.b32.xlu0 %v1097, 109
        %v1105 = vpop.permute.xlu0 %1104
        %1106 = vrot.lane.b32.xlu0 %v1098, 109
        %v1107 = vpop.permute.xlu0 %1106
        %v1108 = vsel %vm1083, %v1103, %v1105
        %v1109 = vsel %vm1083, %v1105, %v1107
        %v1113 = vadd.f32 %v1089, %v1108
        %v1114 = vadd.f32 %v1090, %v1109
        %v1115 = vadd.f32 %v1091, %v1107
        %1116 = vset.pattern.permute.xlu0 2
        %1117 = vperm.xlu0 %1116, %v1065
        %v1118 = vpop.permute.xlu0 %1117
        %v1120 = vmul.f32 %v1118, %v318
        %v1121 = vmul.f32 %v1118, %v322
        %v1122 = vmul.f32 %v1118, %v326
        %1126 = vrot.lane.b32.xlu0 %v1120, 109
        %v1127 = vpop.permute.xlu0 %1126
        %1128 = vrot.lane.b32.xlu0 %v1121, 109
        %v1129 = vpop.permute.xlu0 %1128
        %1130 = vrot.lane.b32.xlu0 %v1122, 109
        %v1131 = vpop.permute.xlu0 %1130
        %v1132 = vsel %vm1083, %v1127, %v1129
        %v1133 = vsel %vm1083, %v1129, %v1131
        %v1137 = vadd.f32 %v1113, %v1132
        %v1138 = vadd.f32 %v1114, %v1133
        %v1139 = vadd.f32 %v1115, %v1131
        %1140 = vset.pattern.permute.xlu0 3
        %1141 = vperm.xlu0 %1140, %v1065
        %v1142 = vpop.permute.xlu0 %1141
        %v1144 = vmul.f32 %v1142, %v346
        %v1145 = vmul.f32 %v1142, %v350
        %v1146 = vmul.f32 %v1142, %v354
        %1150 = vrot.lane.b32.xlu0 %v1144, 109
        %v1151 = vpop.permute.xlu0 %1150
        %1152 = vrot.lane.b32.xlu0 %v1145, 109
        %v1153 = vpop.permute.xlu0 %1152
        %1154 = vrot.lane.b32.xlu0 %v1146, 109
        %v1155 = vpop.permute.xlu0 %1154
        %v1156 = vsel %vm1083, %v1151, %v1153
        %v1157 = vsel %vm1083, %v1153, %v1155
        %v1161 = vadd.f32 %v1137, %v1156
        %v1162 = vadd.f32 %v1138, %v1157
        %v1163 = vadd.f32 %v1139, %v1155
        %1164 = vset.pattern.permute.xlu0 4
        %1165 = vperm.xlu0 %1164, %v1065
        %v1166 = vpop.permute.xlu0 %1165
        %v1168 = vmul.f32 %v1166, %v374
        %v1169 = vmul.f32 %v1166, %v378
        %v1170 = vmul.f32 %v1166, %v382
        %1174 = vrot.lane.b32.xlu0 %v1168, 109
        %v1175 = vpop.permute.xlu0 %1174
        %1176 = vrot.lane.b32.xlu0 %v1169, 109
        %v1177 = vpop.permute.xlu0 %1176
        %1178 = vrot.lane.b32.xlu0 %v1170, 109
        %v1179 = vpop.permute.xlu0 %1178
        %v1180 = vsel %vm1083, %v1175, %v1177
        %v1181 = vsel %vm1083, %v1177, %v1179
        %v1185 = vadd.f32 %v1161, %v1180
        %v1186 = vadd.f32 %v1162, %v1181
        %v1187 = vadd.f32 %v1163, %v1179
        %1188 = vset.pattern.permute.xlu0 5
        %1189 = vperm.xlu0 %1188, %v1065
        %v1190 = vpop.permute.xlu0 %1189
        %v1192 = vmul.f32 %v1190, %v402
        %v1193 = vmul.f32 %v1190, %v406
        %v1194 = vmul.f32 %v1190, %v410
        %1198 = vrot.lane.b32.xlu0 %v1192, 109
        %v1199 = vpop.permute.xlu0 %1198
        %1200 = vrot.lane.b32.xlu0 %v1193, 109
        %v1201 = vpop.permute.xlu0 %1200
        %1202 = vrot.lane.b32.xlu0 %v1194, 109
        %v1203 = vpop.permute.xlu0 %1202
        %v1204 = vsel %vm1083, %v1199, %v1201
        %v1205 = vsel %vm1083, %v1201, %v1203
        %v1209 = vadd.f32 %v1185, %v1204
        %v1210 = vadd.f32 %v1186, %v1205
        %v1211 = vadd.f32 %v1187, %v1203
        %1212 = vset.pattern.permute.xlu0 6
        %1213 = vperm.xlu0 %1212, %v1065
        %v1214 = vpop.permute.xlu0 %1213
        %v1216 = vmul.f32 %v1214, %v430
        %v1217 = vmul.f32 %v1214, %v434
        %v1218 = vmul.f32 %v1214, %v438
        %1222 = vrot.lane.b32.xlu0 %v1216, 109
        %v1223 = vpop.permute.xlu0 %1222
        %1224 = vrot.lane.b32.xlu0 %v1217, 109
        %v1225 = vpop.permute.xlu0 %1224
        %1226 = vrot.lane.b32.xlu0 %v1218, 109
        %v1227 = vpop.permute.xlu0 %1226
        %v1228 = vsel %vm1083, %v1223, %v1225
        %v1229 = vsel %vm1083, %v1225, %v1227
        %v1233 = vadd.f32 %v1209, %v1228
        %v1234 = vadd.f32 %v1210, %v1229
        %v1235 = vadd.f32 %v1211, %v1227
        %1236 = vset.pattern.permute.xlu0 7
        %1237 = vperm.xlu0 %1236, %v1065
        %v1238 = vpop.permute.xlu0 %1237
        %v1240 = vmul.f32 %v1238, %v458
        %v1241 = vmul.f32 %v1238, %v462
        %v1242 = vmul.f32 %v1238, %v466
        %1246 = vrot.lane.b32.xlu0 %v1240, 109
        %v1247 = vpop.permute.xlu0 %1246
        %1248 = vrot.lane.b32.xlu0 %v1241, 109
        %v1249 = vpop.permute.xlu0 %1248
        %1250 = vrot.lane.b32.xlu0 %v1242, 109
        %v1251 = vpop.permute.xlu0 %1250
        %v1252 = vsel %vm1083, %v1247, %v1249
        %v1253 = vsel %vm1083, %v1249, %v1251
        %v1257 = vadd.f32 %v1233, %v1252
        %v1258 = vadd.f32 %v1234, %v1253
        %v1259 = vadd.f32 %v1235, %v1251
        %s1260 = scalar_lea.vmem %s1, 40
        %v1261 = vld [vmem:[%s1260] sm:$0xff]
        %1263 = vset.pattern.permute.xlu0 0
        %1264 = vperm.xlu0 %1263, %v1261
        %v1265 = vpop.permute.xlu0 %1264
        %v1267 = vmul.f32 %v1265, %v262
        %v1268 = vmul.f32 %v1265, %v266
        %v1269 = vmul.f32 %v1265, %v270
        %1273 = vrot.lane.b32.xlu0 %v1267, 108
        %v1274 = vpop.permute.xlu0 %1273
        %1275 = vrot.lane.b32.xlu0 %v1268, 108
        %v1276 = vpop.permute.xlu0 %1275
        %1277 = vrot.lane.b32.xlu0 %v1269, 108
        %v1278 = vpop.permute.xlu0 %1277
        %vm1279 = vcmask 883712
        %v1280 = vsel %vm1279, %v1274, %v1276
        %v1281 = vsel %vm1279, %v1276, %v1278
        %v1285 = vadd.f32 %v1257, %v1280
        %v1286 = vadd.f32 %v1258, %v1281
        %v1287 = vadd.f32 %v1259, %v1278
        %1288 = vset.pattern.permute.xlu0 1
        %1289 = vperm.xlu0 %1288, %v1261
        %v1290 = vpop.permute.xlu0 %1289
        %v1292 = vmul.f32 %v1290, %v290
        %v1293 = vmul.f32 %v1290, %v294
        %v1294 = vmul.f32 %v1290, %v298
        %1298 = vrot.lane.b32.xlu0 %v1292, 108
        %v1299 = vpop.permute.xlu0 %1298
        %1300 = vrot.lane.b32.xlu0 %v1293, 108
        %v1301 = vpop.permute.xlu0 %1300
        %1302 = vrot.lane.b32.xlu0 %v1294, 108
        %v1303 = vpop.permute.xlu0 %1302
        %v1304 = vsel %vm1279, %v1299, %v1301
        %v1305 = vsel %vm1279, %v1301, %v1303
        %v1309 = vadd.f32 %v1285, %v1304
        %v1310 = vadd.f32 %v1286, %v1305
        %v1311 = vadd.f32 %v1287, %v1303
        %1312 = vset.pattern.permute.xlu0 2
        %1313 = vperm.xlu0 %1312, %v1261
        %v1314 = vpop.permute.xlu0 %1313
        %v1316 = vmul.f32 %v1314, %v318
        %v1317 = vmul.f32 %v1314, %v322
        %v1318 = vmul.f32 %v1314, %v326
        %1322 = vrot.lane.b32.xlu0 %v1316, 108
        %v1323 = vpop.permute.xlu0 %1322
        %1324 = vrot.lane.b32.xlu0 %v1317, 108
        %v1325 = vpop.permute.xlu0 %1324
        %1326 = vrot.lane.b32.xlu0 %v1318, 108
        %v1327 = vpop.permute.xlu0 %1326
        %v1328 = vsel %vm1279, %v1323, %v1325
        %v1329 = vsel %vm1279, %v1325, %v1327
        %v1333 = vadd.f32 %v1309, %v1328
        %v1334 = vadd.f32 %v1310, %v1329
        %v1335 = vadd.f32 %v1311, %v1327
        %1336 = vset.pattern.permute.xlu0 3
        %1337 = vperm.xlu0 %1336, %v1261
        %v1338 = vpop.permute.xlu0 %1337
        %v1340 = vmul.f32 %v1338, %v346
        %v1341 = vmul.f32 %v1338, %v350
        %v1342 = vmul.f32 %v1338, %v354
        %1346 = vrot.lane.b32.xlu0 %v1340, 108
        %v1347 = vpop.permute.xlu0 %1346
        %1348 = vrot.lane.b32.xlu0 %v1341, 108
        %v1349 = vpop.permute.xlu0 %1348
        %1350 = vrot.lane.b32.xlu0 %v1342, 108
        %v1351 = vpop.permute.xlu0 %1350
        %v1352 = vsel %vm1279, %v1347, %v1349
        %v1353 = vsel %vm1279, %v1349, %v1351
        %v1357 = vadd.f32 %v1333, %v1352
        %v1358 = vadd.f32 %v1334, %v1353
        %v1359 = vadd.f32 %v1335, %v1351
        %1360 = vset.pattern.permute.xlu0 4
        %1361 = vperm.xlu0 %1360, %v1261
        %v1362 = vpop.permute.xlu0 %1361
        %v1364 = vmul.f32 %v1362, %v374
        %v1365 = vmul.f32 %v1362, %v378
        %v1366 = vmul.f32 %v1362, %v382
        %1370 = vrot.lane.b32.xlu0 %v1364, 108
        %v1371 = vpop.permute.xlu0 %1370
        %1372 = vrot.lane.b32.xlu0 %v1365, 108
        %v1373 = vpop.permute.xlu0 %1372
        %1374 = vrot.lane.b32.xlu0 %v1366, 108
        %v1375 = vpop.permute.xlu0 %1374
        %v1376 = vsel %vm1279, %v1371, %v1373
        %v1377 = vsel %vm1279, %v1373, %v1375
        %v1381 = vadd.f32 %v1357, %v1376
        %v1382 = vadd.f32 %v1358, %v1377
        %v1383 = vadd.f32 %v1359, %v1375
        %1384 = vset.pattern.permute.xlu0 5
        %1385 = vperm.xlu0 %1384, %v1261
        %v1386 = vpop.permute.xlu0 %1385
        %v1388 = vmul.f32 %v1386, %v402
        %v1389 = vmul.f32 %v1386, %v406
        %v1390 = vmul.f32 %v1386, %v410
        %1394 = vrot.lane.b32.xlu0 %v1388, 108
        %v1395 = vpop.permute.xlu0 %1394
        %1396 = vrot.lane.b32.xlu0 %v1389, 108
        %v1397 = vpop.permute.xlu0 %1396
        %1398 = vrot.lane.b32.xlu0 %v1390, 108
        %v1399 = vpop.permute.xlu0 %1398
        %v1400 = vsel %vm1279, %v1395, %v1397
        %v1401 = vsel %vm1279, %v1397, %v1399
        %v1405 = vadd.f32 %v1381, %v1400
        %v1406 = vadd.f32 %v1382, %v1401
        %v1407 = vadd.f32 %v1383, %v1399
        %1408 = vset.pattern.permute.xlu0 6
        %1409 = vperm.xlu0 %1408, %v1261
        %v1410 = vpop.permute.xlu0 %1409
        %v1412 = vmul.f32 %v1410, %v430
        %v1413 = vmul.f32 %v1410, %v434
        %v1414 = vmul.f32 %v1410, %v438
        %1418 = vrot.lane.b32.xlu0 %v1412, 108
        %v1419 = vpop.permute.xlu0 %1418
        %1420 = vrot.lane.b32.xlu0 %v1413, 108
        %v1421 = vpop.permute.xlu0 %1420
        %1422 = vrot.lane.b32.xlu0 %v1414, 108
        %v1423 = vpop.permute.xlu0 %1422
        %v1424 = vsel %vm1279, %v1419, %v1421
        %v1425 = vsel %vm1279, %v1421, %v1423
        %v1429 = vadd.f32 %v1405, %v1424
        %v1430 = vadd.f32 %v1406, %v1425
        %v1431 = vadd.f32 %v1407, %v1423
        %1432 = vset.pattern.permute.xlu0 7
        %1433 = vperm.xlu0 %1432, %v1261
        %v1434 = vpop.permute.xlu0 %1433
        %v1436 = vmul.f32 %v1434, %v458
        %v1437 = vmul.f32 %v1434, %v462
        %v1438 = vmul.f32 %v1434, %v466
        %1442 = vrot.lane.b32.xlu0 %v1436, 108
        %v1443 = vpop.permute.xlu0 %1442
        %1444 = vrot.lane.b32.xlu0 %v1437, 108
        %v1445 = vpop.permute.xlu0 %1444
        %1446 = vrot.lane.b32.xlu0 %v1438, 108
        %v1447 = vpop.permute.xlu0 %1446
        %v1448 = vsel %vm1279, %v1443, %v1445
        %v1449 = vsel %vm1279, %v1445, %v1447
        %v1453 = vadd.f32 %v1429, %v1448
        %v1454 = vadd.f32 %v1430, %v1449
        %v1455 = vadd.f32 %v1431, %v1447
        %s1456 = scalar_lea.vmem %s1, 48
        %v1457 = vld [vmem:[%s1456] sm:$0xff]
        %1459 = vset.pattern.permute.xlu0 0
        %1460 = vperm.xlu0 %1459, %v1457
        %v1461 = vpop.permute.xlu0 %1460
        %v1463 = vmul.f32 %v1461, %v262
        %v1464 = vmul.f32 %v1461, %v266
        %v1465 = vmul.f32 %v1461, %v270
        %1469 = vrot.lane.b32.xlu0 %v1463, 92
        %v1470 = vpop.permute.xlu0 %1469
        %1471 = vrot.lane.b32.xlu0 %v1464, 92
        %v1472 = vpop.permute.xlu0 %1471
        %1473 = vrot.lane.b32.xlu0 %v1465, 92
        %v1474 = vpop.permute.xlu0 %1473
        %vm1475 = vcmask 752640
        %v1476 = vsel %vm1475, %v1470, %v1472
        %v1477 = vsel %vm1475, %v1472, %v1474
        %v1481 = vadd.f32 %v1453, %v1476
        %v1482 = vadd.f32 %v1454, %v1477
        %v1483 = vadd.f32 %v1455, %v1474
        %1484 = vset.pattern.permute.xlu0 1
        %1485 = vperm.xlu0 %1484, %v1457
        %v1486 = vpop.permute.xlu0 %1485
        %v1488 = vmul.f32 %v1486, %v290
        %v1489 = vmul.f32 %v1486, %v294
        %v1490 = vmul.f32 %v1486, %v298
        %1494 = vrot.lane.b32.xlu0 %v1488, 92
        %v1495 = vpop.permute.xlu0 %1494
        %1496 = vrot.lane.b32.xlu0 %v1489, 92
        %v1497 = vpop.permute.xlu0 %1496
        %1498 = vrot.lane.b32.xlu0 %v1490, 92
        %v1499 = vpop.permute.xlu0 %1498
        %v1500 = vsel %vm1475, %v1495, %v1497
        %v1501 = vsel %vm1475, %v1497, %v1499
        %v1505 = vadd.f32 %v1481, %v1500
        %v1506 = vadd.f32 %v1482, %v1501
        %v1507 = vadd.f32 %v1483, %v1499
        %1508 = vset.pattern.permute.xlu0 2
        %1509 = vperm.xlu0 %1508, %v1457
        %v1510 = vpop.permute.xlu0 %1509
        %v1512 = vmul.f32 %v1510, %v318
        %v1513 = vmul.f32 %v1510, %v322
        %v1514 = vmul.f32 %v1510, %v326
        %1518 = vrot.lane.b32.xlu0 %v1512, 92
        %v1519 = vpop.permute.xlu0 %1518
        %1520 = vrot.lane.b32.xlu0 %v1513, 92
        %v1521 = vpop.permute.xlu0 %1520
        %1522 = vrot.lane.b32.xlu0 %v1514, 92
        %v1523 = vpop.permute.xlu0 %1522
        %v1524 = vsel %vm1475, %v1519, %v1521
        %v1525 = vsel %vm1475, %v1521, %v1523
        %v1529 = vadd.f32 %v1505, %v1524
        %v1530 = vadd.f32 %v1506, %v1525
        %v1531 = vadd.f32 %v1507, %v1523
        %1532 = vset.pattern.permute.xlu0 3
        %1533 = vperm.xlu0 %1532, %v1457
        %v1534 = vpop.permute.xlu0 %1533
        %v1536 = vmul.f32 %v1534, %v346
        %v1537 = vmul.f32 %v1534, %v350
        %v1538 = vmul.f32 %v1534, %v354
        %1542 = vrot.lane.b32.xlu0 %v1536, 92
        %v1543 = vpop.permute.xlu0 %1542
        %1544 = vrot.lane.b32.xlu0 %v1537, 92
        %v1545 = vpop.permute.xlu0 %1544
        %1546 = vrot.lane.b32.xlu0 %v1538, 92
        %v1547 = vpop.permute.xlu0 %1546
        %v1548 = vsel %vm1475, %v1543, %v1545
        %v1549 = vsel %vm1475, %v1545, %v1547
        %v1553 = vadd.f32 %v1529, %v1548
        %v1554 = vadd.f32 %v1530, %v1549
        %v1555 = vadd.f32 %v1531, %v1547
        %1556 = vset.pattern.permute.xlu0 4
        %1557 = vperm.xlu0 %1556, %v1457
        %v1558 = vpop.permute.xlu0 %1557
        %v1560 = vmul.f32 %v1558, %v374
        %v1561 = vmul.f32 %v1558, %v378
        %v1562 = vmul.f32 %v1558, %v382
        %1566 = vrot.lane.b32.xlu0 %v1560, 92
        %v1567 = vpop.permute.xlu0 %1566
        %1568 = vrot.lane.b32.xlu0 %v1561, 92
        %v1569 = vpop.permute.xlu0 %1568
        %1570 = vrot.lane.b32.xlu0 %v1562, 92
        %v1571 = vpop.permute.xlu0 %1570
        %v1572 = vsel %vm1475, %v1567, %v1569
        %v1573 = vsel %vm1475, %v1569, %v1571
        %v1577 = vadd.f32 %v1553, %v1572
        %v1578 = vadd.f32 %v1554, %v1573
        %v1579 = vadd.f32 %v1555, %v1571
        %1580 = vset.pattern.permute.xlu0 5
        %1581 = vperm.xlu0 %1580, %v1457
        %v1582 = vpop.permute.xlu0 %1581
        %v1584 = vmul.f32 %v1582, %v402
        %v1585 = vmul.f32 %v1582, %v406
        %v1586 = vmul.f32 %v1582, %v410
        %1590 = vrot.lane.b32.xlu0 %v1584, 92
        %v1591 = vpop.permute.xlu0 %1590
        %1592 = vrot.lane.b32.xlu0 %v1585, 92
        %v1593 = vpop.permute.xlu0 %1592
        %1594 = vrot.lane.b32.xlu0 %v1586, 92
        %v1595 = vpop.permute.xlu0 %1594
        %v1596 = vsel %vm1475, %v1591, %v1593
        %v1597 = vsel %vm1475, %v1593, %v1595
        %v1601 = vadd.f32 %v1577, %v1596
        %v1602 = vadd.f32 %v1578, %v1597
        %v1603 = vadd.f32 %v1579, %v1595
        %1604 = vset.pattern.permute.xlu0 6
        %1605 = vperm.xlu0 %1604, %v1457
        %v1606 = vpop.permute.xlu0 %1605
        %v1608 = vmul.f32 %v1606, %v430
        %v1609 = vmul.f32 %v1606, %v434
        %v1610 = vmul.f32 %v1606, %v438
        %1614 = vrot.lane.b32.xlu0 %v1608, 92
        %v1615 = vpop.permute.xlu0 %1614
        %1616 = vrot.lane.b32.xlu0 %v1609, 92
        %v1617 = vpop.permute.xlu0 %1616
        %1618 = vrot.lane.b32.xlu0 %v1610, 92
        %v1619 = vpop.permute.xlu0 %1618
        %v1620 = vsel %vm1475, %v1615, %v1617
        %v1621 = vsel %vm1475, %v1617, %v1619
        %v1625 = vadd.f32 %v1601, %v1620
        %v1626 = vadd.f32 %v1602, %v1621
        %v1627 = vadd.f32 %v1603, %v1619
        %1628 = vset.pattern.permute.xlu0 7
        %1629 = vperm.xlu0 %1628, %v1457
        %v1630 = vpop.permute.xlu0 %1629
        %v1632 = vmul.f32 %v1630, %v458
        %v1633 = vmul.f32 %v1630, %v462
        %v1634 = vmul.f32 %v1630, %v466
        %1638 = vrot.lane.b32.xlu0 %v1632, 92
        %v1639 = vpop.permute.xlu0 %1638
        %1640 = vrot.lane.b32.xlu0 %v1633, 92
        %v1641 = vpop.permute.xlu0 %1640
        %1642 = vrot.lane.b32.xlu0 %v1634, 92
        %v1643 = vpop.permute.xlu0 %1642
        %v1644 = vsel %vm1475, %v1639, %v1641
        %v1645 = vsel %vm1475, %v1641, %v1643
        %v1649 = vadd.f32 %v1625, %v1644
        %v1650 = vadd.f32 %v1626, %v1645
        %v1651 = vadd.f32 %v1627, %v1643
        %s1652 = scalar_lea.vmem %s1, 56
        %v1653 = vld [vmem:[%s1652] sm:$0xff]
        %1655 = vset.pattern.permute.xlu0 0
        %1656 = vperm.xlu0 %1655, %v1653
        %v1657 = vpop.permute.xlu0 %1656
        %v1659 = vmul.f32 %v1657, %v262
        %v1660 = vmul.f32 %v1657, %v266
        %v1661 = vmul.f32 %v1657, %v270
        %1665 = vrot.lane.b32.xlu0 %v1659, 91
        %v1666 = vpop.permute.xlu0 %1665
        %1667 = vrot.lane.b32.xlu0 %v1660, 91
        %v1668 = vpop.permute.xlu0 %1667
        %1669 = vrot.lane.b32.xlu0 %v1661, 91
        %v1670 = vpop.permute.xlu0 %1669
        %vm1671 = vcmask 744448
        %v1672 = vsel %vm1671, %v1666, %v1668
        %v1673 = vsel %vm1671, %v1668, %v1670
        %v1677 = vadd.f32 %v1649, %v1672
        %v1678 = vadd.f32 %v1650, %v1673
        %v1679 = vadd.f32 %v1651, %v1670
        %1680 = vset.pattern.permute.xlu0 1
        %1681 = vperm.xlu0 %1680, %v1653
        %v1682 = vpop.permute.xlu0 %1681
        %v1684 = vmul.f32 %v1682, %v290
        %v1685 = vmul.f32 %v1682, %v294
        %v1686 = vmul.f32 %v1682, %v298
        %1690 = vrot.lane.b32.xlu0 %v1684, 91
        %v1691 = vpop.permute.xlu0 %1690
        %1692 = vrot.lane.b32.xlu0 %v1685, 91
        %v1693 = vpop.permute.xlu0 %1692
        %1694 = vrot.lane.b32.xlu0 %v1686, 91
        %v1695 = vpop.permute.xlu0 %1694
        %v1696 = vsel %vm1671, %v1691, %v1693
        %v1697 = vsel %vm1671, %v1693, %v1695
        %v1701 = vadd.f32 %v1677, %v1696
        %v1702 = vadd.f32 %v1678, %v1697
        %v1703 = vadd.f32 %v1679, %v1695
        %1704 = vset.pattern.permute.xlu0 2
        %1705 = vperm.xlu0 %1704, %v1653
        %v1706 = vpop.permute.xlu0 %1705
        %v1708 = vmul.f32 %v1706, %v318
        %v1709 = vmul.f32 %v1706, %v322
        %v1710 = vmul.f32 %v1706, %v326
        %1714 = vrot.lane.b32.xlu0 %v1708, 91
        %v1715 = vpop.permute.xlu0 %1714
        %1716 = vrot.lane.b32.xlu0 %v1709, 91
        %v1717 = vpop.permute.xlu0 %1716
        %1718 = vrot.lane.b32.xlu0 %v1710, 91
        %v1719 = vpop.permute.xlu0 %1718
        %v1720 = vsel %vm1671, %v1715, %v1717
        %v1721 = vsel %vm1671, %v1717, %v1719
        %v1725 = vadd.f32 %v1701, %v1720
        %v1726 = vadd.f32 %v1702, %v1721
        %v1727 = vadd.f32 %v1703, %v1719
        %1728 = vset.pattern.permute.xlu0 3
        %1729 = vperm.xlu0 %1728, %v1653
        %v1730 = vpop.permute.xlu0 %1729
        %v1732 = vmul.f32 %v1730, %v346
        %v1733 = vmul.f32 %v1730, %v350
        %v1734 = vmul.f32 %v1730, %v354
        %1738 = vrot.lane.b32.xlu0 %v1732, 91
        %v1739 = vpop.permute.xlu0 %1738
        %1740 = vrot.lane.b32.xlu0 %v1733, 91
        %v1741 = vpop.permute.xlu0 %1740
        %1742 = vrot.lane.b32.xlu0 %v1734, 91
        %v1743 = vpop.permute.xlu0 %1742
        %v1744 = vsel %vm1671, %v1739, %v1741
        %v1745 = vsel %vm1671, %v1741, %v1743
        %v1749 = vadd.f32 %v1725, %v1744
        %v1750 = vadd.f32 %v1726, %v1745
        %v1751 = vadd.f32 %v1727, %v1743
        %1752 = vset.pattern.permute.xlu0 4
        %1753 = vperm.xlu0 %1752, %v1653
        %v1754 = vpop.permute.xlu0 %1753
        %v1756 = vmul.f32 %v1754, %v374
        %v1757 = vmul.f32 %v1754, %v378
        %v1758 = vmul.f32 %v1754, %v382
        %1762 = vrot.lane.b32.xlu0 %v1756, 91
        %v1763 = vpop.permute.xlu0 %1762
        %1764 = vrot.lane.b32.xlu0 %v1757, 91
        %v1765 = vpop.permute.xlu0 %1764
        %1766 = vrot.lane.b32.xlu0 %v1758, 91
        %v1767 = vpop.permute.xlu0 %1766
        %v1768 = vsel %vm1671, %v1763, %v1765
        %v1769 = vsel %vm1671, %v1765, %v1767
        %v1773 = vadd.f32 %v1749, %v1768
        %v1774 = vadd.f32 %v1750, %v1769
        %v1775 = vadd.f32 %v1751, %v1767
        %1776 = vset.pattern.permute.xlu0 5
        %1777 = vperm.xlu0 %1776, %v1653
        %v1778 = vpop.permute.xlu0 %1777
        %v1780 = vmul.f32 %v1778, %v402
        %v1781 = vmul.f32 %v1778, %v406
        %v1782 = vmul.f32 %v1778, %v410
        %1786 = vrot.lane.b32.xlu0 %v1780, 91
        %v1787 = vpop.permute.xlu0 %1786
        %1788 = vrot.lane.b32.xlu0 %v1781, 91
        %v1789 = vpop.permute.xlu0 %1788
        %1790 = vrot.lane.b32.xlu0 %v1782, 91
        %v1791 = vpop.permute.xlu0 %1790
        %v1792 = vsel %vm1671, %v1787, %v1789
        %v1793 = vsel %vm1671, %v1789, %v1791
        %v1797 = vadd.f32 %v1773, %v1792
        %v1798 = vadd.f32 %v1774, %v1793
        %v1799 = vadd.f32 %v1775, %v1791
        %1800 = vset.pattern.permute.xlu0 6
        %1801 = vperm.xlu0 %1800, %v1653
        %v1802 = vpop.permute.xlu0 %1801
        %v1804 = vmul.f32 %v1802, %v430
        %v1805 = vmul.f32 %v1802, %v434
        %v1806 = vmul.f32 %v1802, %v438
        %1810 = vrot.lane.b32.xlu0 %v1804, 91
        %v1811 = vpop.permute.xlu0 %1810
        %1812 = vrot.lane.b32.xlu0 %v1805, 91
        %v1813 = vpop.permute.xlu0 %1812
        %1814 = vrot.lane.b32.xlu0 %v1806, 91
        %v1815 = vpop.permute.xlu0 %1814
        %v1816 = vsel %vm1671, %v1811, %v1813
        %v1817 = vsel %vm1671, %v1813, %v1815
        %v1821 = vadd.f32 %v1797, %v1816
        %v1822 = vadd.f32 %v1798, %v1817
        %v1823 = vadd.f32 %v1799, %v1815
        %1824 = vset.pattern.permute.xlu0 7
        %1825 = vperm.xlu0 %1824, %v1653
        %v1826 = vpop.permute.xlu0 %1825
        %v1828 = vmul.f32 %v1826, %v458
        %v1829 = vmul.f32 %v1826, %v462
        %v1830 = vmul.f32 %v1826, %v466
        %1834 = vrot.lane.b32.xlu0 %v1828, 91
        %v1835 = vpop.permute.xlu0 %1834
        %1836 = vrot.lane.b32.xlu0 %v1829, 91
        %v1837 = vpop.permute.xlu0 %1836
        %1838 = vrot.lane.b32.xlu0 %v1830, 91
        %v1839 = vpop.permute.xlu0 %1838
        %v1840 = vsel %vm1671, %v1835, %v1837
        %v1841 = vsel %vm1671, %v1837, %v1839
        %v1845 = vadd.f32 %v1821, %v1840
        %v1846 = vadd.f32 %v1822, %v1841
        %v1847 = vadd.f32 %v1823, %v1839
        %s1848 = scalar_lea.vmem %s1, 64
        %v1849 = vld [vmem:[%s1848] sm:$0xff]
        %1851 = vset.pattern.permute.xlu0 0
        %1852 = vperm.xlu0 %1851, %v1849
        %v1853 = vpop.permute.xlu0 %1852
        %v1855 = vmul.f32 %v1853, %v262
        %v1856 = vmul.f32 %v1853, %v266
        %v1857 = vmul.f32 %v1853, %v270
        %1861 = vrot.lane.b32.xlu0 %v1855, 90
        %v1862 = vpop.permute.xlu0 %1861
        %1863 = vrot.lane.b32.xlu0 %v1856, 90
        %v1864 = vpop.permute.xlu0 %1863
        %1865 = vrot.lane.b32.xlu0 %v1857, 90
        %v1866 = vpop.permute.xlu0 %1865
        %vm1867 = vcmask 736256
        %v1868 = vsel %vm1867, %v1862, %v1864
        %v1869 = vsel %vm1867, %v1864, %v1866
        %v1873 = vadd.f32 %v1845, %v1868
        %v1874 = vadd.f32 %v1846, %v1869
        %v1875 = vadd.f32 %v1847, %v1866
        %1876 = vset.pattern.permute.xlu0 1
        %1877 = vperm.xlu0 %1876, %v1849
        %v1878 = vpop.permute.xlu0 %1877
        %v1880 = vmul.f32 %v1878, %v290
        %v1881 = vmul.f32 %v1878, %v294
        %v1882 = vmul.f32 %v1878, %v298
        %1886 = vrot.lane.b32.xlu0 %v1880, 90
        %v1887 = vpop.permute.xlu0 %1886
        %1888 = vrot.lane.b32.xlu0 %v1881, 90
        %v1889 = vpop.permute.xlu0 %1888
        %1890 = vrot.lane.b32.xlu0 %v1882, 90
        %v1891 = vpop.permute.xlu0 %1890
        %v1892 = vsel %vm1867, %v1887, %v1889
        %v1893 = vsel %vm1867, %v1889, %v1891
        %v1897 = vadd.f32 %v1873, %v1892
        %v1898 = vadd.f32 %v1874, %v1893
        %v1899 = vadd.f32 %v1875, %v1891
        %1900 = vset.pattern.permute.xlu0 2
        %1901 = vperm.xlu0 %1900, %v1849
        %v1902 = vpop.permute.xlu0 %1901
        %v1904 = vmul.f32 %v1902, %v318
        %v1905 = vmul.f32 %v1902, %v322
        %v1906 = vmul.f32 %v1902, %v326
        %1910 = vrot.lane.b32.xlu0 %v1904, 90
        %v1911 = vpop.permute.xlu0 %1910
        %1912 = vrot.lane.b32.xlu0 %v1905, 90
        %v1913 = vpop.permute.xlu0 %1912
        %1914 = vrot.lane.b32.xlu0 %v1906, 90
        %v1915 = vpop.permute.xlu0 %1914
        %v1916 = vsel %vm1867, %v1911, %v1913
        %v1917 = vsel %vm1867, %v1913, %v1915
        %v1921 = vadd.f32 %v1897, %v1916
        %v1922 = vadd.f32 %v1898, %v1917
        %v1923 = vadd.f32 %v1899, %v1915
        %1924 = vset.pattern.permute.xlu0 3
        %1925 = vperm.xlu0 %1924, %v1849
        %v1926 = vpop.permute.xlu0 %1925
        %v1928 = vmul.f32 %v1926, %v346
        %v1929 = vmul.f32 %v1926, %v350
        %v1930 = vmul.f32 %v1926, %v354
        %1934 = vrot.lane.b32.xlu0 %v1928, 90
        %v1935 = vpop.permute.xlu0 %1934
        %1936 = vrot.lane.b32.xlu0 %v1929, 90
        %v1937 = vpop.permute.xlu0 %1936
        %1938 = vrot.lane.b32.xlu0 %v1930, 90
        %v1939 = vpop.permute.xlu0 %1938
        %v1940 = vsel %vm1867, %v1935, %v1937
        %v1941 = vsel %vm1867, %v1937, %v1939
        %v1945 = vadd.f32 %v1921, %v1940
        %v1946 = vadd.f32 %v1922, %v1941
        %v1947 = vadd.f32 %v1923, %v1939
        %1948 = vset.pattern.permute.xlu0 4
        %1949 = vperm.xlu0 %1948, %v1849
        %v1950 = vpop.permute.xlu0 %1949
        %v1952 = vmul.f32 %v1950, %v374
        %v1953 = vmul.f32 %v1950, %v378
        %v1954 = vmul.f32 %v1950, %v382
        %1958 = vrot.lane.b32.xlu0 %v1952, 90
        %v1959 = vpop.permute.xlu0 %1958
        %1960 = vrot.lane.b32.xlu0 %v1953, 90
        %v1961 = vpop.permute.xlu0 %1960
        %1962 = vrot.lane.b32.xlu0 %v1954, 90
        %v1963 = vpop.permute.xlu0 %1962
        %v1964 = vsel %vm1867, %v1959, %v1961
        %v1965 = vsel %vm1867, %v1961, %v1963
        %v1969 = vadd.f32 %v1945, %v1964
        %v1970 = vadd.f32 %v1946, %v1965
        %v1971 = vadd.f32 %v1947, %v1963
        %1972 = vset.pattern.permute.xlu0 5
        %1973 = vperm.xlu0 %1972, %v1849
        %v1974 = vpop.permute.xlu0 %1973
        %v1976 = vmul.f32 %v1974, %v402
        %v1977 = vmul.f32 %v1974, %v406
        %v1978 = vmul.f32 %v1974, %v410
        %1982 = vrot.lane.b32.xlu0 %v1976, 90
        %v1983 = vpop.permute.xlu0 %1982
        %1984 = vrot.lane.b32.xlu0 %v1977, 90
        %v1985 = vpop.permute.xlu0 %1984
        %1986 = vrot.lane.b32.xlu0 %v1978, 90
        %v1987 = vpop.permute.xlu0 %1986
        %v1988 = vsel %vm1867, %v1983, %v1985
        %v1989 = vsel %vm1867, %v1985, %v1987
        %v1993 = vadd.f32 %v1969, %v1988
        %v1994 = vadd.f32 %v1970, %v1989
        %v1995 = vadd.f32 %v1971, %v1987
        %1996 = vset.pattern.permute.xlu0 6
        %1997 = vperm.xlu0 %1996, %v1849
        %v1998 = vpop.permute.xlu0 %1997
        %v2000 = vmul.f32 %v1998, %v430
        %v2001 = vmul.f32 %v1998, %v434
        %v2002 = vmul.f32 %v1998, %v438
        %2006 = vrot.lane.b32.xlu0 %v2000, 90
        %v2007 = vpop.permute.xlu0 %2006
        %2008 = vrot.lane.b32.xlu0 %v2001, 90
        %v2009 = vpop.permute.xlu0 %2008
        %2010 = vrot.lane.b32.xlu0 %v2002, 90
        %v2011 = vpop.permute.xlu0 %2010
        %v2012 = vsel %vm1867, %v2007, %v2009
        %v2013 = vsel %vm1867, %v2009, %v2011
        %v2017 = vadd.f32 %v1993, %v2012
        %v2018 = vadd.f32 %v1994, %v2013
        %v2019 = vadd.f32 %v1995, %v2011
        %2020 = vset.pattern.permute.xlu0 7
        %2021 = vperm.xlu0 %2020, %v1849
        %v2022 = vpop.permute.xlu0 %2021
        %v2024 = vmul.f32 %v2022, %v458
        %v2025 = vmul.f32 %v2022, %v462
        %v2026 = vmul.f32 %v2022, %v466
        %2030 = vrot.lane.b32.xlu0 %v2024, 90
        %v2031 = vpop.permute.xlu0 %2030
        %2032 = vrot.lane.b32.xlu0 %v2025, 90
        %v2033 = vpop.permute.xlu0 %2032
        %2034 = vrot.lane.b32.xlu0 %v2026, 90
        %v2035 = vpop.permute.xlu0 %2034
        %v2036 = vsel %vm1867, %v2031, %v2033
        %v2037 = vsel %vm1867, %v2033, %v2035
        %v2041 = vadd.f32 %v2017, %v2036
        %v2042 = vadd.f32 %v2018, %v2037
        %v2043 = vadd.f32 %v2019, %v2035
        %v2044 = vld [vmem:[%s2] sm:$0xff]
        %2046 = vset.pattern.permute.xlu0 0
        %2047 = vperm.xlu0 %2046, %v2044
        %v2048 = vpop.permute.xlu0 %2047
        %v2050 = vadd.f32 %v2041, %v2048
        %v2051 = vadd.f32 %v2042, %v2048
        %v2052 = vadd.f32 %v2043, %v2048
        %v2053 = vmax.f32 %v2050, 0.0
        %v2054 = vmax.f32 %v2051, 0.0
        %v2055 = vmax.f32 %v2052, 0.0
        %v2057 = vlaneseq
        %v2058 = vshrl.u32 %v2057, 7
        %v2059 = vsub.s32 0, %v2058
        %v2060 = vrot.slane %v250, %v2059
        %v2061 = vlaneseq
        %v2062 = vshrl.u32 %v2061, 7
        %v2063 = vsub.s32 1, %v2062
        %v2064 = vrot.slane %v250, %v2063
        %v2065 = vlaneseq
        %v2066 = vshrl.u32 %v2065, 7
        %v2067 = vsub.s32 2, %v2066
        %v2068 = vrot.slane %v250, %v2067
        %v2072 = vmul.f32 %v2053, %v2060
        %v2073 = vmul.f32 %v2054, %v2064
        %v2074 = vmul.f32 %v2055, %v2068
        %2075 = vst [vmem:[#allocation2] sm:$0xff] 0.0
        %2076 = vst [vmem:[#allocation2 + $0x8] sm:$0xff] 0.0
        %vm2077 = vcmask 867328
        %2078 = vst.msk [vmem:[#allocation2 + $0x10] sm:$0xff] %vm2077, 0.0
        %2082 = vrot.lane.b32.xlu0 %v2072, 19
        %v2083 = vpop.permute.xlu0 %2082
        %2084 = vrot.lane.b32.xlu0 %v2073, 19
        %v2085 = vpop.permute.xlu0 %2084
        %2086 = vrot.lane.b32.xlu0 %v2074, 19
        %v2087 = vpop.permute.xlu0 %2086
        %vm2088 = vcmask 154624
        %v2089 = vsel %vm2088, %v2083, %v2085
        %v2090 = vsel %vm2088, %v2085, %v2087
        %vm2094 = vcmask 1047704
        %2095 = vst.msk [vmem:[#allocation2] sm:$0xff] %vm2094, %v2083
        %2096 = vst [vmem:[#allocation2 + $0x8] sm:$0xff] %v2089
        %vm2097 = vcmask 711680
        %2098 = vst.msk [vmem:[#allocation2 + $0x10] sm:$0xff] %vm2097, %v2090
        %v2099 = vld [vmem:[%s3] sm:$0xf]
        %v2100 = vld [vmem:[#allocation2] ss:$8 sm:$0x7]
        %2102 = vset.pattern.permute.xlu0 0
        %2103 = vperm.xlu0 %2102, %v2099
        %v2104 = vpop.permute.xlu0 %2103
        %v2107 = vlaneseq
        %v2108 = vshrl.u32 %v2107, 7
        %v2109 = vsub.s32 0, %v2108
        %v2110 = vrot.slane %v2100, %v2109
        %v2111 = vlaneseq
        %v2112 = vshrl.u32 %v2111, 7
        %v2113 = vsub.s32 1, %v2112
        %v2114 = vrot.slane %v2100, %v2113
        %v2115 = vlaneseq
        %v2116 = vshrl.u32 %v2115, 7
        %v2117 = vsub.s32 2, %v2116
        %v2118 = vrot.slane %v2100, %v2117
        %v2122 = vmul.f32 %v2104, %v2110
        %v2123 = vmul.f32 %v2104, %v2114
        %v2124 = vmul.f32 %v2104, %v2118
        %v2125 = vadd.f32 %v2122, 0.0
        %v2126 = vadd.f32 %v2123, 0.0
        %v2127 = vadd.f32 %v2124, 0.0
        %s2128 = scalar_lea.vmem [#allocation2], 1
        %v2129 = vld [vmem:[%s2128] ss:$8 sm:$0x7]
        %2130 = vset.pattern.permute.xlu0 1
        %2131 = vperm.xlu0 %2130, %v2099
        %v2132 = vpop.permute.xlu0 %2131
        %v2135 = vlaneseq
        %v2136 = vshrl.u32 %v2135, 7
        %v2137 = vsub.s32 0, %v2136
        %v2138 = vrot.slane %v2129, %v2137
        %v2139 = vlaneseq
        %v2140 = vshrl.u32 %v2139, 7
        %v2141 = vsub.s32 1, %v2140
        %v2142 = vrot.slane %v2129, %v2141
        %v2143 = vlaneseq
        %v2144 = vshrl.u32 %v2143, 7
        %v2145 = vsub.s32 2, %v2144
        %v2146 = vrot.slane %v2129, %v2145
        %v2150 = vmul.f32 %v2132, %v2138
        %v2151 = vmul.f32 %v2132, %v2142
        %v2152 = vmul.f32 %v2132, %v2146
        %v2153 = vadd.f32 %v2125, %v2150
        %v2154 = vadd.f32 %v2126, %v2151
        %v2155 = vadd.f32 %v2127, %v2152
        %s2156 = scalar_lea.vmem [#allocation2], 2
        %v2157 = vld [vmem:[%s2156] ss:$8 sm:$0x7]
        %2158 = vset.pattern.permute.xlu0 2
        %2159 = vperm.xlu0 %2158, %v2099
        %v2160 = vpop.permute.xlu0 %2159
        %v2163 = vlaneseq
        %v2164 = vshrl.u32 %v2163, 7
        %v2165 = vsub.s32 0, %v2164
        %v2166 = vrot.slane %v2157, %v2165
        %v2167 = vlaneseq
        %v2168 = vshrl.u32 %v2167, 7
        %v2169 = vsub.s32 1, %v2168
        %v2170 = vrot.slane %v2157, %v2169
        %v2171 = vlaneseq
        %v2172 = vshrl.u32 %v2171, 7
        %v2173 = vsub.s32 2, %v2172
        %v2174 = vrot.slane %v2157, %v2173
        %v2178 = vmul.f32 %v2160, %v2166
        %v2179 = vmul.f32 %v2160, %v2170
        %v2180 = vmul.f32 %v2160, %v2174
        %v2181 = vadd.f32 %v2153, %v2178
        %v2182 = vadd.f32 %v2154, %v2179
        %v2183 = vadd.f32 %v2155, %v2180
        %s2184 = scalar_lea.vmem [#allocation2], 3
        %v2185 = vld [vmem:[%s2184] ss:$8 sm:$0x7]
        %2186 = vset.pattern.permute.xlu0 3
        %2187 = vperm.xlu0 %2186, %v2099
        %v2188 = vpop.permute.xlu0 %2187
        %v2191 = vlaneseq
        %v2192 = vshrl.u32 %v2191, 7
        %v2193 = vsub.s32 0, %v2192
        %v2194 = vrot.slane %v2185, %v2193
        %v2195 = vlaneseq
        %v2196 = vshrl.u32 %v2195, 7
        %v2197 = vsub.s32 1, %v2196
        %v2198 = vrot.slane %v2185, %v2197
        %v2199 = vlaneseq
        %v2200 = vshrl.u32 %v2199, 7
        %v2201 = vsub.s32 2, %v2200
        %v2202 = vrot.slane %v2185, %v2201
        %v2206 = vmul.f32 %v2188, %v2194
        %v2207 = vmul.f32 %v2188, %v2198
        %v2208 = vmul.f32 %v2188, %v2202
        %v2209 = vadd.f32 %v2181, %v2206
        %v2210 = vadd.f32 %v2182, %v2207
        %v2211 = vadd.f32 %v2183, %v2208
        %s2212 = scalar_lea.vmem [#allocation2], 4
        %v2213 = vld [vmem:[%s2212] ss:$8 sm:$0x7]
        %2214 = vset.pattern.permute.xlu0 4
        %2215 = vperm.xlu0 %2214, %v2099
        %v2216 = vpop.permute.xlu0 %2215
        %v2219 = vlaneseq
        %v2220 = vshrl.u32 %v2219, 7
        %v2221 = vsub.s32 0, %v2220
        %v2222 = vrot.slane %v2213, %v2221
        %v2223 = vlaneseq
        %v2224 = vshrl.u32 %v2223, 7
        %v2225 = vsub.s32 1, %v2224
        %v2226 = vrot.slane %v2213, %v2225
        %v2227 = vlaneseq
        %v2228 = vshrl.u32 %v2227, 7
        %v2229 = vsub.s32 2, %v2228
        %v2230 = vrot.slane %v2213, %v2229
        %v2234 = vmul.f32 %v2216, %v2222
        %v2235 = vmul.f32 %v2216, %v2226
        %v2236 = vmul.f32 %v2216, %v2230
        %v2237 = vadd.f32 %v2209, %v2234
        %v2238 = vadd.f32 %v2210, %v2235
        %v2239 = vadd.f32 %v2211, %v2236
        %s2240 = scalar_lea.vmem [#allocation2], 5
        %v2241 = vld [vmem:[%s2240] ss:$8 sm:$0x7]
        %2242 = vset.pattern.permute.xlu0 5
        %2243 = vperm.xlu0 %2242, %v2099
        %v2244 = vpop.permute.xlu0 %2243
        %v2247 = vlaneseq
        %v2248 = vshrl.u32 %v2247, 7
        %v2249 = vsub.s32 0, %v2248
        %v2250 = vrot.slane %v2241, %v2249
        %v2251 = vlaneseq
        %v2252 = vshrl.u32 %v2251, 7
        %v2253 = vsub.s32 1, %v2252
        %v2254 = vrot.slane %v2241, %v2253
        %v2255 = vlaneseq
        %v2256 = vshrl.u32 %v2255, 7
        %v2257 = vsub.s32 2, %v2256
        %v2258 = vrot.slane %v2241, %v2257
        %v2262 = vmul.f32 %v2244, %v2250
        %v2263 = vmul.f32 %v2244, %v2254
        %v2264 = vmul.f32 %v2244, %v2258
        %v2265 = vadd.f32 %v2237, %v2262
        %v2266 = vadd.f32 %v2238, %v2263
        %v2267 = vadd.f32 %v2239, %v2264
        %s2268 = scalar_lea.vmem [#allocation2], 6
        %v2269 = vld [vmem:[%s2268] ss:$8 sm:$0x7]
        %2270 = vset.pattern.permute.xlu0 6
        %2271 = vperm.xlu0 %2270, %v2099
        %v2272 = vpop.permute.xlu0 %2271
        %v2275 = vlaneseq
        %v2276 = vshrl.u32 %v2275, 7
        %v2277 = vsub.s32 0, %v2276
        %v2278 = vrot.slane %v2269, %v2277
        %v2279 = vlaneseq
        %v2280 = vshrl.u32 %v2279, 7
        %v2281 = vsub.s32 1, %v2280
        %v2282 = vrot.slane %v2269, %v2281
        %v2283 = vlaneseq
        %v2284 = vshrl.u32 %v2283, 7
        %v2285 = vsub.s32 2, %v2284
        %v2286 = vrot.slane %v2269, %v2285
        %v2290 = vmul.f32 %v2272, %v2278
        %v2291 = vmul.f32 %v2272, %v2282
        %v2292 = vmul.f32 %v2272, %v2286
        %v2293 = vadd.f32 %v2265, %v2290
        %v2294 = vadd.f32 %v2266, %v2291
        %v2295 = vadd.f32 %v2267, %v2292
        %s2296 = scalar_lea.vmem [#allocation2], 7
        %v2297 = vld [vmem:[%s2296] ss:$8 sm:$0x7]
        %2298 = vset.pattern.permute.xlu0 7
        %2299 = vperm.xlu0 %2298, %v2099
        %v2300 = vpop.permute.xlu0 %2299
        %v2303 = vlaneseq
        %v2304 = vshrl.u32 %v2303, 7
        %v2305 = vsub.s32 0, %v2304
        %v2306 = vrot.slane %v2297, %v2305
        %v2307 = vlaneseq
        %v2308 = vshrl.u32 %v2307, 7
        %v2309 = vsub.s32 1, %v2308
        %v2310 = vrot.slane %v2297, %v2309
        %v2311 = vlaneseq
        %v2312 = vshrl.u32 %v2311, 7
        %v2313 = vsub.s32 2, %v2312
        %v2314 = vrot.slane %v2297, %v2313
        %v2318 = vmul.f32 %v2300, %v2306
        %v2319 = vmul.f32 %v2300, %v2310
        %v2320 = vmul.f32 %v2300, %v2314
        %v2321 = vadd.f32 %v2293, %v2318
        %v2322 = vadd.f32 %v2294, %v2319
        %v2323 = vadd.f32 %v2295, %v2320
        %s2324 = scalar_lea.vmem %s3, 4
        %v2325 = vld [vmem:[%s2324] sm:$0xf]
        %2327 = vset.pattern.permute.xlu0 0
        %2328 = vperm.xlu0 %2327, %v2325
        %v2329 = vpop.permute.xlu0 %2328
        %v2331 = vmul.f32 %v2329, %v2110
        %v2332 = vmul.f32 %v2329, %v2114
        %v2333 = vmul.f32 %v2329, %v2118
        %2337 = vrot.lane.b32.xlu0 %v2331, 127
        %v2338 = vpop.permute.xlu0 %2337
        %2339 = vrot.lane.b32.xlu0 %v2332, 127
        %v2340 = vpop.permute.xlu0 %2339
        %2341 = vrot.lane.b32.xlu0 %v2333, 127
        %v2342 = vpop.permute.xlu0 %2341
        %v2343 = vsel %vm495, %v2338, %v2340
        %v2344 = vsel %vm495, %v2340, %v2342
        %v2348 = vadd.f32 %v2321, %v2343
        %v2349 = vadd.f32 %v2322, %v2344
        %v2350 = vadd.f32 %v2323, %v2342
        %2351 = vset.pattern.permute.xlu0 1
        %2352 = vperm.xlu0 %2351, %v2325
        %v2353 = vpop.permute.xlu0 %2352
        %v2355 = vmul.f32 %v2353, %v2138
        %v2356 = vmul.f32 %v2353, %v2142
        %v2357 = vmul.f32 %v2353, %v2146
        %2361 = vrot.lane.b32.xlu0 %v2355, 127
        %v2362 = vpop.permute.xlu0 %2361
        %2363 = vrot.lane.b32.xlu0 %v2356, 127
        %v2364 = vpop.permute.xlu0 %2363
        %2365 = vrot.lane.b32.xlu0 %v2357, 127
        %v2366 = vpop.permute.xlu0 %2365
        %v2367 = vsel %vm495, %v2362, %v2364
        %v2368 = vsel %vm495, %v2364, %v2366
        %v2372 = vadd.f32 %v2348, %v2367
        %v2373 = vadd.f32 %v2349, %v2368
        %v2374 = vadd.f32 %v2350, %v2366
        %2375 = vset.pattern.permute.xlu0 2
        %2376 = vperm.xlu0 %2375, %v2325
        %v2377 = vpop.permute.xlu0 %2376
        %v2379 = vmul.f32 %v2377, %v2166
        %v2380 = vmul.f32 %v2377, %v2170
        %v2381 = vmul.f32 %v2377, %v2174
        %2385 = vrot.lane.b32.xlu0 %v2379, 127
        %v2386 = vpop.permute.xlu0 %2385
        %2387 = vrot.lane.b32.xlu0 %v2380, 127
        %v2388 = vpop.permute.xlu0 %2387
        %2389 = vrot.lane.b32.xlu0 %v2381, 127
        %v2390 = vpop.permute.xlu0 %2389
        %v2391 = vsel %vm495, %v2386, %v2388
        %v2392 = vsel %vm495, %v2388, %v2390
        %v2396 = vadd.f32 %v2372, %v2391
        %v2397 = vadd.f32 %v2373, %v2392
        %v2398 = vadd.f32 %v2374, %v2390
        %2399 = vset.pattern.permute.xlu0 3
        %2400 = vperm.xlu0 %2399, %v2325
        %v2401 = vpop.permute.xlu0 %2400
        %v2403 = vmul.f32 %v2401, %v2194
        %v2404 = vmul.f32 %v2401, %v2198
        %v2405 = vmul.f32 %v2401, %v2202
        %2409 = vrot.lane.b32.xlu0 %v2403, 127
        %v2410 = vpop.permute.xlu0 %2409
        %2411 = vrot.lane.b32.xlu0 %v2404, 127
        %v2412 = vpop.permute.xlu0 %2411
        %2413 = vrot.lane.b32.xlu0 %v2405, 127
        %v2414 = vpop.permute.xlu0 %2413
        %v2415 = vsel %vm495, %v2410, %v2412
        %v2416 = vsel %vm495, %v2412, %v2414
        %v2420 = vadd.f32 %v2396, %v2415
        %v2421 = vadd.f32 %v2397, %v2416
        %v2422 = vadd.f32 %v2398, %v2414
        %2423 = vset.pattern.permute.xlu0 4
        %2424 = vperm.xlu0 %2423, %v2325
        %v2425 = vpop.permute.xlu0 %2424
        %v2427 = vmul.f32 %v2425, %v2222
        %v2428 = vmul.f32 %v2425, %v2226
        %v2429 = vmul.f32 %v2425, %v2230
        %2433 = vrot.lane.b32.xlu0 %v2427, 127
        %v2434 = vpop.permute.xlu0 %2433
        %2435 = vrot.lane.b32.xlu0 %v2428, 127
        %v2436 = vpop.permute.xlu0 %2435
        %2437 = vrot.lane.b32.xlu0 %v2429, 127
        %v2438 = vpop.permute.xlu0 %2437
        %v2439 = vsel %vm495, %v2434, %v2436
        %v2440 = vsel %vm495, %v2436, %v2438
        %v2444 = vadd.f32 %v2420, %v2439
        %v2445 = vadd.f32 %v2421, %v2440
        %v2446 = vadd.f32 %v2422, %v2438
        %2447 = vset.pattern.permute.xlu0 5
        %2448 = vperm.xlu0 %2447, %v2325
        %v2449 = vpop.permute.xlu0 %2448
        %v2451 = vmul.f32 %v2449, %v2250
        %v2452 = vmul.f32 %v2449, %v2254
        %v2453 = vmul.f32 %v2449, %v2258
        %2457 = vrot.lane.b32.xlu0 %v2451, 127
        %v2458 = vpop.permute.xlu0 %2457
        %2459 = vrot.lane.b32.xlu0 %v2452, 127
        %v2460 = vpop.permute.xlu0 %2459
        %2461 = vrot.lane.b32.xlu0 %v2453, 127
        %v2462 = vpop.permute.xlu0 %2461
        %v2463 = vsel %vm495, %v2458, %v2460
        %v2464 = vsel %vm495, %v2460, %v2462
        %v2468 = vadd.f32 %v2444, %v2463
        %v2469 = vadd.f32 %v2445, %v2464
        %v2470 = vadd.f32 %v2446, %v2462
        %2471 = vset.pattern.permute.xlu0 6
        %2472 = vperm.xlu0 %2471, %v2325
        %v2473 = vpop.permute.xlu0 %2472
        %v2475 = vmul.f32 %v2473, %v2278
        %v2476 = vmul.f32 %v2473, %v2282
        %v2477 = vmul.f32 %v2473, %v2286
        %2481 = vrot.lane.b32.xlu0 %v2475, 127
        %v2482 = vpop.permute.xlu0 %2481
        %2483 = vrot.lane.b32.xlu0 %v2476, 127
        %v2484 = vpop.permute.xlu0 %2483
        %2485 = vrot.lane.b32.xlu0 %v2477, 127
        %v2486 = vpop.permute.xlu0 %2485
        %v2487 = vsel %vm495, %v2482, %v2484
        %v2488 = vsel %vm495, %v2484, %v2486
        %v2492 = vadd.f32 %v2468, %v2487
        %v2493 = vadd.f32 %v2469, %v2488
        %v2494 = vadd.f32 %v2470, %v2486
        %2495 = vset.pattern.permute.xlu0 7
        %2496 = vperm.xlu0 %2495, %v2325
        %v2497 = vpop.permute.xlu0 %2496
        %v2499 = vmul.f32 %v2497, %v2306
        %v2500 = vmul.f32 %v2497, %v2310
        %v2501 = vmul.f32 %v2497, %v2314
        %2505 = vrot.lane.b32.xlu0 %v2499, 127
        %v2506 = vpop.permute.xlu0 %2505
        %2507 = vrot.lane.b32.xlu0 %v2500, 127
        %v2508 = vpop.permute.xlu0 %2507
        %2509 = vrot.lane.b32.xlu0 %v2501, 127
        %v2510 = vpop.permute.xlu0 %2509
        %v2511 = vsel %vm495, %v2506, %v2508
        %v2512 = vsel %vm495, %v2508, %v2510
        %v2516 = vadd.f32 %v2492, %v2511
        %v2517 = vadd.f32 %v2493, %v2512
        %v2518 = vadd.f32 %v2494, %v2510
        %s2519 = scalar_lea.vmem %s3, 8
        %v2520 = vld [vmem:[%s2519] sm:$0xf]
        %2522 = vset.pattern.permute.xlu0 0
        %2523 = vperm.xlu0 %2522, %v2520
        %v2524 = vpop.permute.xlu0 %2523
        %v2526 = vmul.f32 %v2524, %v2110
        %v2527 = vmul.f32 %v2524, %v2114
        %v2528 = vmul.f32 %v2524, %v2118
        %2532 = vrot.lane.b32.xlu0 %v2526, 126
        %v2533 = vpop.permute.xlu0 %2532
        %2534 = vrot.lane.b32.xlu0 %v2527, 126
        %v2535 = vpop.permute.xlu0 %2534
        %2536 = vrot.lane.b32.xlu0 %v2528, 126
        %v2537 = vpop.permute.xlu0 %2536
        %v2538 = vsel %vm691, %v2533, %v2535
        %v2539 = vsel %vm691, %v2535, %v2537
        %v2543 = vadd.f32 %v2516, %v2538
        %v2544 = vadd.f32 %v2517, %v2539
        %v2545 = vadd.f32 %v2518, %v2537
        %2546 = vset.pattern.permute.xlu0 1
        %2547 = vperm.xlu0 %2546, %v2520
        %v2548 = vpop.permute.xlu0 %2547
        %v2550 = vmul.f32 %v2548, %v2138
        %v2551 = vmul.f32 %v2548, %v2142
        %v2552 = vmul.f32 %v2548, %v2146
        %2556 = vrot.lane.b32.xlu0 %v2550, 126
        %v2557 = vpop.permute.xlu0 %2556
        %2558 = vrot.lane.b32.xlu0 %v2551, 126
        %v2559 = vpop.permute.xlu0 %2558
        %2560 = vrot.lane.b32.xlu0 %v2552, 126
        %v2561 = vpop.permute.xlu0 %2560
        %v2562 = vsel %vm691, %v2557, %v2559
        %v2563 = vsel %vm691, %v2559, %v2561
        %v2567 = vadd.f32 %v2543, %v2562
        %v2568 = vadd.f32 %v2544, %v2563
        %v2569 = vadd.f32 %v2545, %v2561
        %2570 = vset.pattern.permute.xlu0 2
        %2571 = vperm.xlu0 %2570, %v2520
        %v2572 = vpop.permute.xlu0 %2571
        %v2574 = vmul.f32 %v2572, %v2166
        %v2575 = vmul.f32 %v2572, %v2170
        %v2576 = vmul.f32 %v2572, %v2174
        %2580 = vrot.lane.b32.xlu0 %v2574, 126
        %v2581 = vpop.permute.xlu0 %2580
        %2582 = vrot.lane.b32.xlu0 %v2575, 126
        %v2583 = vpop.permute.xlu0 %2582
        %2584 = vrot.lane.b32.xlu0 %v2576, 126
        %v2585 = vpop.permute.xlu0 %2584
        %v2586 = vsel %vm691, %v2581, %v2583
        %v2587 = vsel %vm691, %v2583, %v2585
        %v2591 = vadd.f32 %v2567, %v2586
        %v2592 = vadd.f32 %v2568, %v2587
        %v2593 = vadd.f32 %v2569, %v2585
        %2594 = vset.pattern.permute.xlu0 3
        %2595 = vperm.xlu0 %2594, %v2520
        %v2596 = vpop.permute.xlu0 %2595
        %v2598 = vmul.f32 %v2596, %v2194
        %v2599 = vmul.f32 %v2596, %v2198
        %v2600 = vmul.f32 %v2596, %v2202
        %2604 = vrot.lane.b32.xlu0 %v2598, 126
        %v2605 = vpop.permute.xlu0 %2604
        %2606 = vrot.lane.b32.xlu0 %v2599, 126
        %v2607 = vpop.permute.xlu0 %2606
        %2608 = vrot.lane.b32.xlu0 %v2600, 126
        %v2609 = vpop.permute.xlu0 %2608
        %v2610 = vsel %vm691, %v2605, %v2607
        %v2611 = vsel %vm691, %v2607, %v2609
        %v2615 = vadd.f32 %v2591, %v2610
        %v2616 = vadd.f32 %v2592, %v2611
        %v2617 = vadd.f32 %v2593, %v2609
        %2618 = vset.pattern.permute.xlu0 4
        %2619 = vperm.xlu0 %2618, %v2520
        %v2620 = vpop.permute.xlu0 %2619
        %v2622 = vmul.f32 %v2620, %v2222
        %v2623 = vmul.f32 %v2620, %v2226
        %v2624 = vmul.f32 %v2620, %v2230
        %2628 = vrot.lane.b32.xlu0 %v2622, 126
        %v2629 = vpop.permute.xlu0 %2628
        %2630 = vrot.lane.b32.xlu0 %v2623, 126
        %v2631 = vpop.permute.xlu0 %2630
        %2632 = vrot.lane.b32.xlu0 %v2624, 126
        %v2633 = vpop.permute.xlu0 %2632
        %v2634 = vsel %vm691, %v2629, %v2631
        %v2635 = vsel %vm691, %v2631, %v2633
        %v2639 = vadd.f32 %v2615, %v2634
        %v2640 = vadd.f32 %v2616, %v2635
        %v2641 = vadd.f32 %v2617, %v2633
        %2642 = vset.pattern.permute.xlu0 5
        %2643 = vperm.xlu0 %2642, %v2520
        %v2644 = vpop.permute.xlu0 %2643
        %v2646 = vmul.f32 %v2644, %v2250
        %v2647 = vmul.f32 %v2644, %v2254
        %v2648 = vmul.f32 %v2644, %v2258
        %2652 = vrot.lane.b32.xlu0 %v2646, 126
        %v2653 = vpop.permute.xlu0 %2652
        %2654 = vrot.lane.b32.xlu0 %v2647, 126
        %v2655 = vpop.permute.xlu0 %2654
        %2656 = vrot.lane.b32.xlu0 %v2648, 126
        %v2657 = vpop.permute.xlu0 %2656
        %v2658 = vsel %vm691, %v2653, %v2655
        %v2659 = vsel %vm691, %v2655, %v2657
        %v2663 = vadd.f32 %v2639, %v2658
        %v2664 = vadd.f32 %v2640, %v2659
        %v2665 = vadd.f32 %v2641, %v2657
        %2666 = vset.pattern.permute.xlu0 6
        %2667 = vperm.xlu0 %2666, %v2520
        %v2668 = vpop.permute.xlu0 %2667
        %v2670 = vmul.f32 %v2668, %v2278
        %v2671 = vmul.f32 %v2668, %v2282
        %v2672 = vmul.f32 %v2668, %v2286
        %2676 = vrot.lane.b32.xlu0 %v2670, 126
        %v2677 = vpop.permute.xlu0 %2676
        %2678 = vrot.lane.b32.xlu0 %v2671, 126
        %v2679 = vpop.permute.xlu0 %2678
        %2680 = vrot.lane.b32.xlu0 %v2672, 126
        %v2681 = vpop.permute.xlu0 %2680
        %v2682 = vsel %vm691, %v2677, %v2679
        %v2683 = vsel %vm691, %v2679, %v2681
        %v2687 = vadd.f32 %v2663, %v2682
        %v2688 = vadd.f32 %v2664, %v2683
        %v2689 = vadd.f32 %v2665, %v2681
        %2690 = vset.pattern.permute.xlu0 7
        %2691 = vperm.xlu0 %2690, %v2520
        %v2692 = vpop.permute.xlu0 %2691
        %v2694 = vmul.f32 %v2692, %v2306
        %v2695 = vmul.f32 %v2692, %v2310
        %v2696 = vmul.f32 %v2692, %v2314
        %2700 = vrot.lane.b32.xlu0 %v2694, 126
        %v2701 = vpop.permute.xlu0 %2700
        %2702 = vrot.lane.b32.xlu0 %v2695, 126
        %v2703 = vpop.permute.xlu0 %2702
        %2704 = vrot.lane.b32.xlu0 %v2696, 126
        %v2705 = vpop.permute.xlu0 %2704
        %v2706 = vsel %vm691, %v2701, %v2703
        %v2707 = vsel %vm691, %v2703, %v2705
        %v2711 = vadd.f32 %v2687, %v2706
        %v2712 = vadd.f32 %v2688, %v2707
        %v2713 = vadd.f32 %v2689, %v2705
        %s2714 = scalar_lea.vmem %s3, 12
        %v2715 = vld [vmem:[%s2714] sm:$0xf]
        %2717 = vset.pattern.permute.xlu0 0
        %2718 = vperm.xlu0 %2717, %v2715
        %v2719 = vpop.permute.xlu0 %2718
        %v2721 = vmul.f32 %v2719, %v2110
        %v2722 = vmul.f32 %v2719, %v2114
        %v2723 = vmul.f32 %v2719, %v2118
        %2727 = vrot.lane.b32.xlu0 %v2721, 110
        %v2728 = vpop.permute.xlu0 %2727
        %2729 = vrot.lane.b32.xlu0 %v2722, 110
        %v2730 = vpop.permute.xlu0 %2729
        %2731 = vrot.lane.b32.xlu0 %v2723, 110
        %v2732 = vpop.permute.xlu0 %2731
        %v2733 = vsel %vm887, %v2728, %v2730
        %v2734 = vsel %vm887, %v2730, %v2732
        %v2738 = vadd.f32 %v2711, %v2733
        %v2739 = vadd.f32 %v2712, %v2734
        %v2740 = vadd.f32 %v2713, %v2732
        %2741 = vset.pattern.permute.xlu0 1
        %2742 = vperm.xlu0 %2741, %v2715
        %v2743 = vpop.permute.xlu0 %2742
        %v2745 = vmul.f32 %v2743, %v2138
        %v2746 = vmul.f32 %v2743, %v2142
        %v2747 = vmul.f32 %v2743, %v2146
        %2751 = vrot.lane.b32.xlu0 %v2745, 110
        %v2752 = vpop.permute.xlu0 %2751
        %2753 = vrot.lane.b32.xlu0 %v2746, 110
        %v2754 = vpop.permute.xlu0 %2753
        %2755 = vrot.lane.b32.xlu0 %v2747, 110
        %v2756 = vpop.permute.xlu0 %2755
        %v2757 = vsel %vm887, %v2752, %v2754
        %v2758 = vsel %vm887, %v2754, %v2756
        %v2762 = vadd.f32 %v2738, %v2757
        %v2763 = vadd.f32 %v2739, %v2758
        %v2764 = vadd.f32 %v2740, %v2756
        %2765 = vset.pattern.permute.xlu0 2
        %2766 = vperm.xlu0 %2765, %v2715
        %v2767 = vpop.permute.xlu0 %2766
        %v2769 = vmul.f32 %v2767, %v2166
        %v2770 = vmul.f32 %v2767, %v2170
        %v2771 = vmul.f32 %v2767, %v2174
        %2775 = vrot.lane.b32.xlu0 %v2769, 110
        %v2776 = vpop.permute.xlu0 %2775
        %2777 = vrot.lane.b32.xlu0 %v2770, 110
        %v2778 = vpop.permute.xlu0 %2777
        %2779 = vrot.lane.b32.xlu0 %v2771, 110
        %v2780 = vpop.permute.xlu0 %2779
        %v2781 = vsel %vm887, %v2776, %v2778
        %v2782 = vsel %vm887, %v2778, %v2780
        %v2786 = vadd.f32 %v2762, %v2781
        %v2787 = vadd.f32 %v2763, %v2782
        %v2788 = vadd.f32 %v2764, %v2780
        %2789 = vset.pattern.permute.xlu0 3
        %2790 = vperm.xlu0 %2789, %v2715
        %v2791 = vpop.permute.xlu0 %2790
        %v2793 = vmul.f32 %v2791, %v2194
        %v2794 = vmul.f32 %v2791, %v2198
        %v2795 = vmul.f32 %v2791, %v2202
        %2799 = vrot.lane.b32.xlu0 %v2793, 110
        %v2800 = vpop.permute.xlu0 %2799
        %2801 = vrot.lane.b32.xlu0 %v2794, 110
        %v2802 = vpop.permute.xlu0 %2801
        %2803 = vrot.lane.b32.xlu0 %v2795, 110
        %v2804 = vpop.permute.xlu0 %2803
        %v2805 = vsel %vm887, %v2800, %v2802
        %v2806 = vsel %vm887, %v2802, %v2804
        %v2810 = vadd.f32 %v2786, %v2805
        %v2811 = vadd.f32 %v2787, %v2806
        %v2812 = vadd.f32 %v2788, %v2804
        %2813 = vset.pattern.permute.xlu0 4
        %2814 = vperm.xlu0 %2813, %v2715
        %v2815 = vpop.permute.xlu0 %2814
        %v2817 = vmul.f32 %v2815, %v2222
        %v2818 = vmul.f32 %v2815, %v2226
        %v2819 = vmul.f32 %v2815, %v2230
        %2823 = vrot.lane.b32.xlu0 %v2817, 110
        %v2824 = vpop.permute.xlu0 %2823
        %2825 = vrot.lane.b32.xlu0 %v2818, 110
        %v2826 = vpop.permute.xlu0 %2825
        %2827 = vrot.lane.b32.xlu0 %v2819, 110
        %v2828 = vpop.permute.xlu0 %2827
        %v2829 = vsel %vm887, %v2824, %v2826
        %v2830 = vsel %vm887, %v2826, %v2828
        %v2834 = vadd.f32 %v2810, %v2829
        %v2835 = vadd.f32 %v2811, %v2830
        %v2836 = vadd.f32 %v2812, %v2828
        %2837 = vset.pattern.permute.xlu0 5
        %2838 = vperm.xlu0 %2837, %v2715
        %v2839 = vpop.permute.xlu0 %2838
        %v2841 = vmul.f32 %v2839, %v2250
        %v2842 = vmul.f32 %v2839, %v2254
        %v2843 = vmul.f32 %v2839, %v2258
        %2847 = vrot.lane.b32.xlu0 %v2841, 110
        %v2848 = vpop.permute.xlu0 %2847
        %2849 = vrot.lane.b32.xlu0 %v2842, 110
        %v2850 = vpop.permute.xlu0 %2849
        %2851 = vrot.lane.b32.xlu0 %v2843, 110
        %v2852 = vpop.permute.xlu0 %2851
        %v2853 = vsel %vm887, %v2848, %v2850
        %v2854 = vsel %vm887, %v2850, %v2852
        %v2858 = vadd.f32 %v2834, %v2853
        %v2859 = vadd.f32 %v2835, %v2854
        %v2860 = vadd.f32 %v2836, %v2852
        %2861 = vset.pattern.permute.xlu0 6
        %2862 = vperm.xlu0 %2861, %v2715
        %v2863 = vpop.permute.xlu0 %2862
        %v2865 = vmul.f32 %v2863, %v2278
        %v2866 = vmul.f32 %v2863, %v2282
        %v2867 = vmul.f32 %v2863, %v2286
        %2871 = vrot.lane.b32.xlu0 %v2865, 110
        %v2872 = vpop.permute.xlu0 %2871
        %2873 = vrot.lane.b32.xlu0 %v2866, 110
        %v2874 = vpop.permute.xlu0 %2873
        %2875 = vrot.lane.b32.xlu0 %v2867, 110
        %v2876 = vpop.permute.xlu0 %2875
        %v2877 = vsel %vm887, %v2872, %v2874
        %v2878 = vsel %vm887, %v2874, %v2876
        %v2882 = vadd.f32 %v2858, %v2877
        %v2883 = vadd.f32 %v2859, %v2878
        %v2884 = vadd.f32 %v2860, %v2876
        %2885 = vset.pattern.permute.xlu0 7
        %2886 = vperm.xlu0 %2885, %v2715
        %v2887 = vpop.permute.xlu0 %2886
        %v2889 = vmul.f32 %v2887, %v2306
        %v2890 = vmul.f32 %v2887, %v2310
        %v2891 = vmul.f32 %v2887, %v2314
        %2895 = vrot.lane.b32.xlu0 %v2889, 110
        %v2896 = vpop.permute.xlu0 %2895
        %2897 = vrot.lane.b32.xlu0 %v2890, 110
        %v2898 = vpop.permute.xlu0 %2897
        %2899 = vrot.lane.b32.xlu0 %v2891, 110
        %v2900 = vpop.permute.xlu0 %2899
        %v2901 = vsel %vm887, %v2896, %v2898
        %v2902 = vsel %vm887, %v2898, %v2900
        %v2906 = vadd.f32 %v2882, %v2901
        %v2907 = vadd.f32 %v2883, %v2902
        %v2908 = vadd.f32 %v2884, %v2900
        %s2909 = scalar_lea.vmem %s3, 16
        %v2910 = vld [vmem:[%s2909] sm:$0xf]
        %2912 = vset.pattern.permute.xlu0 0
        %2913 = vperm.xlu0 %2912, %v2910
        %v2914 = vpop.permute.xlu0 %2913
        %v2916 = vmul.f32 %v2914, %v2110
        %v2917 = vmul.f32 %v2914, %v2114
        %v2918 = vmul.f32 %v2914, %v2118
        %2922 = vrot.lane.b32.xlu0 %v2916, 109
        %v2923 = vpop.permute.xlu0 %2922
        %2924 = vrot.lane.b32.xlu0 %v2917, 109
        %v2925 = vpop.permute.xlu0 %2924
        %2926 = vrot.lane.b32.xlu0 %v2918, 109
        %v2927 = vpop.permute.xlu0 %2926
        %v2928 = vsel %vm1083, %v2923, %v2925
        %v2929 = vsel %vm1083, %v2925, %v2927
        %v2933 = vadd.f32 %v2906, %v2928
        %v2934 = vadd.f32 %v2907, %v2929
        %v2935 = vadd.f32 %v2908, %v2927
        %2936 = vset.pattern.permute.xlu0 1
        %2937 = vperm.xlu0 %2936, %v2910
        %v2938 = vpop.permute.xlu0 %2937
        %v2940 = vmul.f32 %v2938, %v2138
        %v2941 = vmul.f32 %v2938, %v2142
        %v2942 = vmul.f32 %v2938, %v2146
        %2946 = vrot.lane.b32.xlu0 %v2940, 109
        %v2947 = vpop.permute.xlu0 %2946
        %2948 = vrot.lane.b32.xlu0 %v2941, 109
        %v2949 = vpop.permute.xlu0 %2948
        %2950 = vrot.lane.b32.xlu0 %v2942, 109
        %v2951 = vpop.permute.xlu0 %2950
        %v2952 = vsel %vm1083, %v2947, %v2949
        %v2953 = vsel %vm1083, %v2949, %v2951
        %v2957 = vadd.f32 %v2933, %v2952
        %v2958 = vadd.f32 %v2934, %v2953
        %v2959 = vadd.f32 %v2935, %v2951
        %2960 = vset.pattern.permute.xlu0 2
        %2961 = vperm.xlu0 %2960, %v2910
        %v2962 = vpop.permute.xlu0 %2961
        %v2964 = vmul.f32 %v2962, %v2166
        %v2965 = vmul.f32 %v2962, %v2170
        %v2966 = vmul.f32 %v2962, %v2174
        %2970 = vrot.lane.b32.xlu0 %v2964, 109
        %v2971 = vpop.permute.xlu0 %2970
        %2972 = vrot.lane.b32.xlu0 %v2965, 109
        %v2973 = vpop.permute.xlu0 %2972
        %2974 = vrot.lane.b32.xlu0 %v2966, 109
        %v2975 = vpop.permute.xlu0 %2974
        %v2976 = vsel %vm1083, %v2971, %v2973
        %v2977 = vsel %vm1083, %v2973, %v2975
        %v2981 = vadd.f32 %v2957, %v2976
        %v2982 = vadd.f32 %v2958, %v2977
        %v2983 = vadd.f32 %v2959, %v2975
        %2984 = vset.pattern.permute.xlu0 3
        %2985 = vperm.xlu0 %2984, %v2910
        %v2986 = vpop.permute.xlu0 %2985
        %v2988 = vmul.f32 %v2986, %v2194
        %v2989 = vmul.f32 %v2986, %v2198
        %v2990 = vmul.f32 %v2986, %v2202
        %2994 = vrot.lane.b32.xlu0 %v2988, 109
        %v2995 = vpop.permute.xlu0 %2994
        %2996 = vrot.lane.b32.xlu0 %v2989, 109
        %v2997 = vpop.permute.xlu0 %2996
        %2998 = vrot.lane.b32.xlu0 %v2990, 109
        %v2999 = vpop.permute.xlu0 %2998
        %v3000 = vsel %vm1083, %v2995, %v2997
        %v3001 = vsel %vm1083, %v2997, %v2999
        %v3005 = vadd.f32 %v2981, %v3000
        %v3006 = vadd.f32 %v2982, %v3001
        %v3007 = vadd.f32 %v2983, %v2999
        %3008 = vset.pattern.permute.xlu0 4
        %3009 = vperm.xlu0 %3008, %v2910
        %v3010 = vpop.permute.xlu0 %3009
        %v3012 = vmul.f32 %v3010, %v2222
        %v3013 = vmul.f32 %v3010, %v2226
        %v3014 = vmul.f32 %v3010, %v2230
        %3018 = vrot.lane.b32.xlu0 %v3012, 109
        %v3019 = vpop.permute.xlu0 %3018
        %3020 = vrot.lane.b32.xlu0 %v3013, 109
        %v3021 = vpop.permute.xlu0 %3020
        %3022 = vrot.lane.b32.xlu0 %v3014, 109
        %v3023 = vpop.permute.xlu0 %3022
        %v3024 = vsel %vm1083, %v3019, %v3021
        %v3025 = vsel %vm1083, %v3021, %v3023
        %v3029 = vadd.f32 %v3005, %v3024
        %v3030 = vadd.f32 %v3006, %v3025
        %v3031 = vadd.f32 %v3007, %v3023
        %3032 = vset.pattern.permute.xlu0 5
        %3033 = vperm.xlu0 %3032, %v2910
        %v3034 = vpop.permute.xlu0 %3033
        %v3036 = vmul.f32 %v3034, %v2250
        %v3037 = vmul.f32 %v3034, %v2254
        %v3038 = vmul.f32 %v3034, %v2258
        %3042 = vrot.lane.b32.xlu0 %v3036, 109
        %v3043 = vpop.permute.xlu0 %3042
        %3044 = vrot.lane.b32.xlu0 %v3037, 109
        %v3045 = vpop.permute.xlu0 %3044
        %3046 = vrot.lane.b32.xlu0 %v3038, 109
        %v3047 = vpop.permute.xlu0 %3046
        %v3048 = vsel %vm1083, %v3043, %v3045
        %v3049 = vsel %vm1083, %v3045, %v3047
        %v3053 = vadd.f32 %v3029, %v3048
        %v3054 = vadd.f32 %v3030, %v3049
        %v3055 = vadd.f32 %v3031, %v3047
        %3056 = vset.pattern.permute.xlu0 6
        %3057 = vperm.xlu0 %3056, %v2910
        %v3058 = vpop.permute.xlu0 %3057
        %v3060 = vmul.f32 %v3058, %v2278
        %v3061 = vmul.f32 %v3058, %v2282
        %v3062 = vmul.f32 %v3058, %v2286
        %3066 = vrot.lane.b32.xlu0 %v3060, 109
        %v3067 = vpop.permute.xlu0 %3066
        %3068 = vrot.lane.b32.xlu0 %v3061, 109
        %v3069 = vpop.permute.xlu0 %3068
        %3070 = vrot.lane.b32.xlu0 %v3062, 109
        %v3071 = vpop.permute.xlu0 %3070
        %v3072 = vsel %vm1083, %v3067, %v3069
        %v3073 = vsel %vm1083, %v3069, %v3071
        %v3077 = vadd.f32 %v3053, %v3072
        %v3078 = vadd.f32 %v3054, %v3073
        %v3079 = vadd.f32 %v3055, %v3071
        %3080 = vset.pattern.permute.xlu0 7
        %3081 = vperm.xlu0 %3080, %v2910
        %v3082 = vpop.permute.xlu0 %3081
        %v3084 = vmul.f32 %v3082, %v2306
        %v3085 = vmul.f32 %v3082, %v2310
        %v3086 = vmul.f32 %v3082, %v2314
        %3090 = vrot.lane.b32.xlu0 %v3084, 109
        %v3091 = vpop.permute.xlu0 %3090
        %3092 = vrot.lane.b32.xlu0 %v3085, 109
        %v3093 = vpop.permute.xlu0 %3092
        %3094 = vrot.lane.b32.xlu0 %v3086, 109
        %v3095 = vpop.permute.xlu0 %3094
        %v3096 = vsel %vm1083, %v3091, %v3093
        %v3097 = vsel %vm1083, %v3093, %v3095
        %v3101 = vadd.f32 %v3077, %v3096
        %v3102 = vadd.f32 %v3078, %v3097
        %v3103 = vadd.f32 %v3079, %v3095
        %s3104 = scalar_lea.vmem %s3, 20
        %v3105 = vld [vmem:[%s3104] sm:$0xf]
        %3107 = vset.pattern.permute.xlu0 0
        %3108 = vperm.xlu0 %3107, %v3105
        %v3109 = vpop.permute.xlu0 %3108
        %v3111 = vmul.f32 %v3109, %v2110
        %v3112 = vmul.f32 %v3109, %v2114
        %v3113 = vmul.f32 %v3109, %v2118
        %3117 = vrot.lane.b32.xlu0 %v3111, 108
        %v3118 = vpop.permute.xlu0 %3117
        %3119 = vrot.lane.b32.xlu0 %v3112, 108
        %v3120 = vpop.permute.xlu0 %3119
        %3121 = vrot.lane.b32.xlu0 %v3113, 108
        %v3122 = vpop.permute.xlu0 %3121
        %v3123 = vsel %vm1279, %v3118, %v3120
        %v3124 = vsel %vm1279, %v3120, %v3122
        %v3128 = vadd.f32 %v3101, %v3123
        %v3129 = vadd.f32 %v3102, %v3124
        %v3130 = vadd.f32 %v3103, %v3122
        %3131 = vset.pattern.permute.xlu0 1
        %3132 = vperm.xlu0 %3131, %v3105
        %v3133 = vpop.permute.xlu0 %3132
        %v3135 = vmul.f32 %v3133, %v2138
        %v3136 = vmul.f32 %v3133, %v2142
        %v3137 = vmul.f32 %v3133, %v2146
        %3141 = vrot.lane.b32.xlu0 %v3135, 108
        %v3142 = vpop.permute.xlu0 %3141
        %3143 = vrot.lane.b32.xlu0 %v3136, 108
        %v3144 = vpop.permute.xlu0 %3143
        %3145 = vrot.lane.b32.xlu0 %v3137, 108
        %v3146 = vpop.permute.xlu0 %3145
        %v3147 = vsel %vm1279, %v3142, %v3144
        %v3148 = vsel %vm1279, %v3144, %v3146
        %v3152 = vadd.f32 %v3128, %v3147
        %v3153 = vadd.f32 %v3129, %v3148
        %v3154 = vadd.f32 %v3130, %v3146
        %3155 = vset.pattern.permute.xlu0 2
        %3156 = vperm.xlu0 %3155, %v3105
        %v3157 = vpop.permute.xlu0 %3156
        %v3159 = vmul.f32 %v3157, %v2166
        %v3160 = vmul.f32 %v3157, %v2170
        %v3161 = vmul.f32 %v3157, %v2174
        %3165 = vrot.lane.b32.xlu0 %v3159, 108
        %v3166 = vpop.permute.xlu0 %3165
        %3167 = vrot.lane.b32.xlu0 %v3160, 108
        %v3168 = vpop.permute.xlu0 %3167
        %3169 = vrot.lane.b32.xlu0 %v3161, 108
        %v3170 = vpop.permute.xlu0 %3169
        %v3171 = vsel %vm1279, %v3166, %v3168
        %v3172 = vsel %vm1279, %v3168, %v3170
        %v3176 = vadd.f32 %v3152, %v3171
        %v3177 = vadd.f32 %v3153, %v3172
        %v3178 = vadd.f32 %v3154, %v3170
        %3179 = vset.pattern.permute.xlu0 3
        %3180 = vperm.xlu0 %3179, %v3105
        %v3181 = vpop.permute.xlu0 %3180
        %v3183 = vmul.f32 %v3181, %v2194
        %v3184 = vmul.f32 %v3181, %v2198
        %v3185 = vmul.f32 %v3181, %v2202
        %3189 = vrot.lane.b32.xlu0 %v3183, 108
        %v3190 = vpop.permute.xlu0 %3189
        %3191 = vrot.lane.b32.xlu0 %v3184, 108
        %v3192 = vpop.permute.xlu0 %3191
        %3193 = vrot.lane.b32.xlu0 %v3185, 108
        %v3194 = vpop.permute.xlu0 %3193
        %v3195 = vsel %vm1279, %v3190, %v3192
        %v3196 = vsel %vm1279, %v3192, %v3194
        %v3200 = vadd.f32 %v3176, %v3195
        %v3201 = vadd.f32 %v3177, %v3196
        %v3202 = vadd.f32 %v3178, %v3194
        %3203 = vset.pattern.permute.xlu0 4
        %3204 = vperm.xlu0 %3203, %v3105
        %v3205 = vpop.permute.xlu0 %3204
        %v3207 = vmul.f32 %v3205, %v2222
        %v3208 = vmul.f32 %v3205, %v2226
        %v3209 = vmul.f32 %v3205, %v2230
        %3213 = vrot.lane.b32.xlu0 %v3207, 108
        %v3214 = vpop.permute.xlu0 %3213
        %3215 = vrot.lane.b32.xlu0 %v3208, 108
        %v3216 = vpop.permute.xlu0 %3215
        %3217 = vrot.lane.b32.xlu0 %v3209, 108
        %v3218 = vpop.permute.xlu0 %3217
        %v3219 = vsel %vm1279, %v3214, %v3216
        %v3220 = vsel %vm1279, %v3216, %v3218
        %v3224 = vadd.f32 %v3200, %v3219
        %v3225 = vadd.f32 %v3201, %v3220
        %v3226 = vadd.f32 %v3202, %v3218
        %3227 = vset.pattern.permute.xlu0 5
        %3228 = vperm.xlu0 %3227, %v3105
        %v3229 = vpop.permute.xlu0 %3228
        %v3231 = vmul.f32 %v3229, %v2250
        %v3232 = vmul.f32 %v3229, %v2254
        %v3233 = vmul.f32 %v3229, %v2258
        %3237 = vrot.lane.b32.xlu0 %v3231, 108
        %v3238 = vpop.permute.xlu0 %3237
        %3239 = vrot.lane.b32.xlu0 %v3232, 108
        %v3240 = vpop.permute.xlu0 %3239
        %3241 = vrot.lane.b32.xlu0 %v3233, 108
        %v3242 = vpop.permute.xlu0 %3241
        %v3243 = vsel %vm1279, %v3238, %v3240
        %v3244 = vsel %vm1279, %v3240, %v3242
        %v3248 = vadd.f32 %v3224, %v3243
        %v3249 = vadd.f32 %v3225, %v3244
        %v3250 = vadd.f32 %v3226, %v3242
        %3251 = vset.pattern.permute.xlu0 6
        %3252 = vperm.xlu0 %3251, %v3105
        %v3253 = vpop.permute.xlu0 %3252
        %v3255 = vmul.f32 %v3253, %v2278
        %v3256 = vmul.f32 %v3253, %v2282
        %v3257 = vmul.f32 %v3253, %v2286
        %3261 = vrot.lane.b32.xlu0 %v3255, 108
        %v3262 = vpop.permute.xlu0 %3261
        %3263 = vrot.lane.b32.xlu0 %v3256, 108
        %v3264 = vpop.permute.xlu0 %3263
        %3265 = vrot.lane.b32.xlu0 %v3257, 108
        %v3266 = vpop.permute.xlu0 %3265
        %v3267 = vsel %vm1279, %v3262, %v3264
        %v3268 = vsel %vm1279, %v3264, %v3266
        %v3272 = vadd.f32 %v3248, %v3267
        %v3273 = vadd.f32 %v3249, %v3268
        %v3274 = vadd.f32 %v3250, %v3266
        %3275 = vset.pattern.permute.xlu0 7
        %3276 = vperm.xlu0 %3275, %v3105
        %v3277 = vpop.permute.xlu0 %3276
        %v3279 = vmul.f32 %v3277, %v2306
        %v3280 = vmul.f32 %v3277, %v2310
        %v3281 = vmul.f32 %v3277, %v2314
        %3285 = vrot.lane.b32.xlu0 %v3279, 108
        %v3286 = vpop.permute.xlu0 %3285
        %3287 = vrot.lane.b32.xlu0 %v3280, 108
        %v3288 = vpop.permute.xlu0 %3287
        %3289 = vrot.lane.b32.xlu0 %v3281, 108
        %v3290 = vpop.permute.xlu0 %3289
        %v3291 = vsel %vm1279, %v3286, %v3288
        %v3292 = vsel %vm1279, %v3288, %v3290
        %v3296 = vadd.f32 %v3272, %v3291
        %v3297 = vadd.f32 %v3273, %v3292
        %v3298 = vadd.f32 %v3274, %v3290
        %s3299 = scalar_lea.vmem %s3, 24
        %v3300 = vld [vmem:[%s3299] sm:$0xf]
        %3302 = vset.pattern.permute.xlu0 0
        %3303 = vperm.xlu0 %3302, %v3300
        %v3304 = vpop.permute.xlu0 %3303
        %v3306 = vmul.f32 %v3304, %v2110
        %v3307 = vmul.f32 %v3304, %v2114
        %v3308 = vmul.f32 %v3304, %v2118
        %3312 = vrot.lane.b32.xlu0 %v3306, 92
        %v3313 = vpop.permute.xlu0 %3312
        %3314 = vrot.lane.b32.xlu0 %v3307, 92
        %v3315 = vpop.permute.xlu0 %3314
        %3316 = vrot.lane.b32.xlu0 %v3308, 92
        %v3317 = vpop.permute.xlu0 %3316
        %v3318 = vsel %vm1475, %v3313, %v3315
        %v3319 = vsel %vm1475, %v3315, %v3317
        %v3323 = vadd.f32 %v3296, %v3318
        %v3324 = vadd.f32 %v3297, %v3319
        %v3325 = vadd.f32 %v3298, %v3317
        %3326 = vset.pattern.permute.xlu0 1
        %3327 = vperm.xlu0 %3326, %v3300
        %v3328 = vpop.permute.xlu0 %3327
        %v3330 = vmul.f32 %v3328, %v2138
        %v3331 = vmul.f32 %v3328, %v2142
        %v3332 = vmul.f32 %v3328, %v2146
        %3336 = vrot.lane.b32.xlu0 %v3330, 92
        %v3337 = vpop.permute.xlu0 %3336
        %3338 = vrot.lane.b32.xlu0 %v3331, 92
        %v3339 = vpop.permute.xlu0 %3338
        %3340 = vrot.lane.b32.xlu0 %v3332, 92
        %v3341 = vpop.permute.xlu0 %3340
        %v3342 = vsel %vm1475, %v3337, %v3339
        %v3343 = vsel %vm1475, %v3339, %v3341
        %v3347 = vadd.f32 %v3323, %v3342
        %v3348 = vadd.f32 %v3324, %v3343
        %v3349 = vadd.f32 %v3325, %v3341
        %3350 = vset.pattern.permute.xlu0 2
        %3351 = vperm.xlu0 %3350, %v3300
        %v3352 = vpop.permute.xlu0 %3351
        %v3354 = vmul.f32 %v3352, %v2166
        %v3355 = vmul.f32 %v3352, %v2170
        %v3356 = vmul.f32 %v3352, %v2174
        %3360 = vrot.lane.b32.xlu0 %v3354, 92
        %v3361 = vpop.permute.xlu0 %3360
        %3362 = vrot.lane.b32.xlu0 %v3355, 92
        %v3363 = vpop.permute.xlu0 %3362
        %3364 = vrot.lane.b32.xlu0 %v3356, 92
        %v3365 = vpop.permute.xlu0 %3364
        %v3366 = vsel %vm1475, %v3361, %v3363
        %v3367 = vsel %vm1475, %v3363, %v3365
        %v3371 = vadd.f32 %v3347, %v3366
        %v3372 = vadd.f32 %v3348, %v3367
        %v3373 = vadd.f32 %v3349, %v3365
        %3374 = vset.pattern.permute.xlu0 3
        %3375 = vperm.xlu0 %3374, %v3300
        %v3376 = vpop.permute.xlu0 %3375
        %v3378 = vmul.f32 %v3376, %v2194
        %v3379 = vmul.f32 %v3376, %v2198
        %v3380 = vmul.f32 %v3376, %v2202
        %3384 = vrot.lane.b32.xlu0 %v3378, 92
        %v3385 = vpop.permute.xlu0 %3384
        %3386 = vrot.lane.b32.xlu0 %v3379, 92
        %v3387 = vpop.permute.xlu0 %3386
        %3388 = vrot.lane.b32.xlu0 %v3380, 92
        %v3389 = vpop.permute.xlu0 %3388
        %v3390 = vsel %vm1475, %v3385, %v3387
        %v3391 = vsel %vm1475, %v3387, %v3389
        %v3395 = vadd.f32 %v3371, %v3390
        %v3396 = vadd.f32 %v3372, %v3391
        %v3397 = vadd.f32 %v3373, %v3389
        %3398 = vset.pattern.permute.xlu0 4
        %3399 = vperm.xlu0 %3398, %v3300
        %v3400 = vpop.permute.xlu0 %3399
        %v3402 = vmul.f32 %v3400, %v2222
        %v3403 = vmul.f32 %v3400, %v2226
        %v3404 = vmul.f32 %v3400, %v2230
        %3408 = vrot.lane.b32.xlu0 %v3402, 92
        %v3409 = vpop.permute.xlu0 %3408
        %3410 = vrot.lane.b32.xlu0 %v3403, 92
        %v3411 = vpop.permute.xlu0 %3410
        %3412 = vrot.lane.b32.xlu0 %v3404, 92
        %v3413 = vpop.permute.xlu0 %3412
        %v3414 = vsel %vm1475, %v3409, %v3411
        %v3415 = vsel %vm1475, %v3411, %v3413
        %v3419 = vadd.f32 %v3395, %v3414
        %v3420 = vadd.f32 %v3396, %v3415
        %v3421 = vadd.f32 %v3397, %v3413
        %3422 = vset.pattern.permute.xlu0 5
        %3423 = vperm.xlu0 %3422, %v3300
        %v3424 = vpop.permute.xlu0 %3423
        %v3426 = vmul.f32 %v3424, %v2250
        %v3427 = vmul.f32 %v3424, %v2254
        %v3428 = vmul.f32 %v3424, %v2258
        %3432 = vrot.lane.b32.xlu0 %v3426, 92
        %v3433 = vpop.permute.xlu0 %3432
        %3434 = vrot.lane.b32.xlu0 %v3427, 92
        %v3435 = vpop.permute.xlu0 %3434
        %3436 = vrot.lane.b32.xlu0 %v3428, 92
        %v3437 = vpop.permute.xlu0 %3436
        %v3438 = vsel %vm1475, %v3433, %v3435
        %v3439 = vsel %vm1475, %v3435, %v3437
        %v3443 = vadd.f32 %v3419, %v3438
        %v3444 = vadd.f32 %v3420, %v3439
        %v3445 = vadd.f32 %v3421, %v3437
        %3446 = vset.pattern.permute.xlu0 6
        %3447 = vperm.xlu0 %3446, %v3300
        %v3448 = vpop.permute.xlu0 %3447
        %v3450 = vmul.f32 %v3448, %v2278
        %v3451 = vmul.f32 %v3448, %v2282
        %v3452 = vmul.f32 %v3448, %v2286
        %3456 = vrot.lane.b32.xlu0 %v3450, 92
        %v3457 = vpop.permute.xlu0 %3456
        %3458 = vrot.lane.b32.xlu0 %v3451, 92
        %v3459 = vpop.permute.xlu0 %3458
        %3460 = vrot.lane.b32.xlu0 %v3452, 92
        %v3461 = vpop.permute.xlu0 %3460
        %v3462 = vsel %vm1475, %v3457, %v3459
        %v3463 = vsel %vm1475, %v3459, %v3461
        %v3467 = vadd.f32 %v3443, %v3462
        %v3468 = vadd.f32 %v3444, %v3463
        %v3469 = vadd.f32 %v3445, %v3461
        %3470 = vset.pattern.permute.xlu0 7
        %3471 = vperm.xlu0 %3470, %v3300
        %v3472 = vpop.permute.xlu0 %3471
        %v3474 = vmul.f32 %v3472, %v2306
        %v3475 = vmul.f32 %v3472, %v2310
        %v3476 = vmul.f32 %v3472, %v2314
        %3480 = vrot.lane.b32.xlu0 %v3474, 92
        %v3481 = vpop.permute.xlu0 %3480
        %3482 = vrot.lane.b32.xlu0 %v3475, 92
        %v3483 = vpop.permute.xlu0 %3482
        %3484 = vrot.lane.b32.xlu0 %v3476, 92
        %v3485 = vpop.permute.xlu0 %3484
        %v3486 = vsel %vm1475, %v3481, %v3483
        %v3487 = vsel %vm1475, %v3483, %v3485
        %v3491 = vadd.f32 %v3467, %v3486
        %v3492 = vadd.f32 %v3468, %v3487
        %v3493 = vadd.f32 %v3469, %v3485
        %s3494 = scalar_lea.vmem %s3, 28
        %v3495 = vld [vmem:[%s3494] sm:$0xf]
        %3497 = vset.pattern.permute.xlu0 0
        %3498 = vperm.xlu0 %3497, %v3495
        %v3499 = vpop.permute.xlu0 %3498
        %v3501 = vmul.f32 %v3499, %v2110
        %v3502 = vmul.f32 %v3499, %v2114
        %v3503 = vmul.f32 %v3499, %v2118
        %3507 = vrot.lane.b32.xlu0 %v3501, 91
        %v3508 = vpop.permute.xlu0 %3507
        %3509 = vrot.lane.b32.xlu0 %v3502, 91
        %v3510 = vpop.permute.xlu0 %3509
        %3511 = vrot.lane.b32.xlu0 %v3503, 91
        %v3512 = vpop.permute.xlu0 %3511
        %v3513 = vsel %vm1671, %v3508, %v3510
        %v3514 = vsel %vm1671, %v3510, %v3512
        %v3518 = vadd.f32 %v3491, %v3513
        %v3519 = vadd.f32 %v3492, %v3514
        %v3520 = vadd.f32 %v3493, %v3512
        %3521 = vset.pattern.permute.xlu0 1
        %3522 = vperm.xlu0 %3521, %v3495
        %v3523 = vpop.permute.xlu0 %3522
        %v3525 = vmul.f32 %v3523, %v2138
        %v3526 = vmul.f32 %v3523, %v2142
        %v3527 = vmul.f32 %v3523, %v2146
        %3531 = vrot.lane.b32.xlu0 %v3525, 91
        %v3532 = vpop.permute.xlu0 %3531
        %3533 = vrot.lane.b32.xlu0 %v3526, 91
        %v3534 = vpop.permute.xlu0 %3533
        %3535 = vrot.lane.b32.xlu0 %v3527, 91
        %v3536 = vpop.permute.xlu0 %3535
        %v3537 = vsel %vm1671, %v3532, %v3534
        %v3538 = vsel %vm1671, %v3534, %v3536
        %v3542 = vadd.f32 %v3518, %v3537
        %v3543 = vadd.f32 %v3519, %v3538
        %v3544 = vadd.f32 %v3520, %v3536
        %3545 = vset.pattern.permute.xlu0 2
        %3546 = vperm.xlu0 %3545, %v3495
        %v3547 = vpop.permute.xlu0 %3546
        %v3549 = vmul.f32 %v3547, %v2166
        %v3550 = vmul.f32 %v3547, %v2170
        %v3551 = vmul.f32 %v3547, %v2174
        %3555 = vrot.lane.b32.xlu0 %v3549, 91
        %v3556 = vpop.permute.xlu0 %3555
        %3557 = vrot.lane.b32.xlu0 %v3550, 91
        %v3558 = vpop.permute.xlu0 %3557
        %3559 = vrot.lane.b32.xlu0 %v3551, 91
        %v3560 = vpop.permute.xlu0 %3559
        %v3561 = vsel %vm1671, %v3556, %v3558
        %v3562 = vsel %vm1671, %v3558, %v3560
        %v3566 = vadd.f32 %v3542, %v3561
        %v3567 = vadd.f32 %v3543, %v3562
        %v3568 = vadd.f32 %v3544, %v3560
        %3569 = vset.pattern.permute.xlu0 3
        %3570 = vperm.xlu0 %3569, %v3495
        %v3571 = vpop.permute.xlu0 %3570
        %v3573 = vmul.f32 %v3571, %v2194
        %v3574 = vmul.f32 %v3571, %v2198
        %v3575 = vmul.f32 %v3571, %v2202
        %3579 = vrot.lane.b32.xlu0 %v3573, 91
        %v3580 = vpop.permute.xlu0 %3579
        %3581 = vrot.lane.b32.xlu0 %v3574, 91
        %v3582 = vpop.permute.xlu0 %3581
        %3583 = vrot.lane.b32.xlu0 %v3575, 91
        %v3584 = vpop.permute.xlu0 %3583
        %v3585 = vsel %vm1671, %v3580, %v3582
        %v3586 = vsel %vm1671, %v3582, %v3584
        %v3590 = vadd.f32 %v3566, %v3585
        %v3591 = vadd.f32 %v3567, %v3586
        %v3592 = vadd.f32 %v3568, %v3584
        %3593 = vset.pattern.permute.xlu0 4
        %3594 = vperm.xlu0 %3593, %v3495
        %v3595 = vpop.permute.xlu0 %3594
        %v3597 = vmul.f32 %v3595, %v2222
        %v3598 = vmul.f32 %v3595, %v2226
        %v3599 = vmul.f32 %v3595, %v2230
        %3603 = vrot.lane.b32.xlu0 %v3597, 91
        %v3604 = vpop.permute.xlu0 %3603
        %3605 = vrot.lane.b32.xlu0 %v3598, 91
        %v3606 = vpop.permute.xlu0 %3605
        %3607 = vrot.lane.b32.xlu0 %v3599, 91
        %v3608 = vpop.permute.xlu0 %3607
        %v3609 = vsel %vm1671, %v3604, %v3606
        %v3610 = vsel %vm1671, %v3606, %v3608
        %v3614 = vadd.f32 %v3590, %v3609
        %v3615 = vadd.f32 %v3591, %v3610
        %v3616 = vadd.f32 %v3592, %v3608
        %3617 = vset.pattern.permute.xlu0 5
        %3618 = vperm.xlu0 %3617, %v3495
        %v3619 = vpop.permute.xlu0 %3618
        %v3621 = vmul.f32 %v3619, %v2250
        %v3622 = vmul.f32 %v3619, %v2254
        %v3623 = vmul.f32 %v3619, %v2258
        %3627 = vrot.lane.b32.xlu0 %v3621, 91
        %v3628 = vpop.permute.xlu0 %3627
        %3629 = vrot.lane.b32.xlu0 %v3622, 91
        %v3630 = vpop.permute.xlu0 %3629
        %3631 = vrot.lane.b32.xlu0 %v3623, 91
        %v3632 = vpop.permute.xlu0 %3631
        %v3633 = vsel %vm1671, %v3628, %v3630
        %v3634 = vsel %vm1671, %v3630, %v3632
        %v3638 = vadd.f32 %v3614, %v3633
        %v3639 = vadd.f32 %v3615, %v3634
        %v3640 = vadd.f32 %v3616, %v3632
        %3641 = vset.pattern.permute.xlu0 6
        %3642 = vperm.xlu0 %3641, %v3495
        %v3643 = vpop.permute.xlu0 %3642
        %v3645 = vmul.f32 %v3643, %v2278
        %v3646 = vmul.f32 %v3643, %v2282
        %v3647 = vmul.f32 %v3643, %v2286
        %3651 = vrot.lane.b32.xlu0 %v3645, 91
        %v3652 = vpop.permute.xlu0 %3651
        %3653 = vrot.lane.b32.xlu0 %v3646, 91
        %v3654 = vpop.permute.xlu0 %3653
        %3655 = vrot.lane.b32.xlu0 %v3647, 91
        %v3656 = vpop.permute.xlu0 %3655
        %v3657 = vsel %vm1671, %v3652, %v3654
        %v3658 = vsel %vm1671, %v3654, %v3656
        %v3662 = vadd.f32 %v3638, %v3657
        %v3663 = vadd.f32 %v3639, %v3658
        %v3664 = vadd.f32 %v3640, %v3656
        %3665 = vset.pattern.permute.xlu0 7
        %3666 = vperm.xlu0 %3665, %v3495
        %v3667 = vpop.permute.xlu0 %3666
        %v3669 = vmul.f32 %v3667, %v2306
        %v3670 = vmul.f32 %v3667, %v2310
        %v3671 = vmul.f32 %v3667, %v2314
        %3675 = vrot.lane.b32.xlu0 %v3669, 91
        %v3676 = vpop.permute.xlu0 %3675
        %3677 = vrot.lane.b32.xlu0 %v3670, 91
        %v3678 = vpop.permute.xlu0 %3677
        %3679 = vrot.lane.b32.xlu0 %v3671, 91
        %v3680 = vpop.permute.xlu0 %3679
        %v3681 = vsel %vm1671, %v3676, %v3678
        %v3682 = vsel %vm1671, %v3678, %v3680
        %v3686 = vadd.f32 %v3662, %v3681
        %v3687 = vadd.f32 %v3663, %v3682
        %v3688 = vadd.f32 %v3664, %v3680
        %s3689 = scalar_lea.vmem %s3, 32
        %v3690 = vld [vmem:[%s3689] sm:$0xf]
        %3692 = vset.pattern.permute.xlu0 0
        %3693 = vperm.xlu0 %3692, %v3690
        %v3694 = vpop.permute.xlu0 %3693
        %v3696 = vmul.f32 %v3694, %v2110
        %v3697 = vmul.f32 %v3694, %v2114
        %v3698 = vmul.f32 %v3694, %v2118
        %3702 = vrot.lane.b32.xlu0 %v3696, 90
        %v3703 = vpop.permute.xlu0 %3702
        %3704 = vrot.lane.b32.xlu0 %v3697, 90
        %v3705 = vpop.permute.xlu0 %3704
        %3706 = vrot.lane.b32.xlu0 %v3698, 90
        %v3707 = vpop.permute.xlu0 %3706
        %v3708 = vsel %vm1867, %v3703, %v3705
        %v3709 = vsel %vm1867, %v3705, %v3707
        %v3713 = vadd.f32 %v3686, %v3708
        %v3714 = vadd.f32 %v3687, %v3709
        %v3715 = vadd.f32 %v3688, %v3707
        %3716 = vset.pattern.permute.xlu0 1
        %3717 = vperm.xlu0 %3716, %v3690
        %v3718 = vpop.permute.xlu0 %3717
        %v3720 = vmul.f32 %v3718, %v2138
        %v3721 = vmul.f32 %v3718, %v2142
        %v3722 = vmul.f32 %v3718, %v2146
        %3726 = vrot.lane.b32.xlu0 %v3720, 90
        %v3727 = vpop.permute.xlu0 %3726
        %3728 = vrot.lane.b32.xlu0 %v3721, 90
        %v3729 = vpop.permute.xlu0 %3728
        %3730 = vrot.lane.b32.xlu0 %v3722, 90
        %v3731 = vpop.permute.xlu0 %3730
        %v3732 = vsel %vm1867, %v3727, %v3729
        %v3733 = vsel %vm1867, %v3729, %v3731
        %v3737 = vadd.f32 %v3713, %v3732
        %v3738 = vadd.f32 %v3714, %v3733
        %v3739 = vadd.f32 %v3715, %v3731
        %3740 = vset.pattern.permute.xlu0 2
        %3741 = vperm.xlu0 %3740, %v3690
        %v3742 = vpop.permute.xlu0 %3741
        %v3744 = vmul.f32 %v3742, %v2166
        %v3745 = vmul.f32 %v3742, %v2170
        %v3746 = vmul.f32 %v3742, %v2174
        %3750 = vrot.lane.b32.xlu0 %v3744, 90
        %v3751 = vpop.permute.xlu0 %3750
        %3752 = vrot.lane.b32.xlu0 %v3745, 90
        %v3753 = vpop.permute.xlu0 %3752
        %3754 = vrot.lane.b32.xlu0 %v3746, 90
        %v3755 = vpop.permute.xlu0 %3754
        %v3756 = vsel %vm1867, %v3751, %v3753
        %v3757 = vsel %vm1867, %v3753, %v3755
        %v3761 = vadd.f32 %v3737, %v3756
        %v3762 = vadd.f32 %v3738, %v3757
        %v3763 = vadd.f32 %v3739, %v3755
        %3764 = vset.pattern.permute.xlu0 3
        %3765 = vperm.xlu0 %3764, %v3690
        %v3766 = vpop.permute.xlu0 %3765
        %v3768 = vmul.f32 %v3766, %v2194
        %v3769 = vmul.f32 %v3766, %v2198
        %v3770 = vmul.f32 %v3766, %v2202
        %3774 = vrot.lane.b32.xlu0 %v3768, 90
        %v3775 = vpop.permute.xlu0 %3774
        %3776 = vrot.lane.b32.xlu0 %v3769, 90
        %v3777 = vpop.permute.xlu0 %3776
        %3778 = vrot.lane.b32.xlu0 %v3770, 90
        %v3779 = vpop.permute.xlu0 %3778
        %v3780 = vsel %vm1867, %v3775, %v3777
        %v3781 = vsel %vm1867, %v3777, %v3779
        %v3785 = vadd.f32 %v3761, %v3780
        %v3786 = vadd.f32 %v3762, %v3781
        %v3787 = vadd.f32 %v3763, %v3779
        %3788 = vset.pattern.permute.xlu0 4
        %3789 = vperm.xlu0 %3788, %v3690
        %v3790 = vpop.permute.xlu0 %3789
        %v3792 = vmul.f32 %v3790, %v2222
        %v3793 = vmul.f32 %v3790, %v2226
        %v3794 = vmul.f32 %v3790, %v2230
        %3798 = vrot.lane.b32.xlu0 %v3792, 90
        %v3799 = vpop.permute.xlu0 %3798
        %3800 = vrot.lane.b32.xlu0 %v3793, 90
        %v3801 = vpop.permute.xlu0 %3800
        %3802 = vrot.lane.b32.xlu0 %v3794, 90
        %v3803 = vpop.permute.xlu0 %3802
        %v3804 = vsel %vm1867, %v3799, %v3801
        %v3805 = vsel %vm1867, %v3801, %v3803
        %v3809 = vadd.f32 %v3785, %v3804
        %v3810 = vadd.f32 %v3786, %v3805
        %v3811 = vadd.f32 %v3787, %v3803
        %3812 = vset.pattern.permute.xlu0 5
        %3813 = vperm.xlu0 %3812, %v3690
        %v3814 = vpop.permute.xlu0 %3813
        %v3816 = vmul.f32 %v3814, %v2250
        %v3817 = vmul.f32 %v3814, %v2254
        %v3818 = vmul.f32 %v3814, %v2258
        %3822 = vrot.lane.b32.xlu0 %v3816, 90
        %v3823 = vpop.permute.xlu0 %3822
        %3824 = vrot.lane.b32.xlu0 %v3817, 90
        %v3825 = vpop.permute.xlu0 %3824
        %3826 = vrot.lane.b32.xlu0 %v3818, 90
        %v3827 = vpop.permute.xlu0 %3826
        %v3828 = vsel %vm1867, %v3823, %v3825
        %v3829 = vsel %vm1867, %v3825, %v3827
        %v3833 = vadd.f32 %v3809, %v3828
        %v3834 = vadd.f32 %v3810, %v3829
        %v3835 = vadd.f32 %v3811, %v3827
        %3836 = vset.pattern.permute.xlu0 6
        %3837 = vperm.xlu0 %3836, %v3690
        %v3838 = vpop.permute.xlu0 %3837
        %v3840 = vmul.f32 %v3838, %v2278
        %v3841 = vmul.f32 %v3838, %v2282
        %v3842 = vmul.f32 %v3838, %v2286
        %3846 = vrot.lane.b32.xlu0 %v3840, 90
        %v3847 = vpop.permute.xlu0 %3846
        %3848 = vrot.lane.b32.xlu0 %v3841, 90
        %v3849 = vpop.permute.xlu0 %3848
        %3850 = vrot.lane.b32.xlu0 %v3842, 90
        %v3851 = vpop.permute.xlu0 %3850
        %v3852 = vsel %vm1867, %v3847, %v3849
        %v3853 = vsel %vm1867, %v3849, %v3851
        %v3857 = vadd.f32 %v3833, %v3852
        %v3858 = vadd.f32 %v3834, %v3853
        %v3859 = vadd.f32 %v3835, %v3851
        %3860 = vset.pattern.permute.xlu0 7
        %3861 = vperm.xlu0 %3860, %v3690
        %v3862 = vpop.permute.xlu0 %3861
        %v3864 = vmul.f32 %v3862, %v2306
        %v3865 = vmul.f32 %v3862, %v2310
        %v3866 = vmul.f32 %v3862, %v2314
        %3870 = vrot.lane.b32.xlu0 %v3864, 90
        %v3871 = vpop.permute.xlu0 %3870
        %3872 = vrot.lane.b32.xlu0 %v3865, 90
        %v3873 = vpop.permute.xlu0 %3872
        %3874 = vrot.lane.b32.xlu0 %v3866, 90
        %v3875 = vpop.permute.xlu0 %3874
        %v3876 = vsel %vm1867, %v3871, %v3873
        %v3877 = vsel %vm1867, %v3873, %v3875
        %v3881 = vadd.f32 %v3857, %v3876
        %v3882 = vadd.f32 %v3858, %v3877
        %v3883 = vadd.f32 %v3859, %v3875
        %v3884 = vld [vmem:[%s4] sm:$0xf]
        %3886 = vset.pattern.permute.xlu0 0
        %3887 = vperm.xlu0 %3886, %v3884
        %v3888 = vpop.permute.xlu0 %3887
        %v3890 = vadd.f32 %v3881, %v3888
        %v3891 = vadd.f32 %v3882, %v3888
        %v3892 = vadd.f32 %v3883, %v3888
        %v3893 = vmul.f32 %v3890, %v2060
        %v3894 = vmul.f32 %v3891, %v2064
        %v3895 = vmul.f32 %v3892, %v2068
        %vm3896 = vcmask 1043456
        %v3897 = vsel %vm3896, %v3893, 0.0
        %v3898 = vsel %vm3896, %v3894, 0.0
        %v3899 = vadd.f32 %v3897, %v3898
        %vm3900 = vcmask 551936
        %v3901 = vsel %vm3900, %v3895, 0.0
        %v3902 = vadd.f32 %v3899, %v3901
        %3903 = vadd.xlane.f32.xlu0 %v3902
        %v3904 = vpop.xlane.xlu0 %3903
        %v3905 = vsel %vm3896, %v3904, 0.0
        %v3906 = vrot.slane %v3905, 4
        %v3907 = vadd.f32 %v3905, %v3906
        %v3908 = vrot.slane %v3907, 2
        %v3909 = vadd.f32 %v3907, %v3908
        %v3910 = vrot.slane %v3909, 1
        %v3911 = vadd.f32 %v3909, %v3910
        %v3912 = vrcp.pop 1024.0
        %v3913 = vmul.f32 %v3911, %v3912
        %v3914 = vsub.f32 %v3890, %v3913
        %v3915 = vsub.f32 %v3891, %v3913
        %v3916 = vsub.f32 %v3892, %v3913
        %v3917 = vmul.f32 %v3914, %v2060
        %v3918 = vmul.f32 %v3915, %v2064
        %v3919 = vmul.f32 %v3916, %v2068
        %v3920 = vmul.f32 %v3917, %v3917
        %v3921 = vmul.f32 %v3918, %v3918
        %v3922 = vmul.f32 %v3919, %v3919
        %v3923 = vsel %vm3896, %v3920, 0.0
        %v3924 = vsel %vm3896, %v3921, 0.0
        %v3925 = vadd.f32 %v3923, %v3924
        %v3926 = vsel %vm3900, %v3922, 0.0
        %v3927 = vadd.f32 %v3925, %v3926
        %3928 = vadd.xlane.f32.xlu0 %v3927
        %v3929 = vpop.xlane.xlu0 %3928
        %v3930 = vsel %vm3896, %v3929, 0.0
        %v3931 = vrot.slane %v3930, 4
        %v3932 = vadd.f32 %v3930, %v3931
        %v3933 = vrot.slane %v3932, 2
        %v3934 = vadd.f32 %v3932, %v3933
        %v3935 = vrot.slane %v3934, 1
        %v3936 = vadd.f32 %v3934, %v3935
        %v3937 = vmul.f32 %v3936, %v3912
        %v3938 = vadd.f32 %v3937, 1e-05
        %v3939 = vrsqrt.pop %v3938
        %v3940 = vmul.f32 %v3914, %v3939
        %v3941 = vmul.f32 %v3915, %v3939
        %v3942 = vmul.f32 %v3916, %v3939
        %v3943 = vmax.f32 %v3940, 0.0
        %v3944 = vmax.f32 %v3941, 0.0
        %v3945 = vmax.f32 %v3942, 0.0
        %v3948 = vcombine.low %v3943, %v3944
        %3950 = vst [vmem:[%s244] sm:$0xff] %v3948
        %3951 = vst.msk [vmem:[%s244 + $0x8] sm:$0xf] %vm3900, %v3945
        %s3952 = sand.u32 %s159, 1
        %s3953 = scalar_lea.sflag [#allocation4], %s3952
        %s3954 = sand.u32 %s159, 1
        %s3955 = smul.addr %s3954, 12
        %s3956 = scalar_lea.vmem [#allocation3], %s3955
        // Predicated region
        $region45: #{tpu_custom_call.1} parent=43 // pred_check
          %p3957 = pneg %p169
        $region46: #{tpu_custom_call.1} parent=43 // pred_check_branch
          %3959 = sbr.rel (%p3957) target = $region48
        $region47: #{tpu_custom_call.1} parent=43 // pred_region
          %s3961 = ssub.s32 192, 192
          %3962 = vsyncadd %s3953, %s3961
          %s3963 = smul.addr %s20, 3
          %s3964 = smul.addr %s3963, 64
          %s3965 = scalar_lea.hbm %s6, %s3964
          %s3967 = sshll.u32 %s3956, 4
          %s3968 = int_to_ptr.vmem [resolvable:$true] %s3967
          %3970 = dma.vmem_to_hbm [thread:$0]  %s3968, 192, %s3965, %s3953
        $region48: #{tpu_custom_call.1} parent=43 // pred_fallthru
          _
      $region44: #{tpu_custom_call.1} parent=5 // pred_fallthru
        _
      %p3971 = scmp.le.s32.totalorder 2, %s15
      // Predicated region
      $region49: #{tpu_custom_call.1} parent=5 // pred_check
        %p3972 = pneg %p3971
      $region50: #{tpu_custom_call.1} parent=5 // pred_check_branch
        %3974 = sbr.rel (%p3972) target = $region52
      $region51: #{tpu_custom_call.1} parent=5 // pred_region
        %s3975 = ssub.s32 %s15, 2
        // Predicated region
        $region53: #{tpu_custom_call.1} parent=51 // pred_check
          %p3976 = pneg %p175
        $region54: #{tpu_custom_call.1} parent=51 // pred_check_branch
          %3978 = sbr.rel (%p3976) target = $region56
        $region55: #{tpu_custom_call.1} parent=51 // pred_region
          %s3979 = sand.u32 %s160, 1
          %s3980 = scalar_lea.sflag [#allocation4], %s3979
          %s3981 = sand.u32 %s160, 1
          %s3982 = smul.addr %s3981, 12
          %s3983 = scalar_lea.vmem [#allocation3], %s3982
          %3984 = dma.done %s3980, 192
        $region56: #{tpu_custom_call.1} parent=51 // pred_fallthru
          _
      $region52: #{tpu_custom_call.1} parent=5 // pred_fallthru
        _
    $region6: #{tpu_custom_call.1} parent=1 // loop_footer
      %s19 = sadd.s32 1, %s15
    $region7: #{tpu_custom_call.1} parent=1 // loop_footer_branch
      %14 = sbr.rel target = $region3
    $region8: #{tpu_custom_call.1} parent=1 // loop_exit
      _
    %3985 = vsyncpa [#allocation4], 1
    %s3986 = scalar_lea.sflag [#allocation4], 1
    %3987 = vsyncpa %s3986, 1

</llo_original>
